<compile_context>
chip_gen: v7x
topology: tpu7x:2x2x1
jax: 0.10.0
libtpu: 0.0.40
codegen_flags: <defaults>
</compile_context>

<pallas_src>
import jax
import jax.numpy as jnp
from jax import lax
from jax.experimental import pallas as pl
from jax.experimental.pallas import tpu as pltpu

# ----------------------------- dimensions ----------------------------------
T_DIM = 2                      # t_dim
GRID_SIZE = 8                  # grid_size (original code uses 50)
Y_DIM = GRID_SIZE * GRID_SIZE  # y_dim (grid flattened)
R_DIM = 32                     # r_dim
Z_DIM = 16                     # z_dim
H_DIM = 32                     # h_dim


# =========================== fused Pallas kernel ============================
def np_conv_fused_kernel(
        # encoder inputs
        y_row_ref, x_chan_ref, bmask_ref, pool_ref, agg_ref, x_ctx_ref,
        conv1_w_ref, conv1_b_ref, conv2_w_ref, conv2_b_ref,
        fc1_wp_ref, fc1_wx_ref, fc1_b_ref, fc2_w_ref, fc2_b_ref,
        msh_w_ref, msh_b_ref, ehead_w_ref, ehead_b_ref,
        # decoder inputs
        eps_ref, x_tgt_ref, expand_ref,
        dec_w1x_ref, dec_w1z_ref, dec_b1_ref,
        dec_w2_ref, dec_b2_ref, dec_w3_ref, dec_b3_ref,
        dhead_w_ref, dhead_b_ref,
        # outputs
        enc_out_ref, dec_out_ref):
    """Whole forward (all batch elements) in one invocation, all activations
    resident in VMEM/registers.  Lane layout: (batch, point, row, col)."""
    g = GRID_SIZE
    L = y_row_ref.shape[1]                     # B * N_ctx * G * G lanes

    # -------------------- encoder: conv xy -> r ----------------------------
    y_row = y_row_ref[...]                     # (1, L)   conv input channel 0
    x_row = x_chan_ref[...]                    # (1, L)   conv input channel 1

    # conv1 (2 -> H, 3x3 "same"): build the (18, L) im2col patch IN REGISTERS
    # (masked lane rolls; the boundary masks come precomputed from the host)
    # and do a single K=18, N=L lane-dense MXU matmul.
    rows = []
    for kh in range(3):
        for kw in range(3):
            s = (kh - 1) * g + (kw - 1)
            tap = kh * 3 + kw
            m = bmask_ref[tap:tap + 1, :]                          # (1, L)
            y_sh = y_row if s == 0 else pltpu.roll(y_row, shift=(-s) % L, axis=1)
            rows.append(y_sh * m)
            # x channel is constant within each (batch, point) G*G block, so
            # an in-bounds tap needs no roll — only the boundary mask.
            rows.append(x_row * m)
    patch = jnp.concatenate(rows, axis=0)                          # (18, L)
    h1 = jnp.maximum(
        jnp.dot(conv1_w_ref[...], patch, preferred_element_type=jnp.float32)
        + conv1_b_ref[...], 0.0)                                   # (H, L)

    # conv2 (H -> H, 3x3 "same"): per-tap K-accumulation (no im2col scratch).
    acc = None
    for kh in range(3):
        for kw in range(3):
            s = (kh - 1) * g + (kw - 1)
            tap = kh * 3 + kw
            m = bmask_ref[tap:tap + 1, :]
            h_sh = h1 if s == 0 else pltpu.roll(h1, shift=(-s) % L, axis=1)
            t = jnp.dot(conv2_w_ref[tap], h_sh * m,
                        preferred_element_type=jnp.float32)        # (H, L)
            acc = t if acc is None else acc + t
    h2 = jnp.maximum(acc + conv2_b_ref[...], 0.0)                  # (H, L)

    # per-(batch, point) global average pool: contract the lane axis of both
    # operands with the host-precomputed pooling matrix -> (B*N, H).
    pooled = lax.dot_general(pool_ref[...], h2, (((1,), (1,)), ((), ())),
                             preferred_element_type=jnp.float32)   # (B*N, H)

    # Net MLP on concat([pooled, x]) realized as a split matmul.
    h = jnp.maximum(
        jnp.dot(pooled, fc1_wp_ref[...], preferred_element_type=jnp.float32)
        + jnp.dot(x_ctx_ref[...], fc1_wx_ref[...],
                  preferred_element_type=jnp.float32)
        + fc1_b_ref[...], 0.0)                                     # (B*N, H)
    r_i = jnp.dot(h, fc2_w_ref[...],
                  preferred_element_type=jnp.float32) + fc2_b_ref[...]   # (B*N, R)

    # aggregate: mean over points per batch element (tiny matmul, stays VMEM).
    r = jnp.dot(agg_ref[...], r_i, preferred_element_type=jnp.float32)   # (B, R)

    # MuSigmaEncoder; mu/sigma heads fused into a single matmul.
    hidden = jnp.maximum(
        jnp.dot(r, msh_w_ref[...], preferred_element_type=jnp.float32)
        + msh_b_ref[...], 0.0)
    eheads = jnp.dot(hidden, ehead_w_ref[...],
                     preferred_element_type=jnp.float32) + ehead_b_ref[...]  # (B, 2Z)
    mu = eheads[:, 0:Z_DIM]
    sigma = 0.1 + 0.9 / (1.0 + jnp.exp(-eheads[:, Z_DIM:2 * Z_DIM]))
    enc_out_ref[...] = jnp.concatenate([mu, sigma], axis=1)        # (B, 2Z)

    # -------------------- decoder: z = mu + sigma*eps -> y ------------------
    z = mu + sigma * eps_ref[...]                                   # (B, Z)
    # z's contribution to fc1, expanded to B*N_t rows via a 0/1 matmul (B
    # folded into the M dimension of every decoder matmul).
    z_rows = jnp.dot(expand_ref[...],
                     jnp.dot(z, dec_w1z_ref[...],
                             preferred_element_type=jnp.float32),
                     preferred_element_type=jnp.float32)            # (B*Nt, H)
    h = jnp.maximum(
        jnp.dot(x_tgt_ref[...], dec_w1x_ref[...],
                preferred_element_type=jnp.float32)
        + z_rows + dec_b1_ref[...], 0.0)                            # (B*Nt, H)
    h = jnp.maximum(
        jnp.dot(h, dec_w2_ref[...], preferred_element_type=jnp.float32)
        + dec_b2_ref[...], 0.0)
    h = jnp.maximum(
        jnp.dot(h, dec_w3_ref[...], preferred_element_type=jnp.float32)
        + dec_b3_ref[...], 0.0)
    dheads = jnp.dot(h, dhead_w_ref[...],
                     preferred_element_type=jnp.float32) + dhead_b_ref[...]  # (B*Nt, 2Y)

    # lane-dense fused output: raw mu in lanes [0, Y), shaped sigma in [Y, 2Y).
    lane = lax.broadcasted_iota(jnp.int32, dheads.shape, 1)
    softplus = jnp.maximum(dheads, 0.0) + jnp.log(1.0 + jnp.exp(-jnp.abs(dheads)))
    dec_out_ref[...] = jnp.where(lane < Y_DIM, dheads, 0.1 + 0.9 * softplus)


# ============================ kernel wrapper ================================
def neural_process_conv_forward(params, x_context, y_context, x_target, eps):
    """Eval-mode forward: decoder distribution params + q_context params."""
    B, Nc, _ = x_context.shape
    _, Nt, _ = x_target.shape
    g = GRID_SIZE
    gg = g * g
    Lc = B * Nc * gg

    # lane layout (batch, point, row, col)
    y_row = y_context.reshape(1, Lc)
    x_chan = jnp.broadcast_to(x_context[:, :, 0:1], (B, Nc, gg)).reshape(1, Lc)

    # ---- grid-invariant constants, precomputed on the host (constant-folded
    #      under jit; no per-step iota/compare/select chains in the kernel).
    lane = jnp.arange(Lc, dtype=jnp.int32)
    row = (lane % gg) // g
    col = lane % g
    masks = []
    for kh in range(3):
        for kw in range(3):
            di, dj = kh - 1, kw - 1
            masks.append((row + di >= 0) & (row + di < g) &
                         (col + dj >= 0) & (col + dj < g))
    bmask = jnp.stack(masks).astype(jnp.float32)                          # (9, Lc)
    pool = (jnp.arange(B * Nc, dtype=jnp.int32)[:, None] ==
            (lane // gg)[None, :]).astype(jnp.float32) / gg               # (B*Nc, Lc)
    agg = (jnp.arange(B, dtype=jnp.int32)[:, None] ==
           (jnp.arange(B * Nc, dtype=jnp.int32) // Nc)[None, :]
           ).astype(jnp.float32) / Nc                                     # (B, B*Nc)
    expand = ((jnp.arange(B * Nt, dtype=jnp.int32) // Nt)[:, None] ==
              jnp.arange(B, dtype=jnp.int32)[None, :]).astype(jnp.float32)  # (B*Nt, B)

    # ---- weight prep (im2col layouts, fused heads, pre-split fc1 weights).
    w1m = jnp.transpose(params["conv1_w"], (0, 2, 3, 1)).reshape(H_DIM, 9 * 2)
    b1c = params["conv1_b"].reshape(H_DIM, 1)
    w2t = jnp.transpose(params["conv2_w"], (2, 3, 0, 1)).reshape(9, H_DIM, H_DIM)
    b2c = params["conv2_b"].reshape(H_DIM, 1)
    fc1_wp = params["net_fc1_w"][:H_DIM]                   # (H, H) pooled part
    fc1_wx = params["net_fc1_w"][H_DIM:]                   # (T, H) x part
    ehead_w = jnp.concatenate([params["ms_mu_w"], params["ms_sigma_w"]], axis=1)
    ehead_b = jnp.concatenate([params["ms_mu_b"], params["ms_sigma_b"]])[None, :]
    dec_w1x = params["dec_fc1_w"][:T_DIM]                  # (T, H)
    dec_w1z = params["dec_fc1_w"][T_DIM:]                  # (Z, H)
    dhead_w = jnp.concatenate([params["dec_mu_w"], params["dec_sigma_w"]], axis=1)
    dhead_b = jnp.concatenate([params["dec_mu_b"], params["dec_sigma_b"]])[None, :]

    x_ctx_flat = x_context.reshape(B * Nc, T_DIM)
    x_tgt_flat = x_target.reshape(B * Nt, T_DIM)

    # Single fused launch, no grid: batch is folded onto the lane / row axes,
    # so the whole forward is one kernel invocation (everything fits VMEM at
    # this size).
    enc_out, dec_out = pl.pallas_call(
        np_conv_fused_kernel,
        out_shape=(jax.ShapeDtypeStruct((B, 2 * Z_DIM), jnp.float32),
                   jax.ShapeDtypeStruct((B * Nt, 2 * Y_DIM), jnp.float32)),
    )(y_row, x_chan, bmask, pool, agg, x_ctx_flat,
      w1m, b1c, w2t, b2c,
      fc1_wp, fc1_wx, params["net_fc1_b"].reshape(1, H_DIM),
      params["net_fc2_w"], params["net_fc2_b"].reshape(1, R_DIM),
      params["ms_hidden_w"], params["ms_hidden_b"].reshape(1, R_DIM),
      ehead_w, ehead_b,
      eps, x_tgt_flat, expand,
      dec_w1x, dec_w1z, params["dec_fc1_b"].reshape(1, H_DIM),
      params["dec_fc2_w"], params["dec_fc2_b"].reshape(1, H_DIM),
      params["dec_fc3_w"], params["dec_fc3_b"].reshape(1, H_DIM),
      dhead_w, dhead_b)

    mu_c = enc_out[:, :Z_DIM]
    sigma_c = enc_out[:, Z_DIM:]
    dec = dec_out.reshape(B, Nt, 2 * Y_DIM)
    y_mu = dec[:, :, :Y_DIM]
    y_sigma = dec[:, :, Y_DIM:]
    return y_mu, y_sigma, mu_c, sigma_c


# ============================ parameter init ================================
def _uniform(key, shape, fan_in):
    bound = 1.0 / float(fan_in) ** 0.5
    return jax.random.uniform(key, shape, jnp.float32, -bound, bound)


def init_params(key):
    ks = jax.random.split(key, 24)
    p = {}
    # Net (conv xy->r encoder)
    p["conv1_w"] = _uniform(ks[0], (H_DIM, 2, 3, 3), 2 * 9)
    p["conv1_b"] = _uniform(ks[1], (H_DIM,), 2 * 9)
    p["conv2_w"] = _uniform(ks[2], (H_DIM, H_DIM, 3, 3), H_DIM * 9)
    p["conv2_b"] = _uniform(ks[3], (H_DIM,), H_DIM * 9)
    p["net_fc1_w"] = _uniform(ks[4], (H_DIM + T_DIM, H_DIM), H_DIM + T_DIM)
    p["net_fc1_b"] = _uniform(ks[5], (H_DIM,), H_DIM + T_DIM)
    p["net_fc2_w"] = _uniform(ks[6], (H_DIM, R_DIM), H_DIM)
    p["net_fc2_b"] = _uniform(ks[7], (R_DIM,), H_DIM)
    # MuSigmaEncoder
    p["ms_hidden_w"] = _uniform(ks[8], (R_DIM, R_DIM), R_DIM)
    p["ms_hidden_b"] = _uniform(ks[9], (R_DIM,), R_DIM)
    p["ms_mu_w"] = _uniform(ks[10], (R_DIM, Z_DIM), R_DIM)
    p["ms_mu_b"] = _uniform(ks[11], (Z_DIM,), R_DIM)
    p["ms_sigma_w"] = _uniform(ks[12], (R_DIM, Z_DIM), R_DIM)
    p["ms_sigma_b"] = _uniform(ks[13], (Z_DIM,), R_DIM)
    # Decoder
    p["dec_fc1_w"] = _uniform(ks[14], (T_DIM + Z_DIM, H_DIM), T_DIM + Z_DIM)
    p["dec_fc1_b"] = _uniform(ks[15], (H_DIM,), T_DIM + Z_DIM)
    p["dec_fc2_w"] = _uniform(ks[16], (H_DIM, H_DIM), H_DIM)
    p["dec_fc2_b"] = _uniform(ks[17], (H_DIM,), H_DIM)
    p["dec_fc3_w"] = _uniform(ks[18], (H_DIM, H_DIM), H_DIM)
    p["dec_fc3_b"] = _uniform(ks[19], (H_DIM,), H_DIM)
    p["dec_mu_w"] = _uniform(ks[20], (H_DIM, Y_DIM), H_DIM)
    p["dec_mu_b"] = _uniform(ks[21], (Y_DIM,), H_DIM)
    p["dec_sigma_w"] = _uniform(ks[22], (H_DIM, Y_DIM), H_DIM)
    p["dec_sigma_b"] = _uniform(ks[23], (Y_DIM,), H_DIM)
    return p


# ================================ main ======================================
if __name__ == "__main__":
    key = jax.random.PRNGKey(0)
    k_param, k_xt, k_yc, k_eps = jax.random.split(key, 4)

    params = init_params(k_param)

    batch_size, num_context, num_target = 2, 4, 6
    x_target = jax.random.normal(k_xt, (batch_size, num_target, T_DIM),
                                 jnp.float32)
    x_context = x_target[:, :num_context, :]            # context ⊂ target
    y_context = jax.random.normal(k_yc, (batch_size, num_context, Y_DIM),
                                  jnp.float32)
    eps = jax.random.normal(k_eps, (batch_size, Z_DIM), jnp.float32)

    fwd = jax.jit(neural_process_conv_forward)
    y_mu, y_sigma, mu_c, sigma_c = fwd(params, x_context, y_context,
                                       x_target, eps)
    jax.block_until_ready((y_mu, y_sigma, mu_c, sigma_c))

    assert y_mu.shape == (batch_size, num_target, Y_DIM)
    assert y_sigma.shape == (batch_size, num_target, Y_DIM)
    assert mu_c.shape == (batch_size, Z_DIM)
    assert sigma_c.shape == (batch_size, Z_DIM)
    assert bool(jnp.all(y_sigma >= 0.1)) and bool(jnp.all(sigma_c >= 0.1))
    assert bool(jnp.all(jnp.isfinite(y_mu))) and bool(jnp.all(jnp.isfinite(mu_c)))

    print("KERNEL_OK")
</pallas_src>

<mosaic_0001>
module attributes {stable_mosaic.version = 11 : i64} {
  func.func @np_conv_fused_kernel(%arg0: memref<1x512xf32, #tpu.memory_space<vmem>>, %arg1: memref<1x512xf32, #tpu.memory_space<vmem>>, %arg2: memref<9x512xf32, #tpu.memory_space<vmem>>, %arg3: memref<8x512xf32, #tpu.memory_space<vmem>>, %arg4: memref<2x8xf32, #tpu.memory_space<vmem>>, %arg5: memref<8x2xf32, #tpu.memory_space<vmem>>, %arg6: memref<32x18xf32, #tpu.memory_space<vmem>>, %arg7: memref<32x1xf32, #tpu.memory_space<vmem>>, %arg8: memref<9x32x32xf32, #tpu.memory_space<vmem>>, %arg9: memref<32x1xf32, #tpu.memory_space<vmem>>, %arg10: memref<32x32xf32, #tpu.memory_space<vmem>>, %arg11: memref<2x32xf32, #tpu.memory_space<vmem>>, %arg12: memref<1x32xf32, #tpu.memory_space<vmem>>, %arg13: memref<32x32xf32, #tpu.memory_space<vmem>>, %arg14: memref<1x32xf32, #tpu.memory_space<vmem>>, %arg15: memref<32x32xf32, #tpu.memory_space<vmem>>, %arg16: memref<1x32xf32, #tpu.memory_space<vmem>>, %arg17: memref<32x32xf32, #tpu.memory_space<vmem>>, %arg18: memref<1x32xf32, #tpu.memory_space<vmem>>, %arg19: memref<2x16xf32, #tpu.memory_space<vmem>>, %arg20: memref<12x2xf32, #tpu.memory_space<vmem>>, %arg21: memref<12x2xf32, #tpu.memory_space<vmem>>, %arg22: memref<2x32xf32, #tpu.memory_space<vmem>>, %arg23: memref<16x32xf32, #tpu.memory_space<vmem>>, %arg24: memref<1x32xf32, #tpu.memory_space<vmem>>, %arg25: memref<32x32xf32, #tpu.memory_space<vmem>>, %arg26: memref<1x32xf32, #tpu.memory_space<vmem>>, %arg27: memref<32x32xf32, #tpu.memory_space<vmem>>, %arg28: memref<1x32xf32, #tpu.memory_space<vmem>>, %arg29: memref<32x128xf32, #tpu.memory_space<vmem>>, %arg30: memref<1x128xf32, #tpu.memory_space<vmem>>, %arg31: memref<2x32xf32, #tpu.memory_space<vmem>>, %arg32: memref<12x128xf32, #tpu.memory_space<vmem>>) attributes {dimension_semantics = [], scalar_prefetch = 0 : i64, scratch_operands = 0 : i64, tpu.core_type = #tpu.core_type<tc>} {
    %c0 = arith.constant 0 : index
    %c0_0 = arith.constant 0 : index
    %0 = vector.load %arg0[%c0, %c0_0] : memref<1x512xf32, #tpu.memory_space<vmem>>, vector<1x512xf32>
    %c0_1 = arith.constant 0 : index
    %c0_2 = arith.constant 0 : index
    %1 = vector.load %arg1[%c0_1, %c0_2] : memref<1x512xf32, #tpu.memory_space<vmem>>, vector<1x512xf32>
    %c0_3 = arith.constant 0 : index
    %c0_4 = arith.constant 0 : index
    %2 = vector.load %arg2[%c0_3, %c0_4] : memref<9x512xf32, #tpu.memory_space<vmem>>, vector<1x512xf32>
    %c9_i32 = arith.constant 9 : i32
    %3 = tpu.dynamic_rotate %0 by %c9_i32 dim 1 : vector<1x512xf32>, i32 -> vector<1x512xf32>
    %4 = arith.mulf %3, %2 : vector<1x512xf32>
    %5 = arith.mulf %1, %2 : vector<1x512xf32>
    %c1 = arith.constant 1 : index
    %c0_5 = arith.constant 0 : index
    %6 = vector.load %arg2[%c1, %c0_5] : memref<9x512xf32, #tpu.memory_space<vmem>>, vector<1x512xf32>
    %c8_i32 = arith.constant 8 : i32
    %7 = tpu.dynamic_rotate %0 by %c8_i32 dim 1 : vector<1x512xf32>, i32 -> vector<1x512xf32>
    %8 = arith.mulf %7, %6 : vector<1x512xf32>
    %9 = arith.mulf %1, %6 : vector<1x512xf32>
    %c2 = arith.constant 2 : index
    %c0_6 = arith.constant 0 : index
    %10 = vector.load %arg2[%c2, %c0_6] : memref<9x512xf32, #tpu.memory_space<vmem>>, vector<1x512xf32>
    %c7_i32 = arith.constant 7 : i32
    %11 = tpu.dynamic_rotate %0 by %c7_i32 dim 1 : vector<1x512xf32>, i32 -> vector<1x512xf32>
    %12 = arith.mulf %11, %10 : vector<1x512xf32>
    %13 = arith.mulf %1, %10 : vector<1x512xf32>
    %c3 = arith.constant 3 : index
    %c0_7 = arith.constant 0 : index
    %14 = vector.load %arg2[%c3, %c0_7] : memref<9x512xf32, #tpu.memory_space<vmem>>, vector<1x512xf32>
    %c1_i32 = arith.constant 1 : i32
    %15 = tpu.dynamic_rotate %0 by %c1_i32 dim 1 : vector<1x512xf32>, i32 -> vector<1x512xf32>
    %16 = arith.mulf %15, %14 : vector<1x512xf32>
    %17 = arith.mulf %1, %14 : vector<1x512xf32>
    %c4 = arith.constant 4 : index
    %c0_8 = arith.constant 0 : index
    %18 = vector.load %arg2[%c4, %c0_8] : memref<9x512xf32, #tpu.memory_space<vmem>>, vector<1x512xf32>
    %19 = arith.mulf %0, %18 : vector<1x512xf32>
    %20 = arith.mulf %1, %18 : vector<1x512xf32>
    %c5 = arith.constant 5 : index
    %c0_9 = arith.constant 0 : index
    %21 = vector.load %arg2[%c5, %c0_9] : memref<9x512xf32, #tpu.memory_space<vmem>>, vector<1x512xf32>
    %c511_i32 = arith.constant 511 : i32
    %22 = tpu.dynamic_rotate %0 by %c511_i32 dim 1 : vector<1x512xf32>, i32 -> vector<1x512xf32>
    %23 = arith.mulf %22, %21 : vector<1x512xf32>
    %24 = arith.mulf %1, %21 : vector<1x512xf32>
    %c6 = arith.constant 6 : index
    %c0_10 = arith.constant 0 : index
    %25 = vector.load %arg2[%c6, %c0_10] : memref<9x512xf32, #tpu.memory_space<vmem>>, vector<1x512xf32>
    %c505_i32 = arith.constant 505 : i32
    %26 = tpu.dynamic_rotate %0 by %c505_i32 dim 1 : vector<1x512xf32>, i32 -> vector<1x512xf32>
    %27 = arith.mulf %26, %25 : vector<1x512xf32>
    %28 = arith.mulf %1, %25 : vector<1x512xf32>
    %c7 = arith.constant 7 : index
    %c0_11 = arith.constant 0 : index
    %29 = vector.load %arg2[%c7, %c0_11] : memref<9x512xf32, #tpu.memory_space<vmem>>, vector<1x512xf32>
    %c504_i32 = arith.constant 504 : i32
    %30 = tpu.dynamic_rotate %0 by %c504_i32 dim 1 : vector<1x512xf32>, i32 -> vector<1x512xf32>
    %31 = arith.mulf %30, %29 : vector<1x512xf32>
    %32 = arith.mulf %1, %29 : vector<1x512xf32>
    %c8 = arith.constant 8 : index
    %c0_12 = arith.constant 0 : index
    %33 = vector.load %arg2[%c8, %c0_12] : memref<9x512xf32, #tpu.memory_space<vmem>>, vector<1x512xf32>
    %c503_i32 = arith.constant 503 : i32
    %34 = tpu.dynamic_rotate %0 by %c503_i32 dim 1 : vector<1x512xf32>, i32 -> vector<1x512xf32>
    %35 = arith.mulf %34, %33 : vector<1x512xf32>
    %36 = arith.mulf %1, %33 : vector<1x512xf32>
    %37 = tpu.concatenate %4, %5, %8, %9, %12, %13, %16, %17, %19, %20, %23, %24, %27, %28, %31, %32 in 0 : vector<1x512xf32>, vector<1x512xf32>, vector<1x512xf32>, vector<1x512xf32>, vector<1x512xf32>, vector<1x512xf32>, vector<1x512xf32>, vector<1x512xf32>, vector<1x512xf32>, vector<1x512xf32>, vector<1x512xf32>, vector<1x512xf32>, vector<1x512xf32>, vector<1x512xf32>, vector<1x512xf32>, vector<1x512xf32> -> vector<16x512xf32>
    %38 = tpu.concatenate %35, %36 in 0 : vector<1x512xf32>, vector<1x512xf32> -> vector<2x512xf32>
    %39 = tpu.concatenate %37, %38 in 0 : vector<16x512xf32>, vector<2x512xf32> -> vector<18x512xf32>
    %c0_13 = arith.constant 0 : index
    %c0_14 = arith.constant 0 : index
    %40 = vector.load %arg6[%c0_13, %c0_14] : memref<32x18xf32, #tpu.memory_space<vmem>>, vector<32x18xf32>
    %cst = arith.constant dense<0.000000e+00> : vector<32x512xf32>
    %41 = tpu.matmul %40, %39, %cst {dimension_numbers = #tpu.dot_dimension_numbers<[1], [0], [0], [1], [0, 0, 1, 1], [], []>} : vector<32x18xf32>, vector<18x512xf32>, vector<32x512xf32> -> vector<32x512xf32>
    %c0_15 = arith.constant 0 : index
    %c0_16 = arith.constant 0 : index
    %42 = vector.load %arg7[%c0_15, %c0_16] : memref<32x1xf32, #tpu.memory_space<vmem>>, vector<32x1xf32>
    %43 = vector.broadcast %42 : vector<32x1xf32> to vector<32x512xf32>
    %44 = arith.addf %41, %43 : vector<32x512xf32>
    %cst_17 = arith.constant 0.000000e+00 : f32
    %45 = vector.broadcast %cst_17 : f32 to vector<32x512xf32>
    %46 = arith.maximumf %44, %45 : vector<32x512xf32>
    %c0_18 = arith.constant 0 : index
    %c0_19 = arith.constant 0 : index
    %47 = vector.load %arg2[%c0_18, %c0_19] : memref<9x512xf32, #tpu.memory_space<vmem>>, vector<1x512xf32>
    %c9_i32_20 = arith.constant 9 : i32
    %48 = tpu.dynamic_rotate %46 by %c9_i32_20 dim 1 : vector<32x512xf32>, i32 -> vector<32x512xf32>
    %c0_21 = arith.constant 0 : index
    %c0_22 = arith.constant 0 : index
    %c0_23 = arith.constant 0 : index
    %49 = vector.load %arg8[%c0_21, %c0_22, %c0_23] : memref<9x32x32xf32, #tpu.memory_space<vmem>>, vector<1x32x32xf32>
    %50 = vector.shape_cast %49 : vector<1x32x32xf32> to vector<32x32xf32>
    %51 = vector.broadcast %47 : vector<1x512xf32> to vector<32x512xf32>
    %52 = arith.mulf %48, %51 : vector<32x512xf32>
    %cst_24 = arith.constant dense<0.000000e+00> : vector<32x512xf32>
    %53 = tpu.matmul %50, %52, %cst_24 {dimension_numbers = #tpu.dot_dimension_numbers<[1], [0], [0], [1], [0, 0, 1, 1], [], []>} : vector<32x32xf32>, vector<32x512xf32>, vector<32x512xf32> -> vector<32x512xf32>
    %c1_25 = arith.constant 1 : index
    %c0_26 = arith.constant 0 : index
    %54 = vector.load %arg2[%c1_25, %c0_26] : memref<9x512xf32, #tpu.memory_space<vmem>>, vector<1x512xf32>
    %c8_i32_27 = arith.constant 8 : i32
    %55 = tpu.dynamic_rotate %46 by %c8_i32_27 dim 1 : vector<32x512xf32>, i32 -> vector<32x512xf32>
    %c1_28 = arith.constant 1 : index
    %c0_29 = arith.constant 0 : index
    %c0_30 = arith.constant 0 : index
    %56 = vector.load %arg8[%c1_28, %c0_29, %c0_30] : memref<9x32x32xf32, #tpu.memory_space<vmem>>, vector<1x32x32xf32>
    %57 = vector.shape_cast %56 : vector<1x32x32xf32> to vector<32x32xf32>
    %58 = vector.broadcast %54 : vector<1x512xf32> to vector<32x512xf32>
    %59 = arith.mulf %55, %58 : vector<32x512xf32>
    %cst_31 = arith.constant dense<0.000000e+00> : vector<32x512xf32>
    %60 = tpu.matmul %57, %59, %cst_31 {dimension_numbers = #tpu.dot_dimension_numbers<[1], [0], [0], [1], [0, 0, 1, 1], [], []>} : vector<32x32xf32>, vector<32x512xf32>, vector<32x512xf32> -> vector<32x512xf32>
    %61 = arith.addf %53, %60 : vector<32x512xf32>
    %c2_32 = arith.constant 2 : index
    %c0_33 = arith.constant 0 : index
    %62 = vector.load %arg2[%c2_32, %c0_33] : memref<9x512xf32, #tpu.memory_space<vmem>>, vector<1x512xf32>
    %c7_i32_34 = arith.constant 7 : i32
    %63 = tpu.dynamic_rotate %46 by %c7_i32_34 dim 1 : vector<32x512xf32>, i32 -> vector<32x512xf32>
    %c2_35 = arith.constant 2 : index
    %c0_36 = arith.constant 0 : index
    %c0_37 = arith.constant 0 : index
    %64 = vector.load %arg8[%c2_35, %c0_36, %c0_37] : memref<9x32x32xf32, #tpu.memory_space<vmem>>, vector<1x32x32xf32>
    %65 = vector.shape_cast %64 : vector<1x32x32xf32> to vector<32x32xf32>
    %66 = vector.broadcast %62 : vector<1x512xf32> to vector<32x512xf32>
    %67 = arith.mulf %63, %66 : vector<32x512xf32>
    %cst_38 = arith.constant dense<0.000000e+00> : vector<32x512xf32>
    %68 = tpu.matmul %65, %67, %cst_38 {dimension_numbers = #tpu.dot_dimension_numbers<[1], [0], [0], [1], [0, 0, 1, 1], [], []>} : vector<32x32xf32>, vector<32x512xf32>, vector<32x512xf32> -> vector<32x512xf32>
    %69 = arith.addf %61, %68 : vector<32x512xf32>
    %c3_39 = arith.constant 3 : index
    %c0_40 = arith.constant 0 : index
    %70 = vector.load %arg2[%c3_39, %c0_40] : memref<9x512xf32, #tpu.memory_space<vmem>>, vector<1x512xf32>
    %c1_i32_41 = arith.constant 1 : i32
    %71 = tpu.dynamic_rotate %46 by %c1_i32_41 dim 1 : vector<32x512xf32>, i32 -> vector<32x512xf32>
    %c3_42 = arith.constant 3 : index
    %c0_43 = arith.constant 0 : index
    %c0_44 = arith.constant 0 : index
    %72 = vector.load %arg8[%c3_42, %c0_43, %c0_44] : memref<9x32x32xf32, #tpu.memory_space<vmem>>, vector<1x32x32xf32>
    %73 = vector.shape_cast %72 : vector<1x32x32xf32> to vector<32x32xf32>
    %74 = vector.broadcast %70 : vector<1x512xf32> to vector<32x512xf32>
    %75 = arith.mulf %71, %74 : vector<32x512xf32>
    %cst_45 = arith.constant dense<0.000000e+00> : vector<32x512xf32>
    %76 = tpu.matmul %73, %75, %cst_45 {dimension_numbers = #tpu.dot_dimension_numbers<[1], [0], [0], [1], [0, 0, 1, 1], [], []>} : vector<32x32xf32>, vector<32x512xf32>, vector<32x512xf32> -> vector<32x512xf32>
    %77 = arith.addf %69, %76 : vector<32x512xf32>
    %c4_46 = arith.constant 4 : index
    %c0_47 = arith.constant 0 : index
    %78 = vector.load %arg2[%c4_46, %c0_47] : memref<9x512xf32, #tpu.memory_space<vmem>>, vector<1x512xf32>
    %c4_48 = arith.constant 4 : index
    %c0_49 = arith.constant 0 : index
    %c0_50 = arith.constant 0 : index
    %79 = vector.load %arg8[%c4_48, %c0_49, %c0_50] : memref<9x32x32xf32, #tpu.memory_space<vmem>>, vector<1x32x32xf32>
    %80 = vector.shape_cast %79 : vector<1x32x32xf32> to vector<32x32xf32>
    %81 = vector.broadcast %78 : vector<1x512xf32> to vector<32x512xf32>
    %82 = arith.mulf %46, %81 : vector<32x512xf32>
    %cst_51 = arith.constant dense<0.000000e+00> : vector<32x512xf32>
    %83 = tpu.matmul %80, %82, %cst_51 {dimension_numbers = #tpu.dot_dimension_numbers<[1], [0], [0], [1], [0, 0, 1, 1], [], []>} : vector<32x32xf32>, vector<32x512xf32>, vector<32x512xf32> -> vector<32x512xf32>
    %84 = arith.addf %77, %83 : vector<32x512xf32>
    %c5_52 = arith.constant 5 : index
    %c0_53 = arith.constant 0 : index
    %85 = vector.load %arg2[%c5_52, %c0_53] : memref<9x512xf32, #tpu.memory_space<vmem>>, vector<1x512xf32>
    %c511_i32_54 = arith.constant 511 : i32
    %86 = tpu.dynamic_rotate %46 by %c511_i32_54 dim 1 : vector<32x512xf32>, i32 -> vector<32x512xf32>
    %c5_55 = arith.constant 5 : index
    %c0_56 = arith.constant 0 : index
    %c0_57 = arith.constant 0 : index
    %87 = vector.load %arg8[%c5_55, %c0_56, %c0_57] : memref<9x32x32xf32, #tpu.memory_space<vmem>>, vector<1x32x32xf32>
    %88 = vector.shape_cast %87 : vector<1x32x32xf32> to vector<32x32xf32>
    %89 = vector.broadcast %85 : vector<1x512xf32> to vector<32x512xf32>
    %90 = arith.mulf %86, %89 : vector<32x512xf32>
    %cst_58 = arith.constant dense<0.000000e+00> : vector<32x512xf32>
    %91 = tpu.matmul %88, %90, %cst_58 {dimension_numbers = #tpu.dot_dimension_numbers<[1], [0], [0], [1], [0, 0, 1, 1], [], []>} : vector<32x32xf32>, vector<32x512xf32>, vector<32x512xf32> -> vector<32x512xf32>
    %92 = arith.addf %84, %91 : vector<32x512xf32>
    %c6_59 = arith.constant 6 : index
    %c0_60 = arith.constant 0 : index
    %93 = vector.load %arg2[%c6_59, %c0_60] : memref<9x512xf32, #tpu.memory_space<vmem>>, vector<1x512xf32>
    %c505_i32_61 = arith.constant 505 : i32
    %94 = tpu.dynamic_rotate %46 by %c505_i32_61 dim 1 : vector<32x512xf32>, i32 -> vector<32x512xf32>
    %c6_62 = arith.constant 6 : index
    %c0_63 = arith.constant 0 : index
    %c0_64 = arith.constant 0 : index
    %95 = vector.load %arg8[%c6_62, %c0_63, %c0_64] : memref<9x32x32xf32, #tpu.memory_space<vmem>>, vector<1x32x32xf32>
    %96 = vector.shape_cast %95 : vector<1x32x32xf32> to vector<32x32xf32>
    %97 = vector.broadcast %93 : vector<1x512xf32> to vector<32x512xf32>
    %98 = arith.mulf %94, %97 : vector<32x512xf32>
    %cst_65 = arith.constant dense<0.000000e+00> : vector<32x512xf32>
    %99 = tpu.matmul %96, %98, %cst_65 {dimension_numbers = #tpu.dot_dimension_numbers<[1], [0], [0], [1], [0, 0, 1, 1], [], []>} : vector<32x32xf32>, vector<32x512xf32>, vector<32x512xf32> -> vector<32x512xf32>
    %100 = arith.addf %92, %99 : vector<32x512xf32>
    %c7_66 = arith.constant 7 : index
    %c0_67 = arith.constant 0 : index
    %101 = vector.load %arg2[%c7_66, %c0_67] : memref<9x512xf32, #tpu.memory_space<vmem>>, vector<1x512xf32>
    %c504_i32_68 = arith.constant 504 : i32
    %102 = tpu.dynamic_rotate %46 by %c504_i32_68 dim 1 : vector<32x512xf32>, i32 -> vector<32x512xf32>
    %c7_69 = arith.constant 7 : index
    %c0_70 = arith.constant 0 : index
    %c0_71 = arith.constant 0 : index
    %103 = vector.load %arg8[%c7_69, %c0_70, %c0_71] : memref<9x32x32xf32, #tpu.memory_space<vmem>>, vector<1x32x32xf32>
    %104 = vector.shape_cast %103 : vector<1x32x32xf32> to vector<32x32xf32>
    %105 = vector.broadcast %101 : vector<1x512xf32> to vector<32x512xf32>
    %106 = arith.mulf %102, %105 : vector<32x512xf32>
    %cst_72 = arith.constant dense<0.000000e+00> : vector<32x512xf32>
    %107 = tpu.matmul %104, %106, %cst_72 {dimension_numbers = #tpu.dot_dimension_numbers<[1], [0], [0], [1], [0, 0, 1, 1], [], []>} : vector<32x32xf32>, vector<32x512xf32>, vector<32x512xf32> -> vector<32x512xf32>
    %108 = arith.addf %100, %107 : vector<32x512xf32>
    %c8_73 = arith.constant 8 : index
    %c0_74 = arith.constant 0 : index
    %109 = vector.load %arg2[%c8_73, %c0_74] : memref<9x512xf32, #tpu.memory_space<vmem>>, vector<1x512xf32>
    %c503_i32_75 = arith.constant 503 : i32
    %110 = tpu.dynamic_rotate %46 by %c503_i32_75 dim 1 : vector<32x512xf32>, i32 -> vector<32x512xf32>
    %c8_76 = arith.constant 8 : index
    %c0_77 = arith.constant 0 : index
    %c0_78 = arith.constant 0 : index
    %111 = vector.load %arg8[%c8_76, %c0_77, %c0_78] : memref<9x32x32xf32, #tpu.memory_space<vmem>>, vector<1x32x32xf32>
    %112 = vector.shape_cast %111 : vector<1x32x32xf32> to vector<32x32xf32>
    %113 = vector.broadcast %109 : vector<1x512xf32> to vector<32x512xf32>
    %114 = arith.mulf %110, %113 : vector<32x512xf32>
    %cst_79 = arith.constant dense<0.000000e+00> : vector<32x512xf32>
    %115 = tpu.matmul %112, %114, %cst_79 {dimension_numbers = #tpu.dot_dimension_numbers<[1], [0], [0], [1], [0, 0, 1, 1], [], []>} : vector<32x32xf32>, vector<32x512xf32>, vector<32x512xf32> -> vector<32x512xf32>
    %116 = arith.addf %108, %115 : vector<32x512xf32>
    %c0_80 = arith.constant 0 : index
    %c0_81 = arith.constant 0 : index
    %117 = vector.load %arg9[%c0_80, %c0_81] : memref<32x1xf32, #tpu.memory_space<vmem>>, vector<32x1xf32>
    %118 = vector.broadcast %117 : vector<32x1xf32> to vector<32x512xf32>
    %119 = arith.addf %116, %118 : vector<32x512xf32>
    %cst_82 = arith.constant 0.000000e+00 : f32
    %120 = vector.broadcast %cst_82 : f32 to vector<32x512xf32>
    %121 = arith.maximumf %119, %120 : vector<32x512xf32>
    %c0_83 = arith.constant 0 : index
    %c0_84 = arith.constant 0 : index
    %122 = vector.load %arg3[%c0_83, %c0_84] : memref<8x512xf32, #tpu.memory_space<vmem>>, vector<8x512xf32>
    %cst_85 = arith.constant dense<0.000000e+00> : vector<8x32xf32>
    %123 = tpu.matmul %122, %121, %cst_85 {dimension_numbers = #tpu.dot_dimension_numbers<[1], [1], [0], [0], [0, 0, 1, 0], [], []>} : vector<8x512xf32>, vector<32x512xf32>, vector<8x32xf32> -> vector<8x32xf32>
    %c0_86 = arith.constant 0 : index
    %c0_87 = arith.constant 0 : index
    %124 = vector.load %arg10[%c0_86, %c0_87] : memref<32x32xf32, #tpu.memory_space<vmem>>, vector<32x32xf32>
    %cst_88 = arith.constant dense<0.000000e+00> : vector<8x32xf32>
    %125 = tpu.matmul %123, %124, %cst_88 {dimension_numbers = #tpu.dot_dimension_numbers<[1], [0], [0], [1], [0, 0, 1, 1], [], []>} : vector<8x32xf32>, vector<32x32xf32>, vector<8x32xf32> -> vector<8x32xf32>
    %c0_89 = arith.constant 0 : index
    %c0_90 = arith.constant 0 : index
    %126 = vector.load %arg5[%c0_89, %c0_90] : memref<8x2xf32, #tpu.memory_space<vmem>>, vector<8x2xf32>
    %c0_91 = arith.constant 0 : index
    %c0_92 = arith.constant 0 : index
    %127 = vector.load %arg11[%c0_91, %c0_92] : memref<2x32xf32, #tpu.memory_space<vmem>>, vector<2x32xf32>
    %cst_93 = arith.constant dense<0.000000e+00> : vector<8x32xf32>
    %128 = tpu.matmul %126, %127, %cst_93 {dimension_numbers = #tpu.dot_dimension_numbers<[1], [0], [0], [1], [0, 0, 1, 1], [], []>} : vector<8x2xf32>, vector<2x32xf32>, vector<8x32xf32> -> vector<8x32xf32>
    %129 = arith.addf %125, %128 : vector<8x32xf32>
    %c0_94 = arith.constant 0 : index
    %c0_95 = arith.constant 0 : index
    %130 = vector.load %arg12[%c0_94, %c0_95] : memref<1x32xf32, #tpu.memory_space<vmem>>, vector<1x32xf32>
    %131 = vector.broadcast %130 : vector<1x32xf32> to vector<8x32xf32>
    %132 = arith.addf %129, %131 : vector<8x32xf32>
    %cst_96 = arith.constant 0.000000e+00 : f32
    %133 = vector.broadcast %cst_96 : f32 to vector<8x32xf32>
    %134 = arith.maximumf %132, %133 : vector<8x32xf32>
    %c0_97 = arith.constant 0 : index
    %c0_98 = arith.constant 0 : index
    %135 = vector.load %arg13[%c0_97, %c0_98] : memref<32x32xf32, #tpu.memory_space<vmem>>, vector<32x32xf32>
    %cst_99 = arith.constant dense<0.000000e+00> : vector<8x32xf32>
    %136 = tpu.matmul %134, %135, %cst_99 {dimension_numbers = #tpu.dot_dimension_numbers<[1], [0], [0], [1], [0, 0, 1, 1], [], []>} : vector<8x32xf32>, vector<32x32xf32>, vector<8x32xf32> -> vector<8x32xf32>
    %c0_100 = arith.constant 0 : index
    %c0_101 = arith.constant 0 : index
    %137 = vector.load %arg14[%c0_100, %c0_101] : memref<1x32xf32, #tpu.memory_space<vmem>>, vector<1x32xf32>
    %138 = vector.broadcast %137 : vector<1x32xf32> to vector<8x32xf32>
    %139 = arith.addf %136, %138 : vector<8x32xf32>
    %c0_102 = arith.constant 0 : index
    %c0_103 = arith.constant 0 : index
    %140 = vector.load %arg4[%c0_102, %c0_103] : memref<2x8xf32, #tpu.memory_space<vmem>>, vector<2x8xf32>
    %cst_104 = arith.constant dense<0.000000e+00> : vector<2x32xf32>
    %141 = tpu.matmul %140, %139, %cst_104 {dimension_numbers = #tpu.dot_dimension_numbers<[1], [0], [0], [1], [0, 0, 1, 1], [], []>} : vector<2x8xf32>, vector<8x32xf32>, vector<2x32xf32> -> vector<2x32xf32>
    %c0_105 = arith.constant 0 : index
    %c0_106 = arith.constant 0 : index
    %142 = vector.load %arg15[%c0_105, %c0_106] : memref<32x32xf32, #tpu.memory_space<vmem>>, vector<32x32xf32>
    %cst_107 = arith.constant dense<0.000000e+00> : vector<2x32xf32>
    %143 = tpu.matmul %141, %142, %cst_107 {dimension_numbers = #tpu.dot_dimension_numbers<[1], [0], [0], [1], [0, 0, 1, 1], [], []>} : vector<2x32xf32>, vector<32x32xf32>, vector<2x32xf32> -> vector<2x32xf32>
    %c0_108 = arith.constant 0 : index
    %c0_109 = arith.constant 0 : index
    %144 = vector.load %arg16[%c0_108, %c0_109] : memref<1x32xf32, #tpu.memory_space<vmem>>, vector<1x32xf32>
    %145 = vector.broadcast %144 : vector<1x32xf32> to vector<2x32xf32>
    %146 = arith.addf %143, %145 : vector<2x32xf32>
    %cst_110 = arith.constant 0.000000e+00 : f32
    %147 = vector.broadcast %cst_110 : f32 to vector<2x32xf32>
    %148 = arith.maximumf %146, %147 : vector<2x32xf32>
    %c0_111 = arith.constant 0 : index
    %c0_112 = arith.constant 0 : index
    %149 = vector.load %arg17[%c0_111, %c0_112] : memref<32x32xf32, #tpu.memory_space<vmem>>, vector<32x32xf32>
    %cst_113 = arith.constant dense<0.000000e+00> : vector<2x32xf32>
    %150 = tpu.matmul %148, %149, %cst_113 {dimension_numbers = #tpu.dot_dimension_numbers<[1], [0], [0], [1], [0, 0, 1, 1], [], []>} : vector<2x32xf32>, vector<32x32xf32>, vector<2x32xf32> -> vector<2x32xf32>
    %c0_114 = arith.constant 0 : index
    %c0_115 = arith.constant 0 : index
    %151 = vector.load %arg18[%c0_114, %c0_115] : memref<1x32xf32, #tpu.memory_space<vmem>>, vector<1x32xf32>
    %152 = vector.broadcast %151 : vector<1x32xf32> to vector<2x32xf32>
    %153 = arith.addf %150, %152 : vector<2x32xf32>
    %154 = vector.extract_strided_slice %153 {offsets = [0, 0], sizes = [2, 16], strides = [1, 1]} : vector<2x32xf32> to vector<2x16xf32>
    %155 = vector.extract_strided_slice %153 {offsets = [0, 16], sizes = [2, 16], strides = [1, 1]} : vector<2x32xf32> to vector<2x16xf32>
    %cst_116 = arith.constant 0.000000e+00 : f32
    %156 = vector.broadcast %cst_116 : f32 to vector<2x16xf32>
    %157 = arith.subf %156, %155 : vector<2x16xf32>
    %158 = math.exp %157 : vector<2x16xf32>
    %cst_117 = arith.constant 1.000000e+00 : f32
    %159 = vector.broadcast %cst_117 : f32 to vector<2x16xf32>
    %160 = arith.addf %159, %158 : vector<2x16xf32>
    %cst_118 = arith.constant 0.899999976 : f32
    %161 = vector.broadcast %cst_118 : f32 to vector<2x16xf32>
    %162 = arith.divf %161, %160 : vector<2x16xf32>
    %cst_119 = arith.constant 1.000000e-01 : f32
    %163 = vector.broadcast %cst_119 : f32 to vector<2x16xf32>
    %164 = arith.addf %163, %162 : vector<2x16xf32>
    %165 = tpu.concatenate %154, %164 in 1 : vector<2x16xf32>, vector<2x16xf32> -> vector<2x32xf32>
    %c0_120 = arith.constant 0 : index
    %c0_121 = arith.constant 0 : index
    %166 = vector.load %arg31[%c0_120, %c0_121] : memref<2x32xf32, #tpu.memory_space<vmem>>, vector<2x32xf32>
    tpu.vector_store %arg31[%c0_120, %c0_121], %165 {strides = array<i32>} : memref<2x32xf32, #tpu.memory_space<vmem>>, vector<2x32xf32>,
    %c0_122 = arith.constant 0 : index
    %c0_123 = arith.constant 0 : index
    %167 = vector.load %arg19[%c0_122, %c0_123] : memref<2x16xf32, #tpu.memory_space<vmem>>, vector<2x16xf32>
    %168 = arith.mulf %164, %167 : vector<2x16xf32>
    %169 = arith.addf %154, %168 : vector<2x16xf32>
    %c0_124 = arith.constant 0 : index
    %c0_125 = arith.constant 0 : index
    %170 = vector.load %arg21[%c0_124, %c0_125] : memref<12x2xf32, #tpu.memory_space<vmem>>, vector<12x2xf32>
    %c0_126 = arith.constant 0 : index
    %c0_127 = arith.constant 0 : index
    %171 = vector.load %arg23[%c0_126, %c0_127] : memref<16x32xf32, #tpu.memory_space<vmem>>, vector<16x32xf32>
    %cst_128 = arith.constant dense<0.000000e+00> : vector<2x32xf32>
    %172 = tpu.matmul %169, %171, %cst_128 {dimension_numbers = #tpu.dot_dimension_numbers<[1], [0], [0], [1], [0, 0, 1, 1], [], []>} : vector<2x16xf32>, vector<16x32xf32>, vector<2x32xf32> -> vector<2x32xf32>
    %cst_129 = arith.constant dense<0.000000e+00> : vector<12x32xf32>
    %173 = tpu.matmul %170, %172, %cst_129 {dimension_numbers = #tpu.dot_dimension_numbers<[1], [0], [0], [1], [0, 0, 1, 1], [], []>} : vector<12x2xf32>, vector<2x32xf32>, vector<12x32xf32> -> vector<12x32xf32>
    %c0_130 = arith.constant 0 : index
    %c0_131 = arith.constant 0 : index
    %174 = vector.load %arg20[%c0_130, %c0_131] : memref<12x2xf32, #tpu.memory_space<vmem>>, vector<12x2xf32>
    %c0_132 = arith.constant 0 : index
    %c0_133 = arith.constant 0 : index
    %175 = vector.load %arg22[%c0_132, %c0_133] : memref<2x32xf32, #tpu.memory_space<vmem>>, vector<2x32xf32>
    %cst_134 = arith.constant dense<0.000000e+00> : vector<12x32xf32>
    %176 = tpu.matmul %174, %175, %cst_134 {dimension_numbers = #tpu.dot_dimension_numbers<[1], [0], [0], [1], [0, 0, 1, 1], [], []>} : vector<12x2xf32>, vector<2x32xf32>, vector<12x32xf32> -> vector<12x32xf32>
    %177 = arith.addf %176, %173 : vector<12x32xf32>
    %c0_135 = arith.constant 0 : index
    %c0_136 = arith.constant 0 : index
    %178 = vector.load %arg24[%c0_135, %c0_136] : memref<1x32xf32, #tpu.memory_space<vmem>>, vector<1x32xf32>
    %179 = vector.broadcast %178 : vector<1x32xf32> to vector<12x32xf32>
    %180 = arith.addf %177, %179 : vector<12x32xf32>
    %cst_137 = arith.constant 0.000000e+00 : f32
    %181 = vector.broadcast %cst_137 : f32 to vector<12x32xf32>
    %182 = arith.maximumf %180, %181 : vector<12x32xf32>
    %c0_138 = arith.constant 0 : index
    %c0_139 = arith.constant 0 : index
    %183 = vector.load %arg25[%c0_138, %c0_139] : memref<32x32xf32, #tpu.memory_space<vmem>>, vector<32x32xf32>
    %cst_140 = arith.constant dense<0.000000e+00> : vector<12x32xf32>
    %184 = tpu.matmul %182, %183, %cst_140 {dimension_numbers = #tpu.dot_dimension_numbers<[1], [0], [0], [1], [0, 0, 1, 1], [], []>} : vector<12x32xf32>, vector<32x32xf32>, vector<12x32xf32> -> vector<12x32xf32>
    %c0_141 = arith.constant 0 : index
    %c0_142 = arith.constant 0 : index
    %185 = vector.load %arg26[%c0_141, %c0_142] : memref<1x32xf32, #tpu.memory_space<vmem>>, vector<1x32xf32>
    %186 = vector.broadcast %185 : vector<1x32xf32> to vector<12x32xf32>
    %187 = arith.addf %184, %186 : vector<12x32xf32>
    %cst_143 = arith.constant 0.000000e+00 : f32
    %188 = vector.broadcast %cst_143 : f32 to vector<12x32xf32>
    %189 = arith.maximumf %187, %188 : vector<12x32xf32>
    %c0_144 = arith.constant 0 : index
    %c0_145 = arith.constant 0 : index
    %190 = vector.load %arg27[%c0_144, %c0_145] : memref<32x32xf32, #tpu.memory_space<vmem>>, vector<32x32xf32>
    %cst_146 = arith.constant dense<0.000000e+00> : vector<12x32xf32>
    %191 = tpu.matmul %189, %190, %cst_146 {dimension_numbers = #tpu.dot_dimension_numbers<[1], [0], [0], [1], [0, 0, 1, 1], [], []>} : vector<12x32xf32>, vector<32x32xf32>, vector<12x32xf32> -> vector<12x32xf32>
    %c0_147 = arith.constant 0 : index
    %c0_148 = arith.constant 0 : index
    %192 = vector.load %arg28[%c0_147, %c0_148] : memref<1x32xf32, #tpu.memory_space<vmem>>, vector<1x32xf32>
    %193 = vector.broadcast %192 : vector<1x32xf32> to vector<12x32xf32>
    %194 = arith.addf %191, %193 : vector<12x32xf32>
    %cst_149 = arith.constant 0.000000e+00 : f32
    %195 = vector.broadcast %cst_149 : f32 to vector<12x32xf32>
    %196 = arith.maximumf %194, %195 : vector<12x32xf32>
    %c0_150 = arith.constant 0 : index
    %c0_151 = arith.constant 0 : index
    %197 = vector.load %arg29[%c0_150, %c0_151] : memref<32x128xf32, #tpu.memory_space<vmem>>, vector<32x128xf32>
    %cst_152 = arith.constant dense<0.000000e+00> : vector<12x128xf32>
    %198 = tpu.matmul %196, %197, %cst_152 {dimension_numbers = #tpu.dot_dimension_numbers<[1], [0], [0], [1], [0, 0, 1, 1], [], []>} : vector<12x32xf32>, vector<32x128xf32>, vector<12x128xf32> -> vector<12x128xf32>
    %c0_153 = arith.constant 0 : index
    %c0_154 = arith.constant 0 : index
    %199 = vector.load %arg30[%c0_153, %c0_154] : memref<1x128xf32, #tpu.memory_space<vmem>>, vector<1x128xf32>
    %200 = vector.broadcast %199 : vector<1x128xf32> to vector<12x128xf32>
    %201 = arith.addf %198, %200 : vector<12x128xf32>
    %202 = tpu.iota {dimensions = array<i32: 1>} : vector<12x128xi32>
    %cst_155 = arith.constant 0.000000e+00 : f32
    %203 = vector.broadcast %cst_155 : f32 to vector<12x128xf32>
    %204 = arith.maximumf %201, %203 : vector<12x128xf32>
    %205 = math.absf %201 : vector<12x128xf32>
    %cst_156 = arith.constant 0.000000e+00 : f32
    %206 = vector.broadcast %cst_156 : f32 to vector<12x128xf32>
    %207 = arith.subf %206, %205 : vector<12x128xf32>
    %208 = math.exp %207 : vector<12x128xf32>
    %cst_157 = arith.constant 1.000000e+00 : f32
    %209 = vector.broadcast %cst_157 : f32 to vector<12x128xf32>
    %210 = arith.addf %209, %208 : vector<12x128xf32>
    %211 = math.log %210 : vector<12x128xf32>
    %212 = arith.addf %204, %211 : vector<12x128xf32>
    %c64_i32 = arith.constant 64 : i32
    %213 = vector.broadcast %c64_i32 : i32 to vector<12x128xi32>
    %214 = arith.cmpi slt, %202, %213 : vector<12x128xi32>
    %cst_158 = arith.constant 0.899999976 : f32
    %215 = vector.broadcast %cst_158 : f32 to vector<12x128xf32>
    %216 = arith.mulf %215, %212 : vector<12x128xf32>
    %cst_159 = arith.constant 1.000000e-01 : f32
    %217 = vector.broadcast %cst_159 : f32 to vector<12x128xf32>
    %218 = arith.addf %217, %216 : vector<12x128xf32>
    %219 = arith.select %214, %201, %218 : vector<12x128xi1>, vector<12x128xf32>
    %c0_160 = arith.constant 0 : index
    %c0_161 = arith.constant 0 : index
    %220 = vector.load %arg32[%c0_160, %c0_161] : memref<12x128xf32, #tpu.memory_space<vmem>>, vector<12x128xf32>
    tpu.vector_store %arg32[%c0_160, %c0_161], %219 {strides = array<i32>} : memref<12x128xf32, #tpu.memory_space<vmem>>, vector<12x128xf32>,
    return
  }
}

</mosaic_0001>

<llo_original>
// kernel: neural_process_conv_forward.1
$region0: #{neural_process_conv_forward.1}
  #allocation0 [shape = 'u32[]', space=smem, size = 0x4, offset = 0x4, fixed_abs, tag = 'smem constant byte address 0x4 - core index']
  #allocation1 [shape = 'u32[144,128]{1,0:T(1,128)}', space=vmem, size = 0x12000, scoped, tag = 'internal scratch']
  %s0 = inlined_call_operand.smem [shape: u32[33], index: -1, kind: input, shape index: {}]
  %s1 = sld [smem:[%s0]]
  %s2 = scalar_lea.smem %s0, 1
  %s3 = sld [smem:[%s2]]
  %s4 = scalar_lea.smem %s0, 2
  %s5 = sld [smem:[%s4]]
  %s6 = scalar_lea.smem %s0, 3
  %s7 = sld [smem:[%s6]]
  %s8 = scalar_lea.smem %s0, 4
  %s9 = sld [smem:[%s8]]
  %s10 = scalar_lea.smem %s0, 5
  %s11 = sld [smem:[%s10]]
  %s12 = scalar_lea.smem %s0, 6
  %s13 = sld [smem:[%s12]]
  %s14 = scalar_lea.smem %s0, 7
  %s15 = sld [smem:[%s14]]
  %s16 = scalar_lea.smem %s0, 8
  %s17 = sld [smem:[%s16]]
  %s18 = scalar_lea.smem %s0, 9
  %s19 = sld [smem:[%s18]]
  %s20 = scalar_lea.smem %s0, 10
  %s21 = sld [smem:[%s20]]
  %s22 = scalar_lea.smem %s0, 11
  %s23 = sld [smem:[%s22]]
  %s24 = scalar_lea.smem %s0, 12
  %s25 = sld [smem:[%s24]]
  %s26 = scalar_lea.smem %s0, 13
  %s27 = sld [smem:[%s26]]
  %s28 = scalar_lea.smem %s0, 14
  %s29 = sld [smem:[%s28]]
  %s30 = scalar_lea.smem %s0, 15
  %s31 = sld [smem:[%s30]]
  %s32 = scalar_lea.smem %s0, 16
  %s33 = sld [smem:[%s32]]
  %s34 = scalar_lea.smem %s0, 17
  %s35 = sld [smem:[%s34]]
  %s36 = scalar_lea.smem %s0, 18
  %s37 = sld [smem:[%s36]]
  %s38 = scalar_lea.smem %s0, 19
  %s39 = sld [smem:[%s38]]
  %s40 = scalar_lea.smem %s0, 20
  %s41 = sld [smem:[%s40]]
  %s42 = scalar_lea.smem %s0, 21
  %s43 = sld [smem:[%s42]]
  %s44 = scalar_lea.smem %s0, 22
  %s45 = sld [smem:[%s44]]
  %s46 = scalar_lea.smem %s0, 23
  %s47 = sld [smem:[%s46]]
  %s48 = scalar_lea.smem %s0, 24
  %s49 = sld [smem:[%s48]]
  %s50 = scalar_lea.smem %s0, 25
  %s51 = sld [smem:[%s50]]
  %s52 = scalar_lea.smem %s0, 26
  %s53 = sld [smem:[%s52]]
  %s54 = scalar_lea.smem %s0, 27
  %s55 = sld [smem:[%s54]]
  %s56 = scalar_lea.smem %s0, 28
  %s57 = sld [smem:[%s56]]
  %s58 = scalar_lea.smem %s0, 29
  %s59 = sld [smem:[%s58]]
  %s60 = scalar_lea.smem %s0, 30
  %s61 = sld [smem:[%s60]]
  %s62 = scalar_lea.smem %s0, 31
  %s63 = sld [smem:[%s62]]
  %s64 = scalar_lea.smem %s0, 32
  %s65 = sld [smem:[%s64]]
  %66 = xla_tuple %s63, %s65
  %s67 = sld [smem:[#allocation0]]
  $region142: #{neural_process_conv_forward.1} parent=0
    _
  %s69 = ssub.s32 1, %s67
  %s70 = scalar_select 0, %s69, %s67
  // Predicated region
  $region2: #{neural_process_conv_forward.1} parent=0 // pred_check
    _
  $region3: #{neural_process_conv_forward.1} parent=0 // pred_check_branch
    %72 = sbr.rel (0) target = $region5
  $region4: #{neural_process_conv_forward.1} parent=0 // pred_region
    _
  $region5: #{neural_process_conv_forward.1} parent=0 // pred_fallthru
    _
  // Predicated region
  $region6: #{neural_process_conv_forward.1} parent=0 // pred_check
    _
  $region7: #{neural_process_conv_forward.1} parent=0 // pred_check_branch
    %74 = sbr.rel (0) target = $region9
  $region8: #{neural_process_conv_forward.1} parent=0 // pred_region
    _
  $region9: #{neural_process_conv_forward.1} parent=0 // pred_fallthru
    _
  // Predicated region
  $region10: #{neural_process_conv_forward.1} parent=0 // pred_check
    _
  $region11: #{neural_process_conv_forward.1} parent=0 // pred_check_branch
    %76 = sbr.rel (0) target = $region13
  $region12: #{neural_process_conv_forward.1} parent=0 // pred_region
    _
  $region13: #{neural_process_conv_forward.1} parent=0 // pred_fallthru
    _
  // Predicated region
  $region14: #{neural_process_conv_forward.1} parent=0 // pred_check
    _
  $region15: #{neural_process_conv_forward.1} parent=0 // pred_check_branch
    %78 = sbr.rel (0) target = $region17
  $region16: #{neural_process_conv_forward.1} parent=0 // pred_region
    _
  $region17: #{neural_process_conv_forward.1} parent=0 // pred_fallthru
    _
  // Predicated region
  $region18: #{neural_process_conv_forward.1} parent=0 // pred_check
    _
  $region19: #{neural_process_conv_forward.1} parent=0 // pred_check_branch
    %80 = sbr.rel (0) target = $region21
  $region20: #{neural_process_conv_forward.1} parent=0 // pred_region
    _
  $region21: #{neural_process_conv_forward.1} parent=0 // pred_fallthru
    _
  // Predicated region
  $region22: #{neural_process_conv_forward.1} parent=0 // pred_check
    _
  $region23: #{neural_process_conv_forward.1} parent=0 // pred_check_branch
    %82 = sbr.rel (0) target = $region25
  $region24: #{neural_process_conv_forward.1} parent=0 // pred_region
    _
  $region25: #{neural_process_conv_forward.1} parent=0 // pred_fallthru
    _
  // Predicated region
  $region26: #{neural_process_conv_forward.1} parent=0 // pred_check
    _
  $region27: #{neural_process_conv_forward.1} parent=0 // pred_check_branch
    %84 = sbr.rel (0) target = $region29
  $region28: #{neural_process_conv_forward.1} parent=0 // pred_region
    _
  $region29: #{neural_process_conv_forward.1} parent=0 // pred_fallthru
    _
  // Predicated region
  $region30: #{neural_process_conv_forward.1} parent=0 // pred_check
    _
  $region31: #{neural_process_conv_forward.1} parent=0 // pred_check_branch
    %86 = sbr.rel (0) target = $region33
  $region32: #{neural_process_conv_forward.1} parent=0 // pred_region
    _
  $region33: #{neural_process_conv_forward.1} parent=0 // pred_fallthru
    _
  // Predicated region
  $region34: #{neural_process_conv_forward.1} parent=0 // pred_check
    _
  $region35: #{neural_process_conv_forward.1} parent=0 // pred_check_branch
    %88 = sbr.rel (0) target = $region37
  $region36: #{neural_process_conv_forward.1} parent=0 // pred_region
    _
  $region37: #{neural_process_conv_forward.1} parent=0 // pred_fallthru
    _
  // Predicated region
  $region38: #{neural_process_conv_forward.1} parent=0 // pred_check
    _
  $region39: #{neural_process_conv_forward.1} parent=0 // pred_check_branch
    %90 = sbr.rel (0) target = $region41
  $region40: #{neural_process_conv_forward.1} parent=0 // pred_region
    _
  $region41: #{neural_process_conv_forward.1} parent=0 // pred_fallthru
    _
  // Predicated region
  $region42: #{neural_process_conv_forward.1} parent=0 // pred_check
    _
  $region43: #{neural_process_conv_forward.1} parent=0 // pred_check_branch
    %92 = sbr.rel (0) target = $region45
  $region44: #{neural_process_conv_forward.1} parent=0 // pred_region
    _
  $region45: #{neural_process_conv_forward.1} parent=0 // pred_fallthru
    _
  // Predicated region
  $region46: #{neural_process_conv_forward.1} parent=0 // pred_check
    _
  $region47: #{neural_process_conv_forward.1} parent=0 // pred_check_branch
    %94 = sbr.rel (0) target = $region49
  $region48: #{neural_process_conv_forward.1} parent=0 // pred_region
    _
  $region49: #{neural_process_conv_forward.1} parent=0 // pred_fallthru
    _
  // Predicated region
  $region50: #{neural_process_conv_forward.1} parent=0 // pred_check
    _
  $region51: #{neural_process_conv_forward.1} parent=0 // pred_check_branch
    %96 = sbr.rel (0) target = $region53
  $region52: #{neural_process_conv_forward.1} parent=0 // pred_region
    _
  $region53: #{neural_process_conv_forward.1} parent=0 // pred_fallthru
    _
  // Predicated region
  $region54: #{neural_process_conv_forward.1} parent=0 // pred_check
    _
  $region55: #{neural_process_conv_forward.1} parent=0 // pred_check_branch
    %98 = sbr.rel (0) target = $region57
  $region56: #{neural_process_conv_forward.1} parent=0 // pred_region
    _
  $region57: #{neural_process_conv_forward.1} parent=0 // pred_fallthru
    _
  // Predicated region
  $region58: #{neural_process_conv_forward.1} parent=0 // pred_check
    _
  $region59: #{neural_process_conv_forward.1} parent=0 // pred_check_branch
    %100 = sbr.rel (0) target = $region61
  $region60: #{neural_process_conv_forward.1} parent=0 // pred_region
    _
  $region61: #{neural_process_conv_forward.1} parent=0 // pred_fallthru
    _
  // Predicated region
  $region62: #{neural_process_conv_forward.1} parent=0 // pred_check
    _
  $region63: #{neural_process_conv_forward.1} parent=0 // pred_check_branch
    %102 = sbr.rel (0) target = $region65
  $region64: #{neural_process_conv_forward.1} parent=0 // pred_region
    _
  $region65: #{neural_process_conv_forward.1} parent=0 // pred_fallthru
    _
  // Predicated region
  $region66: #{neural_process_conv_forward.1} parent=0 // pred_check
    _
  $region67: #{neural_process_conv_forward.1} parent=0 // pred_check_branch
    %104 = sbr.rel (0) target = $region69
  $region68: #{neural_process_conv_forward.1} parent=0 // pred_region
    _
  $region69: #{neural_process_conv_forward.1} parent=0 // pred_fallthru
    _
  // Predicated region
  $region70: #{neural_process_conv_forward.1} parent=0 // pred_check
    _
  $region71: #{neural_process_conv_forward.1} parent=0 // pred_check_branch
    %106 = sbr.rel (0) target = $region73
  $region72: #{neural_process_conv_forward.1} parent=0 // pred_region
    _
  $region73: #{neural_process_conv_forward.1} parent=0 // pred_fallthru
    _
  // Predicated region
  $region74: #{neural_process_conv_forward.1} parent=0 // pred_check
    _
  $region75: #{neural_process_conv_forward.1} parent=0 // pred_check_branch
    %108 = sbr.rel (0) target = $region77
  $region76: #{neural_process_conv_forward.1} parent=0 // pred_region
    _
  $region77: #{neural_process_conv_forward.1} parent=0 // pred_fallthru
    _
  // Predicated region
  $region78: #{neural_process_conv_forward.1} parent=0 // pred_check
    _
  $region79: #{neural_process_conv_forward.1} parent=0 // pred_check_branch
    %110 = sbr.rel (0) target = $region81
  $region80: #{neural_process_conv_forward.1} parent=0 // pred_region
    _
  $region81: #{neural_process_conv_forward.1} parent=0 // pred_fallthru
    _
  // Predicated region
  $region82: #{neural_process_conv_forward.1} parent=0 // pred_check
    _
  $region83: #{neural_process_conv_forward.1} parent=0 // pred_check_branch
    %112 = sbr.rel (0) target = $region85
  $region84: #{neural_process_conv_forward.1} parent=0 // pred_region
    _
  $region85: #{neural_process_conv_forward.1} parent=0 // pred_fallthru
    _
  // Predicated region
  $region86: #{neural_process_conv_forward.1} parent=0 // pred_check
    _
  $region87: #{neural_process_conv_forward.1} parent=0 // pred_check_branch
    %114 = sbr.rel (0) target = $region89
  $region88: #{neural_process_conv_forward.1} parent=0 // pred_region
    _
  $region89: #{neural_process_conv_forward.1} parent=0 // pred_fallthru
    _
  // Predicated region
  $region90: #{neural_process_conv_forward.1} parent=0 // pred_check
    _
  $region91: #{neural_process_conv_forward.1} parent=0 // pred_check_branch
    %116 = sbr.rel (0) target = $region93
  $region92: #{neural_process_conv_forward.1} parent=0 // pred_region
    _
  $region93: #{neural_process_conv_forward.1} parent=0 // pred_fallthru
    _
  // Predicated region
  $region94: #{neural_process_conv_forward.1} parent=0 // pred_check
    _
  $region95: #{neural_process_conv_forward.1} parent=0 // pred_check_branch
    %118 = sbr.rel (0) target = $region97
  $region96: #{neural_process_conv_forward.1} parent=0 // pred_region
    _
  $region97: #{neural_process_conv_forward.1} parent=0 // pred_fallthru
    _
  // Predicated region
  $region98: #{neural_process_conv_forward.1} parent=0 // pred_check
    _
  $region99: #{neural_process_conv_forward.1} parent=0 // pred_check_branch
    %120 = sbr.rel (0) target = $region101
  $region100: #{neural_process_conv_forward.1} parent=0 // pred_region
    _
  $region101: #{neural_process_conv_forward.1} parent=0 // pred_fallthru
    _
  // Predicated region
  $region102: #{neural_process_conv_forward.1} parent=0 // pred_check
    _
  $region103: #{neural_process_conv_forward.1} parent=0 // pred_check_branch
    %122 = sbr.rel (0) target = $region105
  $region104: #{neural_process_conv_forward.1} parent=0 // pred_region
    _
  $region105: #{neural_process_conv_forward.1} parent=0 // pred_fallthru
    _
  // Predicated region
  $region106: #{neural_process_conv_forward.1} parent=0 // pred_check
    _
  $region107: #{neural_process_conv_forward.1} parent=0 // pred_check_branch
    %124 = sbr.rel (0) target = $region109
  $region108: #{neural_process_conv_forward.1} parent=0 // pred_region
    _
  $region109: #{neural_process_conv_forward.1} parent=0 // pred_fallthru
    _
  // Predicated region
  $region110: #{neural_process_conv_forward.1} parent=0 // pred_check
    _
  $region111: #{neural_process_conv_forward.1} parent=0 // pred_check_branch
    %126 = sbr.rel (0) target = $region113
  $region112: #{neural_process_conv_forward.1} parent=0 // pred_region
    _
  $region113: #{neural_process_conv_forward.1} parent=0 // pred_fallthru
    _
  // Predicated region
  $region114: #{neural_process_conv_forward.1} parent=0 // pred_check
    _
  $region115: #{neural_process_conv_forward.1} parent=0 // pred_check_branch
    %128 = sbr.rel (0) target = $region117
  $region116: #{neural_process_conv_forward.1} parent=0 // pred_region
    _
  $region117: #{neural_process_conv_forward.1} parent=0 // pred_fallthru
    _
  // Predicated region
  $region118: #{neural_process_conv_forward.1} parent=0 // pred_check
    _
  $region119: #{neural_process_conv_forward.1} parent=0 // pred_check_branch
    %130 = sbr.rel (0) target = $region121
  $region120: #{neural_process_conv_forward.1} parent=0 // pred_region
    _
  $region121: #{neural_process_conv_forward.1} parent=0 // pred_fallthru
    _
  // Predicated region
  $region122: #{neural_process_conv_forward.1} parent=0 // pred_check
    _
  $region123: #{neural_process_conv_forward.1} parent=0 // pred_check_branch
    %132 = sbr.rel (0) target = $region125
  $region124: #{neural_process_conv_forward.1} parent=0 // pred_region
    _
  $region125: #{neural_process_conv_forward.1} parent=0 // pred_fallthru
    _
  %v133 = vld [vmem:[%s1] sm:$0xf]
  %v134 = vld [vmem:[%s3] sm:$0xf]
  %v135 = vld [vmem:[%s5] ss:$8 sm:$0xf]
  %v137 = vlaneseq
  %v138 = vshrl.u32 %v137, 7
  %v139 = vsub.s32 0, %v138
  %v140 = vrot.slane %v133, %v139
  %v141 = vlaneseq
  %v142 = vshrl.u32 %v141, 7
  %v143 = vsub.s32 1, %v142
  %v144 = vrot.slane %v133, %v143
  %v145 = vlaneseq
  %v146 = vshrl.u32 %v145, 7
  %v147 = vsub.s32 2, %v146
  %v148 = vrot.slane %v133, %v147
  %v149 = vlaneseq
  %v150 = vshrl.u32 %v149, 7
  %v151 = vsub.s32 3, %v150
  %v152 = vrot.slane %v133, %v151
  %157 = vrot.lane.b32.xlu0 %v140, 9
  %v158 = vpop.permute.xlu0 %157
  %159 = vrot.lane.b32.xlu0 %v144, 9
  %v160 = vpop.permute.xlu0 %159
  %161 = vrot.lane.b32.xlu0 %v148, 9
  %v162 = vpop.permute.xlu0 %161
  %163 = vrot.lane.b32.xlu0 %v152, 9
  %v164 = vpop.permute.xlu0 %163
  %v165 = vlaneseq
  %v166 = vand.u32 %v165, 127
  %vm167 = vcmp.lt.s32.totalorder %v166, 9
  %v168 = vsel %vm167, %v162, %v164
  %v169 = vsel %vm167, %v160, %v162
  %v170 = vsel %vm167, %v158, %v160
  %v171 = vsel %vm167, %v164, %v158
  %v173 = vlaneseq
  %v174 = vshrl.u32 %v173, 7
  %v175 = vsub.s32 0, %v174
  %v176 = vrot.slane %v135, %v175
  %v177 = vlaneseq
  %v178 = vshrl.u32 %v177, 7
  %v179 = vsub.s32 1, %v178
  %v180 = vrot.slane %v135, %v179
  %v181 = vlaneseq
  %v182 = vshrl.u32 %v181, 7
  %v183 = vsub.s32 2, %v182
  %v184 = vrot.slane %v135, %v183
  %v185 = vlaneseq
  %v186 = vshrl.u32 %v185, 7
  %v187 = vsub.s32 3, %v186
  %v188 = vrot.slane %v135, %v187
  %v193 = vmul.f32 %v171, %v176
  %v194 = vmul.f32 %v170, %v180
  %v195 = vmul.f32 %v169, %v184
  %v196 = vmul.f32 %v168, %v188
  %v197 = vmul.f32 %v134, %v135
  %s198 = scalar_lea.vmem %s5, 1
  %v199 = vld [vmem:[%s198] ss:$8 sm:$0xf]
  %200 = vrot.lane.b32.xlu0 %v140, 8
  %v201 = vpop.permute.xlu0 %200
  %202 = vrot.lane.b32.xlu0 %v144, 8
  %v203 = vpop.permute.xlu0 %202
  %204 = vrot.lane.b32.xlu0 %v148, 8
  %v205 = vpop.permute.xlu0 %204
  %206 = vrot.lane.b32.xlu0 %v152, 8
  %v207 = vpop.permute.xlu0 %206
  %vm208 = vcmp.lt.s32.totalorder %v166, 8
  %v209 = vsel %vm208, %v205, %v207
  %v210 = vsel %vm208, %v203, %v205
  %v211 = vsel %vm208, %v201, %v203
  %v212 = vsel %vm208, %v207, %v201
  %v214 = vlaneseq
  %v215 = vshrl.u32 %v214, 7
  %v216 = vsub.s32 0, %v215
  %v217 = vrot.slane %v199, %v216
  %v218 = vlaneseq
  %v219 = vshrl.u32 %v218, 7
  %v220 = vsub.s32 1, %v219
  %v221 = vrot.slane %v199, %v220
  %v222 = vlaneseq
  %v223 = vshrl.u32 %v222, 7
  %v224 = vsub.s32 2, %v223
  %v225 = vrot.slane %v199, %v224
  %v226 = vlaneseq
  %v227 = vshrl.u32 %v226, 7
  %v228 = vsub.s32 3, %v227
  %v229 = vrot.slane %v199, %v228
  %v234 = vmul.f32 %v212, %v217
  %v235 = vmul.f32 %v211, %v221
  %v236 = vmul.f32 %v210, %v225
  %v237 = vmul.f32 %v209, %v229
  %v238 = vmul.f32 %v134, %v199
  %s239 = scalar_lea.vmem %s5, 2
  %v240 = vld [vmem:[%s239] ss:$8 sm:$0xf]
  %241 = vrot.lane.b32.xlu0 %v140, 7
  %v242 = vpop.permute.xlu0 %241
  %243 = vrot.lane.b32.xlu0 %v144, 7
  %v244 = vpop.permute.xlu0 %243
  %245 = vrot.lane.b32.xlu0 %v148, 7
  %v246 = vpop.permute.xlu0 %245
  %247 = vrot.lane.b32.xlu0 %v152, 7
  %v248 = vpop.permute.xlu0 %247
  %vm249 = vcmp.lt.s32.totalorder %v166, 7
  %v250 = vsel %vm249, %v246, %v248
  %v251 = vsel %vm249, %v244, %v246
  %v252 = vsel %vm249, %v242, %v244
  %v253 = vsel %vm249, %v248, %v242
  %v255 = vlaneseq
  %v256 = vshrl.u32 %v255, 7
  %v257 = vsub.s32 0, %v256
  %v258 = vrot.slane %v240, %v257
  %v259 = vlaneseq
  %v260 = vshrl.u32 %v259, 7
  %v261 = vsub.s32 1, %v260
  %v262 = vrot.slane %v240, %v261
  %v263 = vlaneseq
  %v264 = vshrl.u32 %v263, 7
  %v265 = vsub.s32 2, %v264
  %v266 = vrot.slane %v240, %v265
  %v267 = vlaneseq
  %v268 = vshrl.u32 %v267, 7
  %v269 = vsub.s32 3, %v268
  %v270 = vrot.slane %v240, %v269
  %v275 = vmul.f32 %v253, %v258
  %v276 = vmul.f32 %v252, %v262
  %v277 = vmul.f32 %v251, %v266
  %v278 = vmul.f32 %v250, %v270
  %v279 = vmul.f32 %v134, %v240
  %s280 = scalar_lea.vmem %s5, 3
  %v281 = vld [vmem:[%s280] ss:$8 sm:$0xf]
  %282 = vrot.lane.b32.xlu0 %v140, 1
  %v283 = vpop.permute.xlu0 %282
  %284 = vrot.lane.b32.xlu0 %v144, 1
  %v285 = vpop.permute.xlu0 %284
  %286 = vrot.lane.b32.xlu0 %v148, 1
  %v287 = vpop.permute.xlu0 %286
  %288 = vrot.lane.b32.xlu0 %v152, 1
  %v289 = vpop.permute.xlu0 %288
  %vm290 = vcmp.lt.s32.totalorder %v166, 1
  %v291 = vsel %vm290, %v287, %v289
  %v292 = vsel %vm290, %v285, %v287
  %v293 = vsel %vm290, %v283, %v285
  %v294 = vsel %vm290, %v289, %v283
  %v296 = vlaneseq
  %v297 = vshrl.u32 %v296, 7
  %v298 = vsub.s32 0, %v297
  %v299 = vrot.slane %v281, %v298
  %v300 = vlaneseq
  %v301 = vshrl.u32 %v300, 7
  %v302 = vsub.s32 1, %v301
  %v303 = vrot.slane %v281, %v302
  %v304 = vlaneseq
  %v305 = vshrl.u32 %v304, 7
  %v306 = vsub.s32 2, %v305
  %v307 = vrot.slane %v281, %v306
  %v308 = vlaneseq
  %v309 = vshrl.u32 %v308, 7
  %v310 = vsub.s32 3, %v309
  %v311 = vrot.slane %v281, %v310
  %v316 = vmul.f32 %v294, %v299
  %v317 = vmul.f32 %v293, %v303
  %v318 = vmul.f32 %v292, %v307
  %v319 = vmul.f32 %v291, %v311
  %v320 = vmul.f32 %v134, %v281
  %s321 = scalar_lea.vmem %s5, 4
  %v322 = vld [vmem:[%s321] ss:$8 sm:$0xf]
  %v323 = vmul.f32 %v133, %v322
  %v324 = vmul.f32 %v134, %v322
  %s325 = scalar_lea.vmem %s5, 5
  %v326 = vld [vmem:[%s325] ss:$8 sm:$0xf]
  %327 = vrot.lane.b32.xlu0 %v140, 127
  %v328 = vpop.permute.xlu0 %327
  %329 = vrot.lane.b32.xlu0 %v144, 127
  %v330 = vpop.permute.xlu0 %329
  %331 = vrot.lane.b32.xlu0 %v148, 127
  %v332 = vpop.permute.xlu0 %331
  %333 = vrot.lane.b32.xlu0 %v152, 127
  %v334 = vpop.permute.xlu0 %333
  %vm335 = vcmp.lt.s32.totalorder %v166, 127
  %v336 = vsel %vm335, %v332, %v334
  %v337 = vsel %vm335, %v330, %v332
  %v338 = vsel %vm335, %v328, %v330
  %v339 = vsel %vm335, %v334, %v328
  %v341 = vlaneseq
  %v342 = vshrl.u32 %v341, 7
  %v343 = vsub.s32 0, %v342
  %v344 = vrot.slane %v326, %v343
  %v345 = vlaneseq
  %v346 = vshrl.u32 %v345, 7
  %v347 = vsub.s32 1, %v346
  %v348 = vrot.slane %v326, %v347
  %v349 = vlaneseq
  %v350 = vshrl.u32 %v349, 7
  %v351 = vsub.s32 2, %v350
  %v352 = vrot.slane %v326, %v351
  %v353 = vlaneseq
  %v354 = vshrl.u32 %v353, 7
  %v355 = vsub.s32 3, %v354
  %v356 = vrot.slane %v326, %v355
  %v361 = vmul.f32 %v338, %v344
  %v362 = vmul.f32 %v337, %v348
  %v363 = vmul.f32 %v336, %v352
  %v364 = vmul.f32 %v339, %v356
  %v365 = vmul.f32 %v134, %v326
  %s366 = scalar_lea.vmem %s5, 6
  %v367 = vld [vmem:[%s366] ss:$8 sm:$0xf]
  %368 = vrot.lane.b32.xlu0 %v140, 121
  %v369 = vpop.permute.xlu0 %368
  %370 = vrot.lane.b32.xlu0 %v144, 121
  %v371 = vpop.permute.xlu0 %370
  %372 = vrot.lane.b32.xlu0 %v148, 121
  %v373 = vpop.permute.xlu0 %372
  %374 = vrot.lane.b32.xlu0 %v152, 121
  %v375 = vpop.permute.xlu0 %374
  %vm376 = vcmp.lt.s32.totalorder %v166, 121
  %v377 = vsel %vm376, %v373, %v375
  %v378 = vsel %vm376, %v371, %v373
  %v379 = vsel %vm376, %v369, %v371
  %v380 = vsel %vm376, %v375, %v369
  %v382 = vlaneseq
  %v383 = vshrl.u32 %v382, 7
  %v384 = vsub.s32 0, %v383
  %v385 = vrot.slane %v367, %v384
  %v386 = vlaneseq
  %v387 = vshrl.u32 %v386, 7
  %v388 = vsub.s32 1, %v387
  %v389 = vrot.slane %v367, %v388
  %v390 = vlaneseq
  %v391 = vshrl.u32 %v390, 7
  %v392 = vsub.s32 2, %v391
  %v393 = vrot.slane %v367, %v392
  %v394 = vlaneseq
  %v395 = vshrl.u32 %v394, 7
  %v396 = vsub.s32 3, %v395
  %v397 = vrot.slane %v367, %v396
  %v402 = vmul.f32 %v379, %v385
  %v403 = vmul.f32 %v378, %v389
  %v404 = vmul.f32 %v377, %v393
  %v405 = vmul.f32 %v380, %v397
  %v406 = vmul.f32 %v134, %v367
  %s407 = scalar_lea.vmem %s5, 7
  %v408 = vld [vmem:[%s407] ss:$8 sm:$0xf]
  %409 = vrot.lane.b32.xlu0 %v140, 120
  %v410 = vpop.permute.xlu0 %409
  %411 = vrot.lane.b32.xlu0 %v144, 120
  %v412 = vpop.permute.xlu0 %411
  %413 = vrot.lane.b32.xlu0 %v148, 120
  %v414 = vpop.permute.xlu0 %413
  %415 = vrot.lane.b32.xlu0 %v152, 120
  %v416 = vpop.permute.xlu0 %415
  %vm417 = vcmp.lt.s32.totalorder %v166, 120
  %v418 = vsel %vm417, %v414, %v416
  %v419 = vsel %vm417, %v412, %v414
  %v420 = vsel %vm417, %v410, %v412
  %v421 = vsel %vm417, %v416, %v410
  %v423 = vlaneseq
  %v424 = vshrl.u32 %v423, 7
  %v425 = vsub.s32 0, %v424
  %v426 = vrot.slane %v408, %v425
  %v427 = vlaneseq
  %v428 = vshrl.u32 %v427, 7
  %v429 = vsub.s32 1, %v428
  %v430 = vrot.slane %v408, %v429
  %v431 = vlaneseq
  %v432 = vshrl.u32 %v431, 7
  %v433 = vsub.s32 2, %v432
  %v434 = vrot.slane %v408, %v433
  %v435 = vlaneseq
  %v436 = vshrl.u32 %v435, 7
  %v437 = vsub.s32 3, %v436
  %v438 = vrot.slane %v408, %v437
  %v443 = vmul.f32 %v420, %v426
  %v444 = vmul.f32 %v419, %v430
  %v445 = vmul.f32 %v418, %v434
  %v446 = vmul.f32 %v421, %v438
  %v447 = vmul.f32 %v134, %v408
  %s448 = scalar_lea.vmem %s5, 32
  %v449 = vld [vmem:[%s448] ss:$8 sm:$0xf]
  %450 = vrot.lane.b32.xlu0 %v140, 119
  %v451 = vpop.permute.xlu0 %450
  %452 = vrot.lane.b32.xlu0 %v144, 119
  %v453 = vpop.permute.xlu0 %452
  %454 = vrot.lane.b32.xlu0 %v148, 119
  %v455 = vpop.permute.xlu0 %454
  %456 = vrot.lane.b32.xlu0 %v152, 119
  %v457 = vpop.permute.xlu0 %456
  %vm458 = vcmp.lt.s32.totalorder %v166, 119
  %v459 = vsel %vm458, %v455, %v457
  %v460 = vsel %vm458, %v453, %v455
  %v461 = vsel %vm458, %v451, %v453
  %v462 = vsel %vm458, %v457, %v451
  %v464 = vlaneseq
  %v465 = vshrl.u32 %v464, 7
  %v466 = vsub.s32 0, %v465
  %v467 = vrot.slane %v449, %v466
  %v468 = vlaneseq
  %v469 = vshrl.u32 %v468, 7
  %v470 = vsub.s32 1, %v469
  %v471 = vrot.slane %v449, %v470
  %v472 = vlaneseq
  %v473 = vshrl.u32 %v472, 7
  %v474 = vsub.s32 2, %v473
  %v475 = vrot.slane %v449, %v474
  %v476 = vlaneseq
  %v477 = vshrl.u32 %v476, 7
  %v478 = vsub.s32 3, %v477
  %v479 = vrot.slane %v449, %v478
  %v484 = vmul.f32 %v461, %v467
  %v485 = vmul.f32 %v460, %v471
  %v486 = vmul.f32 %v459, %v475
  %v487 = vmul.f32 %v462, %v479
  %v488 = vmul.f32 %v134, %v449
  %v490 = vlaneseq
  %v491 = vshrl.u32 %v490, 7
  %v492 = vsub.s32 0, %v491
  %v493 = vrot.slane %v197, %v492
  %v494 = vlaneseq
  %v495 = vshrl.u32 %v494, 7
  %v496 = vsub.s32 1, %v495
  %v497 = vrot.slane %v197, %v496
  %v498 = vlaneseq
  %v499 = vshrl.u32 %v498, 7
  %v500 = vsub.s32 2, %v499
  %v501 = vrot.slane %v197, %v500
  %v502 = vlaneseq
  %v503 = vshrl.u32 %v502, 7
  %v504 = vsub.s32 3, %v503
  %v505 = vrot.slane %v197, %v504
  %v514 = vrot.slane %v234, 6
  %v515 = vrot.slane %v235, 6
  %v516 = vrot.slane %v236, 6
  %v517 = vrot.slane %v237, 6
  %v523 = vlaneseq
  %v524 = vshrl.u32 %v523, 7
  %v525 = vsub.s32 0, %v524
  %v526 = vrot.slane %v238, %v525
  %v527 = vlaneseq
  %v528 = vshrl.u32 %v527, 7
  %v529 = vsub.s32 1, %v528
  %v530 = vrot.slane %v238, %v529
  %v531 = vlaneseq
  %v532 = vshrl.u32 %v531, 7
  %v533 = vsub.s32 2, %v532
  %v534 = vrot.slane %v238, %v533
  %v535 = vlaneseq
  %v536 = vshrl.u32 %v535, 7
  %v537 = vsub.s32 3, %v536
  %v538 = vrot.slane %v238, %v537
  %v547 = vrot.slane %v275, 4
  %v548 = vrot.slane %v276, 4
  %v549 = vrot.slane %v277, 4
  %v550 = vrot.slane %v278, 4
  %v556 = vlaneseq
  %v557 = vshrl.u32 %v556, 7
  %v558 = vsub.s32 0, %v557
  %v559 = vrot.slane %v279, %v558
  %v560 = vlaneseq
  %v561 = vshrl.u32 %v560, 7
  %v562 = vsub.s32 1, %v561
  %v563 = vrot.slane %v279, %v562
  %v564 = vlaneseq
  %v565 = vshrl.u32 %v564, 7
  %v566 = vsub.s32 2, %v565
  %v567 = vrot.slane %v279, %v566
  %v568 = vlaneseq
  %v569 = vshrl.u32 %v568, 7
  %v570 = vsub.s32 3, %v569
  %v571 = vrot.slane %v279, %v570
  %v580 = vrot.slane %v316, 2
  %v581 = vrot.slane %v317, 2
  %v582 = vrot.slane %v318, 2
  %v583 = vrot.slane %v319, 2
  %v589 = vlaneseq
  %v590 = vshrl.u32 %v589, 7
  %v591 = vsub.s32 0, %v590
  %v592 = vrot.slane %v320, %v591
  %v593 = vlaneseq
  %v594 = vshrl.u32 %v593, 7
  %v595 = vsub.s32 1, %v594
  %v596 = vrot.slane %v320, %v595
  %v597 = vlaneseq
  %v598 = vshrl.u32 %v597, 7
  %v599 = vsub.s32 2, %v598
  %v600 = vrot.slane %v320, %v599
  %v601 = vlaneseq
  %v602 = vshrl.u32 %v601, 7
  %v603 = vsub.s32 3, %v602
  %v604 = vrot.slane %v320, %v603
  %v610 = vlaneseq
  %v611 = vshrl.u32 %v610, 7
  %v612 = vsub.s32 0, %v611
  %v613 = vrot.slane %v323, %v612
  %v614 = vlaneseq
  %v615 = vshrl.u32 %v614, 7
  %v616 = vsub.s32 1, %v615
  %v617 = vrot.slane %v323, %v616
  %v618 = vlaneseq
  %v619 = vshrl.u32 %v618, 7
  %v620 = vsub.s32 2, %v619
  %v621 = vrot.slane %v323, %v620
  %v622 = vlaneseq
  %v623 = vshrl.u32 %v622, 7
  %v624 = vsub.s32 3, %v623
  %v625 = vrot.slane %v323, %v624
  %v631 = vlaneseq
  %v632 = vshrl.u32 %v631, 7
  %v633 = vsub.s32 0, %v632
  %v634 = vrot.slane %v324, %v633
  %v635 = vlaneseq
  %v636 = vshrl.u32 %v635, 7
  %v637 = vsub.s32 1, %v636
  %v638 = vrot.slane %v324, %v637
  %v639 = vlaneseq
  %v640 = vshrl.u32 %v639, 7
  %v641 = vsub.s32 2, %v640
  %v642 = vrot.slane %v324, %v641
  %v643 = vlaneseq
  %v644 = vshrl.u32 %v643, 7
  %v645 = vsub.s32 3, %v644
  %v646 = vrot.slane %v324, %v645
  %v655 = vrot.slane %v361, 6
  %v656 = vrot.slane %v362, 6
  %v657 = vrot.slane %v363, 6
  %v658 = vrot.slane %v364, 6
  %v664 = vlaneseq
  %v665 = vshrl.u32 %v664, 7
  %v666 = vsub.s32 0, %v665
  %v667 = vrot.slane %v365, %v666
  %v668 = vlaneseq
  %v669 = vshrl.u32 %v668, 7
  %v670 = vsub.s32 1, %v669
  %v671 = vrot.slane %v365, %v670
  %v672 = vlaneseq
  %v673 = vshrl.u32 %v672, 7
  %v674 = vsub.s32 2, %v673
  %v675 = vrot.slane %v365, %v674
  %v676 = vlaneseq
  %v677 = vshrl.u32 %v676, 7
  %v678 = vsub.s32 3, %v677
  %v679 = vrot.slane %v365, %v678
  %v688 = vrot.slane %v402, 4
  %v689 = vrot.slane %v403, 4
  %v690 = vrot.slane %v404, 4
  %v691 = vrot.slane %v405, 4
  %v697 = vlaneseq
  %v698 = vshrl.u32 %v697, 7
  %v699 = vsub.s32 0, %v698
  %v700 = vrot.slane %v406, %v699
  %v701 = vlaneseq
  %v702 = vshrl.u32 %v701, 7
  %v703 = vsub.s32 1, %v702
  %v704 = vrot.slane %v406, %v703
  %v705 = vlaneseq
  %v706 = vshrl.u32 %v705, 7
  %v707 = vsub.s32 2, %v706
  %v708 = vrot.slane %v406, %v707
  %v709 = vlaneseq
  %v710 = vshrl.u32 %v709, 7
  %v711 = vsub.s32 3, %v710
  %v712 = vrot.slane %v406, %v711
  %v721 = vrot.slane %v443, 2
  %v722 = vrot.slane %v444, 2
  %v723 = vrot.slane %v445, 2
  %v724 = vrot.slane %v446, 2
  %v730 = vlaneseq
  %v731 = vshrl.u32 %v730, 7
  %v732 = vsub.s32 0, %v731
  %v733 = vrot.slane %v447, %v732
  %v734 = vlaneseq
  %v735 = vshrl.u32 %v734, 7
  %v736 = vsub.s32 1, %v735
  %v737 = vrot.slane %v447, %v736
  %v738 = vlaneseq
  %v739 = vshrl.u32 %v738, 7
  %v740 = vsub.s32 2, %v739
  %v741 = vrot.slane %v447, %v740
  %v742 = vlaneseq
  %v743 = vshrl.u32 %v742, 7
  %v744 = vsub.s32 3, %v743
  %v745 = vrot.slane %v447, %v744
  %vm750 = vcmask 1040384
  %v751 = vsel %vm750, %v193, %v493
  %v752 = vsel %vm750, %v194, %v497
  %v753 = vsel %vm750, %v195, %v501
  %v754 = vsel %vm750, %v196, %v505
  %vm755 = vcmask 1041408
  %v756 = vsel %vm755, %v751, %v514
  %v757 = vsel %vm755, %v752, %v515
  %v758 = vsel %vm755, %v753, %v516
  %v759 = vsel %vm755, %v754, %v517
  %vm760 = vcmask 1042432
  %v761 = vsel %vm760, %v756, %v526
  %v762 = vsel %vm760, %v757, %v530
  %v763 = vsel %vm760, %v758, %v534
  %v764 = vsel %vm760, %v759, %v538
  %vm765 = vcmask 1043456
  %v766 = vsel %vm765, %v761, %v547
  %v767 = vsel %vm765, %v762, %v548
  %v768 = vsel %vm765, %v763, %v549
  %v769 = vsel %vm765, %v764, %v550
  %vm770 = vcmask 1044480
  %v771 = vsel %vm770, %v766, %v559
  %v772 = vsel %vm770, %v767, %v563
  %v773 = vsel %vm770, %v768, %v567
  %v774 = vsel %vm770, %v769, %v571
  %vm775 = vcmask 1045504
  %v776 = vsel %vm775, %v771, %v580
  %v777 = vsel %vm775, %v772, %v581
  %v778 = vsel %vm775, %v773, %v582
  %v779 = vsel %vm775, %v774, %v583
  %vm780 = vcmask 1046528
  %v781 = vsel %vm780, %v776, %v592
  %v782 = vsel %vm780, %v777, %v596
  %v783 = vsel %vm780, %v778, %v600
  %v784 = vsel %vm780, %v779, %v604
  %v785 = vsel %vm750, %v613, %v634
  %v786 = vsel %vm750, %v617, %v638
  %v787 = vsel %vm750, %v621, %v642
  %v788 = vsel %vm750, %v625, %v646
  %v789 = vsel %vm755, %v785, %v655
  %v790 = vsel %vm755, %v786, %v656
  %v791 = vsel %vm755, %v787, %v657
  %v792 = vsel %vm755, %v788, %v658
  %v793 = vsel %vm760, %v789, %v667
  %v794 = vsel %vm760, %v790, %v671
  %v795 = vsel %vm760, %v791, %v675
  %v796 = vsel %vm760, %v792, %v679
  %v797 = vsel %vm765, %v793, %v688
  %v798 = vsel %vm765, %v794, %v689
  %v799 = vsel %vm765, %v795, %v690
  %v800 = vsel %vm765, %v796, %v691
  %v801 = vsel %vm770, %v797, %v700
  %v802 = vsel %vm770, %v798, %v704
  %v803 = vsel %vm770, %v799, %v708
  %v804 = vsel %vm770, %v800, %v712
  %v805 = vsel %vm775, %v801, %v721
  %v806 = vsel %vm775, %v802, %v722
  %v807 = vsel %vm775, %v803, %v723
  %v808 = vsel %vm775, %v804, %v724
  %v809 = vsel %vm780, %v805, %v733
  %v810 = vsel %vm780, %v806, %v737
  %v811 = vsel %vm780, %v807, %v741
  %v812 = vsel %vm780, %v808, %v745
  %v814 = vlaneseq
  %v815 = vshrl.u32 %v814, 7
  %v816 = vsub.s32 0, %v815
  %v817 = vrot.slane %v488, %v816
  %v818 = vlaneseq
  %v819 = vshrl.u32 %v818, 7
  %v820 = vsub.s32 1, %v819
  %v821 = vrot.slane %v488, %v820
  %v822 = vlaneseq
  %v823 = vshrl.u32 %v822, 7
  %v824 = vsub.s32 2, %v823
  %v825 = vrot.slane %v488, %v824
  %v826 = vlaneseq
  %v827 = vshrl.u32 %v826, 7
  %v828 = vsub.s32 3, %v827
  %v829 = vrot.slane %v488, %v828
  %v834 = vsel %vm750, %v484, %v817
  %v835 = vsel %vm750, %v485, %v821
  %v836 = vsel %vm750, %v486, %v825
  %v837 = vsel %vm750, %v487, %v829
  %v838 = vld [vmem:[%s13] sm:$0xff]
  %v839 = vld [vmem:[%s13 + $0x8] sm:$0xff]
  %v840 = vld [vmem:[%s13 + $0x10] sm:$0xff]
  %v841 = vld [vmem:[%s13 + $0x18] sm:$0xff]
  %v842 = vld [vmem:[%s15] sm:$0xff]
  %v843 = vld [vmem:[%s15 + $0x8] sm:$0xff]
  %v844 = vld [vmem:[%s15 + $0x10] sm:$0xff]
  %v845 = vld [vmem:[%s15 + $0x18] sm:$0xff]
  %847 = vset.pattern.permute.xlu0 0
  %848 = vperm.xlu0 %847, %v842
  %v849 = vpop.permute.xlu0 %848
  %852 = vset.pattern.permute.xlu0 0
  %853 = vperm.xlu0 %852, %v843
  %v854 = vpop.permute.xlu0 %853
  %857 = vset.pattern.permute.xlu0 0
  %858 = vperm.xlu0 %857, %v844
  %v859 = vpop.permute.xlu0 %858
  %862 = vset.pattern.permute.xlu0 0
  %863 = vperm.xlu0 %862, %v845
  %v864 = vpop.permute.xlu0 %863
  %vm866 = vcmask 146432
  %v868 = vsel %vm866, %v838, 0
  %v871 = vsel %vm866, %v839, 0
  %v874 = vsel %vm866, %v840, 0
  %v877 = vsel %vm866, %v841, 0
  %v880 = vsel %vm755, %v834, 0
  %v883 = vsel %vm755, %v835, 0
  %v886 = vsel %vm755, %v836, 0
  %v889 = vsel %vm755, %v837, 0
  %891 = vmatprep.subr.mxu0 %v782
  %892 = vmatpush1.msra.mxu0 %v781
  %893 = vmatprep.subr.mxu0 %v810
  %894 = vmatpush1.msra.mxu0 %v809
  %895 = vmatprep.subr.mxu0 %v883
  %896 = vmatpush1.msra.mxu0 %v880
  %897 = vmatprep.subr.mxu0 0.0
  %898 = vmatpush1.msra.mxu0 0.0
  %899 = vmatprep.subr.mxu0 0.0
  %900 = vmatpush1.msra.mxu0 0.0
  %901 = vmatprep.subr.mxu0 0.0
  %902 = vmatpush1.msra.mxu0 0.0
  %903 = vmatprep.subr.mxu0 0.0
  %904 = vmatpush1.msra.mxu0 0.0
  %905 = vmatprep.subr.mxu0 0.0
  %906 = vmatpush1.msra.mxu0 0.0
  %907 = vmatprep.subr.mxu0 0.0
  %908 = vmatpush1.msra.mxu0 0.0
  %909 = vmatprep.subr.mxu0 0.0
  %910 = vmatpush1.msra.mxu0 0.0
  %911 = vmatprep.subr.mxu0 0.0
  %912 = vmatpush1.msra.mxu0 0.0
  %913 = vmatprep.subr.mxu0 0.0
  %914 = vmatpush1.msra.mxu0 0.0
  %915 = vmatprep.subr.mxu0 0.0
  %916 = vmatpush1.msra.mxu0 0.0
  %917 = vmatprep.subr.mxu0 0.0
  %918 = vmatpush1.msra.mxu0 0.0
  %919 = vmatprep.subr.mxu0 0.0
  %920 = vmatpush1.msra.mxu0 0.0
  %921 = vmatprep.subr.mxu0 0.0
  %922 = vmatpush1.msra.mxu0 0.0
  %923 = vmatprep.subr.mxu0 0.0
  %924 = vmatpush1.msra.mxu0 0.0
  %925 = vmatprep.subr.mxu0 0.0
  %926 = vmatpush1.msra.mxu0 0.0
  %927 = vmatprep.subr.mxu0 0.0
  %928 = vmatpush1.msra.mxu0 0.0
  %929 = vmatprep.subr.mxu0 0.0
  %930 = vmatpush1.msra.mxu0 0.0
  %931 = vmatprep.subr.mxu0 0.0
  %932 = vmatpush1.msra.mxu0 0.0
  %933 = vmatprep.subr.mxu0 0.0
  %934 = vmatpush1.msra.mxu0 0.0
  %935 = vmatprep.subr.mxu0 0.0
  %936 = vmatpush1.msra.mxu0 0.0
  %937 = vmatprep.subr.mxu0 0.0
  %938 = vmatpush1.msra.mxu0 0.0
  %939 = vmatprep.subr.mxu0 0.0
  %940 = vmatpush1.msra.mxu0 0.0
  %941 = vmatprep.subr.mxu0 0.0
  %942 = vmatpush1.msra.mxu0 0.0
  %943 = vmatprep.subr.mxu0 0.0
  %944 = vmatpush1.msra.mxu0 0.0
  %945 = vmatprep.subr.mxu0 0.0
  %946 = vmatpush1.msra.mxu0 0.0
  %947 = vmatprep.subr.mxu0 0.0
  %948 = vmatpush1.msra.mxu0 0.0
  %949 = vmatprep.subr.mxu0 0.0
  %950 = vmatpush1.msra.mxu0 0.0
  %951 = vmatprep.subr.mxu0 0.0
  %952 = vmatpush1.msra.mxu0 0.0
  %953 = vmatprep.subr.mxu0 0.0
  %954 = vmatpush1.msra.mxu0 0.0
  %955 = vmatprep.mubr.f32.mxu0 0.0
  %956 = vmatmul.mubr.f32.gmra.mrb[0].mxu0 %v868
  %v957 = vpop.f32.mrb[0].mxu0
  %v958 = vadd.f32 %v849, %v957
  %v959 = vpop.f32.mrb[0].mxu0
  %v960 = vadd.f32 %v849, %v959
  %961 = vmatprep.mubr.f32.mxu0 0.0
  %962 = vmatmul.mubr.f32.gmra.mrb[0].mxu0 %v871
  %v963 = vpop.f32.mrb[0].mxu0
  %v964 = vadd.f32 %v854, %v963
  %v965 = vpop.f32.mrb[0].mxu0
  %v966 = vadd.f32 %v854, %v965
  %967 = vmatprep.mubr.f32.mxu0 0.0
  %968 = vmatmul.mubr.f32.gmra.mrb[0].mxu0 %v874
  %v969 = vpop.f32.mrb[0].mxu0
  %v970 = vadd.f32 %v859, %v969
  %v971 = vpop.f32.mrb[0].mxu0
  %v972 = vadd.f32 %v859, %v971
  %973 = vmatprep.mubr.f32.mxu0 0.0
  %974 = vmatmul.mubr.f32.gmra.mrb[0].mxu0 %v877
  %v975 = vpop.f32.mrb[0].mxu0
  %v976 = vadd.f32 %v864, %v975
  %v977 = vpop.f32.mrb[0].mxu0
  %v978 = vadd.f32 %v864, %v977
  %979 = vdwg.mxu0
  %980 = vmatprep.subr.mxu0 %v784
  %981 = vmatpush1.msra.mxu0 %v783
  %982 = vmatprep.subr.mxu0 %v812
  %983 = vmatpush1.msra.mxu0 %v811
  %984 = vmatprep.subr.mxu0 %v889
  %985 = vmatpush1.msra.mxu0 %v886
  %986 = vmatprep.subr.mxu0 0.0
  %987 = vmatpush1.msra.mxu0 0.0
  %988 = vmatprep.subr.mxu0 0.0
  %989 = vmatpush1.msra.mxu0 0.0
  %990 = vmatprep.subr.mxu0 0.0
  %991 = vmatpush1.msra.mxu0 0.0
  %992 = vmatprep.subr.mxu0 0.0
  %993 = vmatpush1.msra.mxu0 0.0
  %994 = vmatprep.subr.mxu0 0.0
  %995 = vmatpush1.msra.mxu0 0.0
  %996 = vmatprep.subr.mxu0 0.0
  %997 = vmatpush1.msra.mxu0 0.0
  %998 = vmatprep.subr.mxu0 0.0
  %999 = vmatpush1.msra.mxu0 0.0
  %1000 = vmatprep.subr.mxu0 0.0
  %1001 = vmatpush1.msra.mxu0 0.0
  %1002 = vmatprep.subr.mxu0 0.0
  %1003 = vmatpush1.msra.mxu0 0.0
  %1004 = vmatprep.subr.mxu0 0.0
  %1005 = vmatpush1.msra.mxu0 0.0
  %1006 = vmatprep.subr.mxu0 0.0
  %1007 = vmatpush1.msra.mxu0 0.0
  %1008 = vmatprep.subr.mxu0 0.0
  %1009 = vmatpush1.msra.mxu0 0.0
  %1010 = vmatprep.subr.mxu0 0.0
  %1011 = vmatpush1.msra.mxu0 0.0
  %1012 = vmatprep.subr.mxu0 0.0
  %1013 = vmatpush1.msra.mxu0 0.0
  %1014 = vmatprep.subr.mxu0 0.0
  %1015 = vmatpush1.msra.mxu0 0.0
  %1016 = vmatprep.subr.mxu0 0.0
  %1017 = vmatpush1.msra.mxu0 0.0
  %1018 = vmatprep.subr.mxu0 0.0
  %1019 = vmatpush1.msra.mxu0 0.0
  %1020 = vmatprep.subr.mxu0 0.0
  %1021 = vmatpush1.msra.mxu0 0.0
  %1022 = vmatprep.subr.mxu0 0.0
  %1023 = vmatpush1.msra.mxu0 0.0
  %1024 = vmatprep.subr.mxu0 0.0
  %1025 = vmatpush1.msra.mxu0 0.0
  %1026 = vmatprep.subr.mxu0 0.0
  %1027 = vmatpush1.msra.mxu0 0.0
  %1028 = vmatprep.subr.mxu0 0.0
  %1029 = vmatpush1.msra.mxu0 0.0
  %1030 = vmatprep.subr.mxu0 0.0
  %1031 = vmatpush1.msra.mxu0 0.0
  %1032 = vmatprep.subr.mxu0 0.0
  %1033 = vmatpush1.msra.mxu0 0.0
  %1034 = vmatprep.subr.mxu0 0.0
  %1035 = vmatpush1.msra.mxu0 0.0
  %1036 = vmatprep.subr.mxu0 0.0
  %1037 = vmatpush1.msra.mxu0 0.0
  %1038 = vmatprep.subr.mxu0 0.0
  %1039 = vmatpush1.msra.mxu0 0.0
  %1040 = vmatprep.subr.mxu0 0.0
  %1041 = vmatpush1.msra.mxu0 0.0
  %1042 = vmatprep.subr.mxu0 0.0
  %1043 = vmatpush1.msra.mxu0 0.0
  %1044 = vmatprep.mubr.f32.mxu0 0.0
  %1045 = vmatmul.mubr.f32.gmra.mrb[0].mxu0 %v868
  %v1046 = vpop.f32.mrb[0].mxu0
  %v1047 = vadd.f32 %v849, %v1046
  %v1048 = vpop.f32.mrb[0].mxu0
  %v1049 = vadd.f32 %v849, %v1048
  %1050 = vmatprep.mubr.f32.mxu0 0.0
  %1051 = vmatmul.mubr.f32.gmra.mrb[0].mxu0 %v871
  %v1052 = vpop.f32.mrb[0].mxu0
  %v1053 = vadd.f32 %v854, %v1052
  %v1054 = vpop.f32.mrb[0].mxu0
  %v1055 = vadd.f32 %v854, %v1054
  %1056 = vmatprep.mubr.f32.mxu0 0.0
  %1057 = vmatmul.mubr.f32.gmra.mrb[0].mxu0 %v874
  %v1058 = vpop.f32.mrb[0].mxu0
  %v1059 = vadd.f32 %v859, %v1058
  %v1060 = vpop.f32.mrb[0].mxu0
  %v1061 = vadd.f32 %v859, %v1060
  %1062 = vmatprep.mubr.f32.mxu0 0.0
  %1063 = vmatmul.mubr.f32.gmra.mrb[0].mxu0 %v877
  %v1064 = vpop.f32.mrb[0].mxu0
  %v1065 = vadd.f32 %v864, %v1064
  %v1066 = vpop.f32.mrb[0].mxu0
  %v1067 = vadd.f32 %v864, %v1066
  %1068 = vdwg.mxu0
  %v1069 = vmax.f32 %v958, 0.0
  %v1070 = vmax.f32 %v960, 0.0
  %v1071 = vmax.f32 %v1047, 0.0
  %v1072 = vmax.f32 %v1049, 0.0
  %v1073 = vmax.f32 %v964, 0.0
  %v1074 = vmax.f32 %v966, 0.0
  %v1075 = vmax.f32 %v1053, 0.0
  %v1076 = vmax.f32 %v1055, 0.0
  %v1077 = vmax.f32 %v970, 0.0
  %v1078 = vmax.f32 %v972, 0.0
  %v1079 = vmax.f32 %v1059, 0.0
  %v1080 = vmax.f32 %v1061, 0.0
  %v1081 = vmax.f32 %v976, 0.0
  %v1082 = vmax.f32 %v978, 0.0
  %v1083 = vmax.f32 %v1065, 0.0
  %v1084 = vmax.f32 %v1067, 0.0
  %1085 = vrot.lane.b32.xlu0 %v1069, 9
  %v1086 = vpop.permute.xlu0 %1085
  %1087 = vrot.lane.b32.xlu0 %v1073, 9
  %v1088 = vpop.permute.xlu0 %1087
  %1089 = vrot.lane.b32.xlu0 %v1077, 9
  %v1090 = vpop.permute.xlu0 %1089
  %1091 = vrot.lane.b32.xlu0 %v1081, 9
  %v1092 = vpop.permute.xlu0 %1091
  %1093 = vrot.lane.b32.xlu0 %v1070, 9
  %v1094 = vpop.permute.xlu0 %1093
  %1095 = vrot.lane.b32.xlu0 %v1074, 9
  %v1096 = vpop.permute.xlu0 %1095
  %1097 = vrot.lane.b32.xlu0 %v1078, 9
  %v1098 = vpop.permute.xlu0 %1097
  %1099 = vrot.lane.b32.xlu0 %v1082, 9
  %v1100 = vpop.permute.xlu0 %1099
  %1101 = vrot.lane.b32.xlu0 %v1071, 9
  %v1102 = vpop.permute.xlu0 %1101
  %1103 = vrot.lane.b32.xlu0 %v1075, 9
  %v1104 = vpop.permute.xlu0 %1103
  %1105 = vrot.lane.b32.xlu0 %v1079, 9
  %v1106 = vpop.permute.xlu0 %1105
  %1107 = vrot.lane.b32.xlu0 %v1083, 9
  %v1108 = vpop.permute.xlu0 %1107
  %1109 = vrot.lane.b32.xlu0 %v1072, 9
  %v1110 = vpop.permute.xlu0 %1109
  %1111 = vrot.lane.b32.xlu0 %v1076, 9
  %v1112 = vpop.permute.xlu0 %1111
  %1113 = vrot.lane.b32.xlu0 %v1080, 9
  %v1114 = vpop.permute.xlu0 %1113
  %1115 = vrot.lane.b32.xlu0 %v1084, 9
  %v1116 = vpop.permute.xlu0 %1115
  %v1117 = vsel %vm167, %v1102, %v1110
  %v1118 = vsel %vm167, %v1104, %v1112
  %v1119 = vsel %vm167, %v1106, %v1114
  %v1120 = vsel %vm167, %v1108, %v1116
  %v1121 = vsel %vm167, %v1094, %v1102
  %v1122 = vsel %vm167, %v1096, %v1104
  %v1123 = vsel %vm167, %v1098, %v1106
  %v1124 = vsel %vm167, %v1100, %v1108
  %v1125 = vsel %vm167, %v1086, %v1094
  %v1126 = vsel %vm167, %v1088, %v1096
  %v1127 = vsel %vm167, %v1090, %v1098
  %v1128 = vsel %vm167, %v1092, %v1100
  %v1129 = vsel %vm167, %v1110, %v1086
  %v1130 = vsel %vm167, %v1112, %v1088
  %v1131 = vsel %vm167, %v1114, %v1090
  %v1132 = vsel %vm167, %v1116, %v1092
  %v1133 = vld [vmem:[%s17] sm:$0xff]
  %v1134 = vld [vmem:[%s17 + $0x8] sm:$0xff]
  %v1135 = vld [vmem:[%s17 + $0x10] sm:$0xff]
  %v1136 = vld [vmem:[%s17 + $0x18] sm:$0xff]
  %v1137 = vmul.f32 %v1129, %v176
  %v1138 = vmul.f32 %v1125, %v180
  %v1139 = vmul.f32 %v1121, %v184
  %v1140 = vmul.f32 %v1117, %v188
  %v1141 = vmul.f32 %v1130, %v176
  %v1142 = vmul.f32 %v1126, %v180
  %v1143 = vmul.f32 %v1122, %v184
  %v1144 = vmul.f32 %v1118, %v188
  %v1145 = vmul.f32 %v1131, %v176
  %v1146 = vmul.f32 %v1127, %v180
  %v1147 = vmul.f32 %v1123, %v184
  %v1148 = vmul.f32 %v1119, %v188
  %v1149 = vmul.f32 %v1132, %v176
  %v1150 = vmul.f32 %v1128, %v180
  %v1151 = vmul.f32 %v1124, %v184
  %v1152 = vmul.f32 %v1120, %v188
  %1153 = vrot.lane.b32.xlu0 %v1069, 8
  %v1154 = vpop.permute.xlu0 %1153
  %1155 = vrot.lane.b32.xlu0 %v1073, 8
  %v1156 = vpop.permute.xlu0 %1155
  %1157 = vrot.lane.b32.xlu0 %v1077, 8
  %v1158 = vpop.permute.xlu0 %1157
  %1159 = vrot.lane.b32.xlu0 %v1081, 8
  %v1160 = vpop.permute.xlu0 %1159
  %1161 = vrot.lane.b32.xlu0 %v1070, 8
  %v1162 = vpop.permute.xlu0 %1161
  %1163 = vrot.lane.b32.xlu0 %v1074, 8
  %v1164 = vpop.permute.xlu0 %1163
  %1165 = vrot.lane.b32.xlu0 %v1078, 8
  %v1166 = vpop.permute.xlu0 %1165
  %1167 = vrot.lane.b32.xlu0 %v1082, 8
  %v1168 = vpop.permute.xlu0 %1167
  %1169 = vrot.lane.b32.xlu0 %v1071, 8
  %v1170 = vpop.permute.xlu0 %1169
  %1171 = vrot.lane.b32.xlu0 %v1075, 8
  %v1172 = vpop.permute.xlu0 %1171
  %1173 = vrot.lane.b32.xlu0 %v1079, 8
  %v1174 = vpop.permute.xlu0 %1173
  %1175 = vrot.lane.b32.xlu0 %v1083, 8
  %v1176 = vpop.permute.xlu0 %1175
  %1177 = vrot.lane.b32.xlu0 %v1072, 8
  %v1178 = vpop.permute.xlu0 %1177
  %1179 = vrot.lane.b32.xlu0 %v1076, 8
  %v1180 = vpop.permute.xlu0 %1179
  %1181 = vrot.lane.b32.xlu0 %v1080, 8
  %v1182 = vpop.permute.xlu0 %1181
  %1183 = vrot.lane.b32.xlu0 %v1084, 8
  %v1184 = vpop.permute.xlu0 %1183
  %v1185 = vsel %vm208, %v1170, %v1178
  %v1186 = vsel %vm208, %v1172, %v1180
  %v1187 = vsel %vm208, %v1174, %v1182
  %v1188 = vsel %vm208, %v1176, %v1184
  %v1189 = vsel %vm208, %v1162, %v1170
  %v1190 = vsel %vm208, %v1164, %v1172
  %v1191 = vsel %vm208, %v1166, %v1174
  %v1192 = vsel %vm208, %v1168, %v1176
  %v1193 = vsel %vm208, %v1154, %v1162
  %v1194 = vsel %vm208, %v1156, %v1164
  %v1195 = vsel %vm208, %v1158, %v1166
  %v1196 = vsel %vm208, %v1160, %v1168
  %v1197 = vsel %vm208, %v1178, %v1154
  %v1198 = vsel %vm208, %v1180, %v1156
  %v1199 = vsel %vm208, %v1182, %v1158
  %v1200 = vsel %vm208, %v1184, %v1160
  %s1201 = scalar_lea.vmem %s17, 32
  %v1202 = vld [vmem:[%s1201] sm:$0xff]
  %v1203 = vld [vmem:[%s1201 + $0x8] sm:$0xff]
  %v1204 = vld [vmem:[%s1201 + $0x10] sm:$0xff]
  %v1205 = vld [vmem:[%s1201 + $0x18] sm:$0xff]
  %v1206 = vmul.f32 %v1197, %v217
  %v1207 = vmul.f32 %v1193, %v221
  %v1208 = vmul.f32 %v1189, %v225
  %v1209 = vmul.f32 %v1185, %v229
  %v1210 = vmul.f32 %v1198, %v217
  %v1211 = vmul.f32 %v1194, %v221
  %v1212 = vmul.f32 %v1190, %v225
  %v1213 = vmul.f32 %v1186, %v229
  %v1214 = vmul.f32 %v1199, %v217
  %v1215 = vmul.f32 %v1195, %v221
  %v1216 = vmul.f32 %v1191, %v225
  %v1217 = vmul.f32 %v1187, %v229
  %v1218 = vmul.f32 %v1200, %v217
  %v1219 = vmul.f32 %v1196, %v221
  %v1220 = vmul.f32 %v1192, %v225
  %v1221 = vmul.f32 %v1188, %v229
  %vm1222 = vcmask 261120
  %v1224 = vsel %vm1222, %v1202, 0
  %v1227 = vsel %vm1222, %v1203, 0
  %v1230 = vsel %vm1222, %v1204, 0
  %v1233 = vsel %vm1222, %v1205, 0
  %1235 = vmatprep.subr.mxu0 %v1207
  %1236 = vmatpush1.msra.mxu0 %v1206
  %1237 = vmatprep.subr.mxu0 %v1211
  %1238 = vmatpush1.msra.mxu0 %v1210
  %1239 = vmatprep.subr.mxu0 %v1215
  %1240 = vmatpush1.msra.mxu0 %v1214
  %1241 = vmatprep.subr.mxu0 %v1219
  %1242 = vmatpush1.msra.mxu0 %v1218
  %1243 = vmatprep.subr.mxu0 0.0
  %1244 = vmatpush1.msra.mxu0 0.0
  %1245 = vmatprep.subr.mxu0 0.0
  %1246 = vmatpush1.msra.mxu0 0.0
  %1247 = vmatprep.subr.mxu0 0.0
  %1248 = vmatpush1.msra.mxu0 0.0
  %1249 = vmatprep.subr.mxu0 0.0
  %1250 = vmatpush1.msra.mxu0 0.0
  %1251 = vmatprep.subr.mxu0 0.0
  %1252 = vmatpush1.msra.mxu0 0.0
  %1253 = vmatprep.subr.mxu0 0.0
  %1254 = vmatpush1.msra.mxu0 0.0
  %1255 = vmatprep.subr.mxu0 0.0
  %1256 = vmatpush1.msra.mxu0 0.0
  %1257 = vmatprep.subr.mxu0 0.0
  %1258 = vmatpush1.msra.mxu0 0.0
  %1259 = vmatprep.subr.mxu0 0.0
  %1260 = vmatpush1.msra.mxu0 0.0
  %1261 = vmatprep.subr.mxu0 0.0
  %1262 = vmatpush1.msra.mxu0 0.0
  %1263 = vmatprep.subr.mxu0 0.0
  %1264 = vmatpush1.msra.mxu0 0.0
  %1265 = vmatprep.subr.mxu0 0.0
  %1266 = vmatpush1.msra.mxu0 0.0
  %1267 = vmatprep.subr.mxu0 0.0
  %1268 = vmatpush1.msra.mxu0 0.0
  %1269 = vmatprep.subr.mxu0 0.0
  %1270 = vmatpush1.msra.mxu0 0.0
  %1271 = vmatprep.subr.mxu0 0.0
  %1272 = vmatpush1.msra.mxu0 0.0
  %1273 = vmatprep.subr.mxu0 0.0
  %1274 = vmatpush1.msra.mxu0 0.0
  %1275 = vmatprep.subr.mxu0 0.0
  %1276 = vmatpush1.msra.mxu0 0.0
  %1277 = vmatprep.subr.mxu0 0.0
  %1278 = vmatpush1.msra.mxu0 0.0
  %1279 = vmatprep.subr.mxu0 0.0
  %1280 = vmatpush1.msra.mxu0 0.0
  %1281 = vmatprep.subr.mxu0 0.0
  %1282 = vmatpush1.msra.mxu0 0.0
  %1283 = vmatprep.subr.mxu0 0.0
  %1284 = vmatpush1.msra.mxu0 0.0
  %1285 = vmatprep.subr.mxu0 0.0
  %1286 = vmatpush1.msra.mxu0 0.0
  %1287 = vmatprep.subr.mxu0 0.0
  %1288 = vmatpush1.msra.mxu0 0.0
  %1289 = vmatprep.subr.mxu0 0.0
  %1290 = vmatpush1.msra.mxu0 0.0
  %1291 = vmatprep.subr.mxu0 0.0
  %1292 = vmatpush1.msra.mxu0 0.0
  %1293 = vmatprep.subr.mxu0 0.0
  %1294 = vmatpush1.msra.mxu0 0.0
  %1295 = vmatprep.subr.mxu0 0.0
  %1296 = vmatpush1.msra.mxu0 0.0
  %1297 = vmatprep.subr.mxu0 0.0
  %1298 = vmatpush1.msra.mxu0 0.0
  %1299 = vmatprep.mubr.f32.mxu0 0.0
  %1300 = vmatmul.mubr.f32.gmra.mrb[0].mxu0 %v1224
  %v1301 = vpop.f32.mrb[0].mxu0
  %v1302 = vadd.f32 0.0, %v1301
  %v1303 = vpop.f32.mrb[0].mxu0
  %v1304 = vadd.f32 0.0, %v1303
  %1305 = vmatprep.mubr.f32.mxu0 0.0
  %1306 = vmatmul.mubr.f32.gmra.mrb[0].mxu0 %v1227
  %v1307 = vpop.f32.mrb[0].mxu0
  %v1308 = vadd.f32 0.0, %v1307
  %v1309 = vpop.f32.mrb[0].mxu0
  %v1310 = vadd.f32 0.0, %v1309
  %1311 = vmatprep.mubr.f32.mxu0 0.0
  %1312 = vmatmul.mubr.f32.gmra.mrb[0].mxu0 %v1230
  %v1313 = vpop.f32.mrb[0].mxu0
  %v1314 = vadd.f32 0.0, %v1313
  %v1315 = vpop.f32.mrb[0].mxu0
  %v1316 = vadd.f32 0.0, %v1315
  %1317 = vmatprep.mubr.f32.mxu0 0.0
  %1318 = vmatmul.mubr.f32.gmra.mrb[0].mxu0 %v1233
  %v1319 = vpop.f32.mrb[0].mxu0
  %v1320 = vadd.f32 0.0, %v1319
  %v1321 = vpop.f32.mrb[0].mxu0
  %v1322 = vadd.f32 0.0, %v1321
  %1323 = vdwg.mxu0
  %1324 = vmatprep.subr.mxu0 %v1209
  %1325 = vmatpush1.msra.mxu0 %v1208
  %1326 = vmatprep.subr.mxu0 %v1213
  %1327 = vmatpush1.msra.mxu0 %v1212
  %1328 = vmatprep.subr.mxu0 %v1217
  %1329 = vmatpush1.msra.mxu0 %v1216
  %1330 = vmatprep.subr.mxu0 %v1221
  %1331 = vmatpush1.msra.mxu0 %v1220
  %1332 = vmatprep.subr.mxu0 0.0
  %1333 = vmatpush1.msra.mxu0 0.0
  %1334 = vmatprep.subr.mxu0 0.0
  %1335 = vmatpush1.msra.mxu0 0.0
  %1336 = vmatprep.subr.mxu0 0.0
  %1337 = vmatpush1.msra.mxu0 0.0
  %1338 = vmatprep.subr.mxu0 0.0
  %1339 = vmatpush1.msra.mxu0 0.0
  %1340 = vmatprep.subr.mxu0 0.0
  %1341 = vmatpush1.msra.mxu0 0.0
  %1342 = vmatprep.subr.mxu0 0.0
  %1343 = vmatpush1.msra.mxu0 0.0
  %1344 = vmatprep.subr.mxu0 0.0
  %1345 = vmatpush1.msra.mxu0 0.0
  %1346 = vmatprep.subr.mxu0 0.0
  %1347 = vmatpush1.msra.mxu0 0.0
  %1348 = vmatprep.subr.mxu0 0.0
  %1349 = vmatpush1.msra.mxu0 0.0
  %1350 = vmatprep.subr.mxu0 0.0
  %1351 = vmatpush1.msra.mxu0 0.0
  %1352 = vmatprep.subr.mxu0 0.0
  %1353 = vmatpush1.msra.mxu0 0.0
  %1354 = vmatprep.subr.mxu0 0.0
  %1355 = vmatpush1.msra.mxu0 0.0
  %1356 = vmatprep.subr.mxu0 0.0
  %1357 = vmatpush1.msra.mxu0 0.0
  %1358 = vmatprep.subr.mxu0 0.0
  %1359 = vmatpush1.msra.mxu0 0.0
  %1360 = vmatprep.subr.mxu0 0.0
  %1361 = vmatpush1.msra.mxu0 0.0
  %1362 = vmatprep.subr.mxu0 0.0
  %1363 = vmatpush1.msra.mxu0 0.0
  %1364 = vmatprep.subr.mxu0 0.0
  %1365 = vmatpush1.msra.mxu0 0.0
  %1366 = vmatprep.subr.mxu0 0.0
  %1367 = vmatpush1.msra.mxu0 0.0
  %1368 = vmatprep.subr.mxu0 0.0
  %1369 = vmatpush1.msra.mxu0 0.0
  %1370 = vmatprep.subr.mxu0 0.0
  %1371 = vmatpush1.msra.mxu0 0.0
  %1372 = vmatprep.subr.mxu0 0.0
  %1373 = vmatpush1.msra.mxu0 0.0
  %1374 = vmatprep.subr.mxu0 0.0
  %1375 = vmatpush1.msra.mxu0 0.0
  %1376 = vmatprep.subr.mxu0 0.0
  %1377 = vmatpush1.msra.mxu0 0.0
  %1378 = vmatprep.subr.mxu0 0.0
  %1379 = vmatpush1.msra.mxu0 0.0
  %1380 = vmatprep.subr.mxu0 0.0
  %1381 = vmatpush1.msra.mxu0 0.0
  %1382 = vmatprep.subr.mxu0 0.0
  %1383 = vmatpush1.msra.mxu0 0.0
  %1384 = vmatprep.subr.mxu0 0.0
  %1385 = vmatpush1.msra.mxu0 0.0
  %1386 = vmatprep.subr.mxu0 0.0
  %1387 = vmatpush1.msra.mxu0 0.0
  %1388 = vmatprep.mubr.f32.mxu0 0.0
  %1389 = vmatmul.mubr.f32.gmra.mrb[0].mxu0 %v1224
  %v1390 = vpop.f32.mrb[0].mxu0
  %v1391 = vadd.f32 0.0, %v1390
  %v1392 = vpop.f32.mrb[0].mxu0
  %v1393 = vadd.f32 0.0, %v1392
  %1394 = vmatprep.mubr.f32.mxu0 0.0
  %1395 = vmatmul.mubr.f32.gmra.mrb[0].mxu0 %v1227
  %v1396 = vpop.f32.mrb[0].mxu0
  %v1397 = vadd.f32 0.0, %v1396
  %v1398 = vpop.f32.mrb[0].mxu0
  %v1399 = vadd.f32 0.0, %v1398
  %1400 = vmatprep.mubr.f32.mxu0 0.0
  %1401 = vmatmul.mubr.f32.gmra.mrb[0].mxu0 %v1230
  %v1402 = vpop.f32.mrb[0].mxu0
  %v1403 = vadd.f32 0.0, %v1402
  %v1404 = vpop.f32.mrb[0].mxu0
  %v1405 = vadd.f32 0.0, %v1404
  %1406 = vmatprep.mubr.f32.mxu0 0.0
  %1407 = vmatmul.mubr.f32.gmra.mrb[0].mxu0 %v1233
  %v1408 = vpop.f32.mrb[0].mxu0
  %v1409 = vadd.f32 0.0, %v1408
  %v1410 = vpop.f32.mrb[0].mxu0
  %v1411 = vadd.f32 0.0, %v1410
  %1412 = vdwg.mxu0
  %v1414 = vsel %vm1222, %v1133, 0
  %v1417 = vsel %vm1222, %v1134, 0
  %v1420 = vsel %vm1222, %v1135, 0
  %v1423 = vsel %vm1222, %v1136, 0
  %1425 = vmatprep.subr.mxu0 %v1138
  %1426 = vmatpush1.msra.mxu0 %v1137
  %1427 = vmatprep.subr.mxu0 %v1142
  %1428 = vmatpush1.msra.mxu0 %v1141
  %1429 = vmatprep.subr.mxu0 %v1146
  %1430 = vmatpush1.msra.mxu0 %v1145
  %1431 = vmatprep.subr.mxu0 %v1150
  %1432 = vmatpush1.msra.mxu0 %v1149
  %1433 = vmatprep.subr.mxu0 0.0
  %1434 = vmatpush1.msra.mxu0 0.0
  %1435 = vmatprep.subr.mxu0 0.0
  %1436 = vmatpush1.msra.mxu0 0.0
  %1437 = vmatprep.subr.mxu0 0.0
  %1438 = vmatpush1.msra.mxu0 0.0
  %1439 = vmatprep.subr.mxu0 0.0
  %1440 = vmatpush1.msra.mxu0 0.0
  %1441 = vmatprep.subr.mxu0 0.0
  %1442 = vmatpush1.msra.mxu0 0.0
  %1443 = vmatprep.subr.mxu0 0.0
  %1444 = vmatpush1.msra.mxu0 0.0
  %1445 = vmatprep.subr.mxu0 0.0
  %1446 = vmatpush1.msra.mxu0 0.0
  %1447 = vmatprep.subr.mxu0 0.0
  %1448 = vmatpush1.msra.mxu0 0.0
  %1449 = vmatprep.subr.mxu0 0.0
  %1450 = vmatpush1.msra.mxu0 0.0
  %1451 = vmatprep.subr.mxu0 0.0
  %1452 = vmatpush1.msra.mxu0 0.0
  %1453 = vmatprep.subr.mxu0 0.0
  %1454 = vmatpush1.msra.mxu0 0.0
  %1455 = vmatprep.subr.mxu0 0.0
  %1456 = vmatpush1.msra.mxu0 0.0
  %1457 = vmatprep.subr.mxu0 0.0
  %1458 = vmatpush1.msra.mxu0 0.0
  %1459 = vmatprep.subr.mxu0 0.0
  %1460 = vmatpush1.msra.mxu0 0.0
  %1461 = vmatprep.subr.mxu0 0.0
  %1462 = vmatpush1.msra.mxu0 0.0
  %1463 = vmatprep.subr.mxu0 0.0
  %1464 = vmatpush1.msra.mxu0 0.0
  %1465 = vmatprep.subr.mxu0 0.0
  %1466 = vmatpush1.msra.mxu0 0.0
  %1467 = vmatprep.subr.mxu0 0.0
  %1468 = vmatpush1.msra.mxu0 0.0
  %1469 = vmatprep.subr.mxu0 0.0
  %1470 = vmatpush1.msra.mxu0 0.0
  %1471 = vmatprep.subr.mxu0 0.0
  %1472 = vmatpush1.msra.mxu0 0.0
  %1473 = vmatprep.subr.mxu0 0.0
  %1474 = vmatpush1.msra.mxu0 0.0
  %1475 = vmatprep.subr.mxu0 0.0
  %1476 = vmatpush1.msra.mxu0 0.0
  %1477 = vmatprep.subr.mxu0 0.0
  %1478 = vmatpush1.msra.mxu0 0.0
  %1479 = vmatprep.subr.mxu0 0.0
  %1480 = vmatpush1.msra.mxu0 0.0
  %1481 = vmatprep.subr.mxu0 0.0
  %1482 = vmatpush1.msra.mxu0 0.0
  %1483 = vmatprep.subr.mxu0 0.0
  %1484 = vmatpush1.msra.mxu0 0.0
  %1485 = vmatprep.subr.mxu0 0.0
  %1486 = vmatpush1.msra.mxu0 0.0
  %1487 = vmatprep.subr.mxu0 0.0
  %1488 = vmatpush1.msra.mxu0 0.0
  %1489 = vmatprep.mubr.f32.mxu0 0.0
  %1490 = vmatmul.mubr.f32.gmra.mrb[0].mxu0 %v1414
  %v1491 = vpop.f32.mrb[0].mxu0
  %v1492 = vadd.f32 %v1302, %v1491
  %v1493 = vpop.f32.mrb[0].mxu0
  %v1494 = vadd.f32 %v1304, %v1493
  %1495 = vmatprep.mubr.f32.mxu0 0.0
  %1496 = vmatmul.mubr.f32.gmra.mrb[0].mxu0 %v1417
  %v1497 = vpop.f32.mrb[0].mxu0
  %v1498 = vadd.f32 %v1308, %v1497
  %v1499 = vpop.f32.mrb[0].mxu0
  %v1500 = vadd.f32 %v1310, %v1499
  %1501 = vmatprep.mubr.f32.mxu0 0.0
  %1502 = vmatmul.mubr.f32.gmra.mrb[0].mxu0 %v1420
  %v1503 = vpop.f32.mrb[0].mxu0
  %v1504 = vadd.f32 %v1314, %v1503
  %v1505 = vpop.f32.mrb[0].mxu0
  %v1506 = vadd.f32 %v1316, %v1505
  %1507 = vmatprep.mubr.f32.mxu0 0.0
  %1508 = vmatmul.mubr.f32.gmra.mrb[0].mxu0 %v1423
  %v1509 = vpop.f32.mrb[0].mxu0
  %v1510 = vadd.f32 %v1320, %v1509
  %v1511 = vpop.f32.mrb[0].mxu0
  %v1512 = vadd.f32 %v1322, %v1511
  %1513 = vdwg.mxu0
  %1514 = vmatprep.subr.mxu0 %v1140
  %1515 = vmatpush1.msra.mxu0 %v1139
  %1516 = vmatprep.subr.mxu0 %v1144
  %1517 = vmatpush1.msra.mxu0 %v1143
  %1518 = vmatprep.subr.mxu0 %v1148
  %1519 = vmatpush1.msra.mxu0 %v1147
  %1520 = vmatprep.subr.mxu0 %v1152
  %1521 = vmatpush1.msra.mxu0 %v1151
  %1522 = vmatprep.subr.mxu0 0.0
  %1523 = vmatpush1.msra.mxu0 0.0
  %1524 = vmatprep.subr.mxu0 0.0
  %1525 = vmatpush1.msra.mxu0 0.0
  %1526 = vmatprep.subr.mxu0 0.0
  %1527 = vmatpush1.msra.mxu0 0.0
  %1528 = vmatprep.subr.mxu0 0.0
  %1529 = vmatpush1.msra.mxu0 0.0
  %1530 = vmatprep.subr.mxu0 0.0
  %1531 = vmatpush1.msra.mxu0 0.0
  %1532 = vmatprep.subr.mxu0 0.0
  %1533 = vmatpush1.msra.mxu0 0.0
  %1534 = vmatprep.subr.mxu0 0.0
  %1535 = vmatpush1.msra.mxu0 0.0
  %1536 = vmatprep.subr.mxu0 0.0
  %1537 = vmatpush1.msra.mxu0 0.0
  %1538 = vmatprep.subr.mxu0 0.0
  %1539 = vmatpush1.msra.mxu0 0.0
  %1540 = vmatprep.subr.mxu0 0.0
  %1541 = vmatpush1.msra.mxu0 0.0
  %1542 = vmatprep.subr.mxu0 0.0
  %1543 = vmatpush1.msra.mxu0 0.0
  %1544 = vmatprep.subr.mxu0 0.0
  %1545 = vmatpush1.msra.mxu0 0.0
  %1546 = vmatprep.subr.mxu0 0.0
  %1547 = vmatpush1.msra.mxu0 0.0
  %1548 = vmatprep.subr.mxu0 0.0
  %1549 = vmatpush1.msra.mxu0 0.0
  %1550 = vmatprep.subr.mxu0 0.0
  %1551 = vmatpush1.msra.mxu0 0.0
  %1552 = vmatprep.subr.mxu0 0.0
  %1553 = vmatpush1.msra.mxu0 0.0
  %1554 = vmatprep.subr.mxu0 0.0
  %1555 = vmatpush1.msra.mxu0 0.0
  %1556 = vmatprep.subr.mxu0 0.0
  %1557 = vmatpush1.msra.mxu0 0.0
  %1558 = vmatprep.subr.mxu0 0.0
  %1559 = vmatpush1.msra.mxu0 0.0
  %1560 = vmatprep.subr.mxu0 0.0
  %1561 = vmatpush1.msra.mxu0 0.0
  %1562 = vmatprep.subr.mxu0 0.0
  %1563 = vmatpush1.msra.mxu0 0.0
  %1564 = vmatprep.subr.mxu0 0.0
  %1565 = vmatpush1.msra.mxu0 0.0
  %1566 = vmatprep.subr.mxu0 0.0
  %1567 = vmatpush1.msra.mxu0 0.0
  %1568 = vmatprep.subr.mxu0 0.0
  %1569 = vmatpush1.msra.mxu0 0.0
  %1570 = vmatprep.subr.mxu0 0.0
  %1571 = vmatpush1.msra.mxu0 0.0
  %1572 = vmatprep.subr.mxu0 0.0
  %1573 = vmatpush1.msra.mxu0 0.0
  %1574 = vmatprep.subr.mxu0 0.0
  %1575 = vmatpush1.msra.mxu0 0.0
  %1576 = vmatprep.subr.mxu0 0.0
  %1577 = vmatpush1.msra.mxu0 0.0
  %1578 = vmatprep.mubr.f32.mxu0 0.0
  %1579 = vmatmul.mubr.f32.gmra.mrb[0].mxu0 %v1414
  %v1580 = vpop.f32.mrb[0].mxu0
  %v1581 = vadd.f32 %v1391, %v1580
  %v1582 = vpop.f32.mrb[0].mxu0
  %v1583 = vadd.f32 %v1393, %v1582
  %1584 = vmatprep.mubr.f32.mxu0 0.0
  %1585 = vmatmul.mubr.f32.gmra.mrb[0].mxu0 %v1417
  %v1586 = vpop.f32.mrb[0].mxu0
  %v1587 = vadd.f32 %v1397, %v1586
  %v1588 = vpop.f32.mrb[0].mxu0
  %v1589 = vadd.f32 %v1399, %v1588
  %1590 = vmatprep.mubr.f32.mxu0 0.0
  %1591 = vmatmul.mubr.f32.gmra.mrb[0].mxu0 %v1420
  %v1592 = vpop.f32.mrb[0].mxu0
  %v1593 = vadd.f32 %v1403, %v1592
  %v1594 = vpop.f32.mrb[0].mxu0
  %v1595 = vadd.f32 %v1405, %v1594
  %1596 = vmatprep.mubr.f32.mxu0 0.0
  %1597 = vmatmul.mubr.f32.gmra.mrb[0].mxu0 %v1423
  %v1598 = vpop.f32.mrb[0].mxu0
  %v1599 = vadd.f32 %v1409, %v1598
  %v1600 = vpop.f32.mrb[0].mxu0
  %v1601 = vadd.f32 %v1411, %v1600
  %1602 = vdwg.mxu0
  %1603 = vrot.lane.b32.xlu0 %v1069, 7
  %v1604 = vpop.permute.xlu0 %1603
  %1605 = vrot.lane.b32.xlu0 %v1073, 7
  %v1606 = vpop.permute.xlu0 %1605
  %1607 = vrot.lane.b32.xlu0 %v1077, 7
  %v1608 = vpop.permute.xlu0 %1607
  %1609 = vrot.lane.b32.xlu0 %v1081, 7
  %v1610 = vpop.permute.xlu0 %1609
  %1611 = vrot.lane.b32.xlu0 %v1070, 7
  %v1612 = vpop.permute.xlu0 %1611
  %1613 = vrot.lane.b32.xlu0 %v1074, 7
  %v1614 = vpop.permute.xlu0 %1613
  %1615 = vrot.lane.b32.xlu0 %v1078, 7
  %v1616 = vpop.permute.xlu0 %1615
  %1617 = vrot.lane.b32.xlu0 %v1082, 7
  %v1618 = vpop.permute.xlu0 %1617
  %1619 = vrot.lane.b32.xlu0 %v1071, 7
  %v1620 = vpop.permute.xlu0 %1619
  %1621 = vrot.lane.b32.xlu0 %v1075, 7
  %v1622 = vpop.permute.xlu0 %1621
  %1623 = vrot.lane.b32.xlu0 %v1079, 7
  %v1624 = vpop.permute.xlu0 %1623
  %1625 = vrot.lane.b32.xlu0 %v1083, 7
  %v1626 = vpop.permute.xlu0 %1625
  %1627 = vrot.lane.b32.xlu0 %v1072, 7
  %v1628 = vpop.permute.xlu0 %1627
  %1629 = vrot.lane.b32.xlu0 %v1076, 7
  %v1630 = vpop.permute.xlu0 %1629
  %1631 = vrot.lane.b32.xlu0 %v1080, 7
  %v1632 = vpop.permute.xlu0 %1631
  %1633 = vrot.lane.b32.xlu0 %v1084, 7
  %v1634 = vpop.permute.xlu0 %1633
  %v1635 = vsel %vm249, %v1620, %v1628
  %v1636 = vsel %vm249, %v1622, %v1630
  %v1637 = vsel %vm249, %v1624, %v1632
  %v1638 = vsel %vm249, %v1626, %v1634
  %v1639 = vsel %vm249, %v1612, %v1620
  %v1640 = vsel %vm249, %v1614, %v1622
  %v1641 = vsel %vm249, %v1616, %v1624
  %v1642 = vsel %vm249, %v1618, %v1626
  %v1643 = vsel %vm249, %v1604, %v1612
  %v1644 = vsel %vm249, %v1606, %v1614
  %v1645 = vsel %vm249, %v1608, %v1616
  %v1646 = vsel %vm249, %v1610, %v1618
  %v1647 = vsel %vm249, %v1628, %v1604
  %v1648 = vsel %vm249, %v1630, %v1606
  %v1649 = vsel %vm249, %v1632, %v1608
  %v1650 = vsel %vm249, %v1634, %v1610
  %s1651 = scalar_lea.vmem %s17, 64
  %v1652 = vld [vmem:[%s1651] sm:$0xff]
  %v1653 = vld [vmem:[%s1651 + $0x8] sm:$0xff]
  %v1654 = vld [vmem:[%s1651 + $0x10] sm:$0xff]
  %v1655 = vld [vmem:[%s1651 + $0x18] sm:$0xff]
  %v1656 = vmul.f32 %v1647, %v258
  %v1657 = vmul.f32 %v1643, %v262
  %v1658 = vmul.f32 %v1639, %v266
  %v1659 = vmul.f32 %v1635, %v270
  %v1660 = vmul.f32 %v1648, %v258
  %v1661 = vmul.f32 %v1644, %v262
  %v1662 = vmul.f32 %v1640, %v266
  %v1663 = vmul.f32 %v1636, %v270
  %v1664 = vmul.f32 %v1649, %v258
  %v1665 = vmul.f32 %v1645, %v262
  %v1666 = vmul.f32 %v1641, %v266
  %v1667 = vmul.f32 %v1637, %v270
  %v1668 = vmul.f32 %v1650, %v258
  %v1669 = vmul.f32 %v1646, %v262
  %v1670 = vmul.f32 %v1642, %v266
  %v1671 = vmul.f32 %v1638, %v270
  %v1673 = vsel %vm1222, %v1652, 0
  %v1676 = vsel %vm1222, %v1653, 0
  %v1679 = vsel %vm1222, %v1654, 0
  %v1682 = vsel %vm1222, %v1655, 0
  %1684 = vmatprep.subr.mxu0 %v1657
  %1685 = vmatpush1.msra.mxu0 %v1656
  %1686 = vmatprep.subr.mxu0 %v1661
  %1687 = vmatpush1.msra.mxu0 %v1660
  %1688 = vmatprep.subr.mxu0 %v1665
  %1689 = vmatpush1.msra.mxu0 %v1664
  %1690 = vmatprep.subr.mxu0 %v1669
  %1691 = vmatpush1.msra.mxu0 %v1668
  %1692 = vmatprep.subr.mxu0 0.0
  %1693 = vmatpush1.msra.mxu0 0.0
  %1694 = vmatprep.subr.mxu0 0.0
  %1695 = vmatpush1.msra.mxu0 0.0
  %1696 = vmatprep.subr.mxu0 0.0
  %1697 = vmatpush1.msra.mxu0 0.0
  %1698 = vmatprep.subr.mxu0 0.0
  %1699 = vmatpush1.msra.mxu0 0.0
  %1700 = vmatprep.subr.mxu0 0.0
  %1701 = vmatpush1.msra.mxu0 0.0
  %1702 = vmatprep.subr.mxu0 0.0
  %1703 = vmatpush1.msra.mxu0 0.0
  %1704 = vmatprep.subr.mxu0 0.0
  %1705 = vmatpush1.msra.mxu0 0.0
  %1706 = vmatprep.subr.mxu0 0.0
  %1707 = vmatpush1.msra.mxu0 0.0
  %1708 = vmatprep.subr.mxu0 0.0
  %1709 = vmatpush1.msra.mxu0 0.0
  %1710 = vmatprep.subr.mxu0 0.0
  %1711 = vmatpush1.msra.mxu0 0.0
  %1712 = vmatprep.subr.mxu0 0.0
  %1713 = vmatpush1.msra.mxu0 0.0
  %1714 = vmatprep.subr.mxu0 0.0
  %1715 = vmatpush1.msra.mxu0 0.0
  %1716 = vmatprep.subr.mxu0 0.0
  %1717 = vmatpush1.msra.mxu0 0.0
  %1718 = vmatprep.subr.mxu0 0.0
  %1719 = vmatpush1.msra.mxu0 0.0
  %1720 = vmatprep.subr.mxu0 0.0
  %1721 = vmatpush1.msra.mxu0 0.0
  %1722 = vmatprep.subr.mxu0 0.0
  %1723 = vmatpush1.msra.mxu0 0.0
  %1724 = vmatprep.subr.mxu0 0.0
  %1725 = vmatpush1.msra.mxu0 0.0
  %1726 = vmatprep.subr.mxu0 0.0
  %1727 = vmatpush1.msra.mxu0 0.0
  %1728 = vmatprep.subr.mxu0 0.0
  %1729 = vmatpush1.msra.mxu0 0.0
  %1730 = vmatprep.subr.mxu0 0.0
  %1731 = vmatpush1.msra.mxu0 0.0
  %1732 = vmatprep.subr.mxu0 0.0
  %1733 = vmatpush1.msra.mxu0 0.0
  %1734 = vmatprep.subr.mxu0 0.0
  %1735 = vmatpush1.msra.mxu0 0.0
  %1736 = vmatprep.subr.mxu0 0.0
  %1737 = vmatpush1.msra.mxu0 0.0
  %1738 = vmatprep.subr.mxu0 0.0
  %1739 = vmatpush1.msra.mxu0 0.0
  %1740 = vmatprep.subr.mxu0 0.0
  %1741 = vmatpush1.msra.mxu0 0.0
  %1742 = vmatprep.subr.mxu0 0.0
  %1743 = vmatpush1.msra.mxu0 0.0
  %1744 = vmatprep.subr.mxu0 0.0
  %1745 = vmatpush1.msra.mxu0 0.0
  %1746 = vmatprep.subr.mxu0 0.0
  %1747 = vmatpush1.msra.mxu0 0.0
  %1748 = vmatprep.mubr.f32.mxu0 0.0
  %1749 = vmatmul.mubr.f32.gmra.mrb[0].mxu0 %v1673
  %v1750 = vpop.f32.mrb[0].mxu0
  %v1751 = vadd.f32 0.0, %v1750
  %v1752 = vpop.f32.mrb[0].mxu0
  %v1753 = vadd.f32 0.0, %v1752
  %1754 = vmatprep.mubr.f32.mxu0 0.0
  %1755 = vmatmul.mubr.f32.gmra.mrb[0].mxu0 %v1676
  %v1756 = vpop.f32.mrb[0].mxu0
  %v1757 = vadd.f32 0.0, %v1756
  %v1758 = vpop.f32.mrb[0].mxu0
  %v1759 = vadd.f32 0.0, %v1758
  %1760 = vmatprep.mubr.f32.mxu0 0.0
  %1761 = vmatmul.mubr.f32.gmra.mrb[0].mxu0 %v1679
  %v1762 = vpop.f32.mrb[0].mxu0
  %v1763 = vadd.f32 0.0, %v1762
  %v1764 = vpop.f32.mrb[0].mxu0
  %v1765 = vadd.f32 0.0, %v1764
  %1766 = vmatprep.mubr.f32.mxu0 0.0
  %1767 = vmatmul.mubr.f32.gmra.mrb[0].mxu0 %v1682
  %v1768 = vpop.f32.mrb[0].mxu0
  %v1769 = vadd.f32 0.0, %v1768
  %v1770 = vpop.f32.mrb[0].mxu0
  %v1771 = vadd.f32 0.0, %v1770
  %1772 = vdwg.mxu0
  %1773 = vmatprep.subr.mxu0 %v1659
  %1774 = vmatpush1.msra.mxu0 %v1658
  %1775 = vmatprep.subr.mxu0 %v1663
  %1776 = vmatpush1.msra.mxu0 %v1662
  %1777 = vmatprep.subr.mxu0 %v1667
  %1778 = vmatpush1.msra.mxu0 %v1666
  %1779 = vmatprep.subr.mxu0 %v1671
  %1780 = vmatpush1.msra.mxu0 %v1670
  %1781 = vmatprep.subr.mxu0 0.0
  %1782 = vmatpush1.msra.mxu0 0.0
  %1783 = vmatprep.subr.mxu0 0.0
  %1784 = vmatpush1.msra.mxu0 0.0
  %1785 = vmatprep.subr.mxu0 0.0
  %1786 = vmatpush1.msra.mxu0 0.0
  %1787 = vmatprep.subr.mxu0 0.0
  %1788 = vmatpush1.msra.mxu0 0.0
  %1789 = vmatprep.subr.mxu0 0.0
  %1790 = vmatpush1.msra.mxu0 0.0
  %1791 = vmatprep.subr.mxu0 0.0
  %1792 = vmatpush1.msra.mxu0 0.0
  %1793 = vmatprep.subr.mxu0 0.0
  %1794 = vmatpush1.msra.mxu0 0.0
  %1795 = vmatprep.subr.mxu0 0.0
  %1796 = vmatpush1.msra.mxu0 0.0
  %1797 = vmatprep.subr.mxu0 0.0
  %1798 = vmatpush1.msra.mxu0 0.0
  %1799 = vmatprep.subr.mxu0 0.0
  %1800 = vmatpush1.msra.mxu0 0.0
  %1801 = vmatprep.subr.mxu0 0.0
  %1802 = vmatpush1.msra.mxu0 0.0
  %1803 = vmatprep.subr.mxu0 0.0
  %1804 = vmatpush1.msra.mxu0 0.0
  %1805 = vmatprep.subr.mxu0 0.0
  %1806 = vmatpush1.msra.mxu0 0.0
  %1807 = vmatprep.subr.mxu0 0.0
  %1808 = vmatpush1.msra.mxu0 0.0
  %1809 = vmatprep.subr.mxu0 0.0
  %1810 = vmatpush1.msra.mxu0 0.0
  %1811 = vmatprep.subr.mxu0 0.0
  %1812 = vmatpush1.msra.mxu0 0.0
  %1813 = vmatprep.subr.mxu0 0.0
  %1814 = vmatpush1.msra.mxu0 0.0
  %1815 = vmatprep.subr.mxu0 0.0
  %1816 = vmatpush1.msra.mxu0 0.0
  %1817 = vmatprep.subr.mxu0 0.0
  %1818 = vmatpush1.msra.mxu0 0.0
  %1819 = vmatprep.subr.mxu0 0.0
  %1820 = vmatpush1.msra.mxu0 0.0
  %1821 = vmatprep.subr.mxu0 0.0
  %1822 = vmatpush1.msra.mxu0 0.0
  %1823 = vmatprep.subr.mxu0 0.0
  %1824 = vmatpush1.msra.mxu0 0.0
  %1825 = vmatprep.subr.mxu0 0.0
  %1826 = vmatpush1.msra.mxu0 0.0
  %1827 = vmatprep.subr.mxu0 0.0
  %1828 = vmatpush1.msra.mxu0 0.0
  %1829 = vmatprep.subr.mxu0 0.0
  %1830 = vmatpush1.msra.mxu0 0.0
  %1831 = vmatprep.subr.mxu0 0.0
  %1832 = vmatpush1.msra.mxu0 0.0
  %1833 = vmatprep.subr.mxu0 0.0
  %1834 = vmatpush1.msra.mxu0 0.0
  %1835 = vmatprep.subr.mxu0 0.0
  %1836 = vmatpush1.msra.mxu0 0.0
  %1837 = vmatprep.mubr.f32.mxu0 0.0
  %1838 = vmatmul.mubr.f32.gmra.mrb[0].mxu0 %v1673
  %v1839 = vpop.f32.mrb[0].mxu0
  %v1840 = vadd.f32 0.0, %v1839
  %v1841 = vpop.f32.mrb[0].mxu0
  %v1842 = vadd.f32 0.0, %v1841
  %1843 = vmatprep.mubr.f32.mxu0 0.0
  %1844 = vmatmul.mubr.f32.gmra.mrb[0].mxu0 %v1676
  %v1845 = vpop.f32.mrb[0].mxu0
  %v1846 = vadd.f32 0.0, %v1845
  %v1847 = vpop.f32.mrb[0].mxu0
  %v1848 = vadd.f32 0.0, %v1847
  %1849 = vmatprep.mubr.f32.mxu0 0.0
  %1850 = vmatmul.mubr.f32.gmra.mrb[0].mxu0 %v1679
  %v1851 = vpop.f32.mrb[0].mxu0
  %v1852 = vadd.f32 0.0, %v1851
  %v1853 = vpop.f32.mrb[0].mxu0
  %v1854 = vadd.f32 0.0, %v1853
  %1855 = vmatprep.mubr.f32.mxu0 0.0
  %1856 = vmatmul.mubr.f32.gmra.mrb[0].mxu0 %v1682
  %v1857 = vpop.f32.mrb[0].mxu0
  %v1858 = vadd.f32 0.0, %v1857
  %v1859 = vpop.f32.mrb[0].mxu0
  %v1860 = vadd.f32 0.0, %v1859
  %1861 = vdwg.mxu0
  %v1862 = vadd.f32 %v1492, %v1751
  %v1863 = vadd.f32 %v1494, %v1753
  %v1864 = vadd.f32 %v1581, %v1840
  %v1865 = vadd.f32 %v1583, %v1842
  %v1866 = vadd.f32 %v1498, %v1757
  %v1867 = vadd.f32 %v1500, %v1759
  %v1868 = vadd.f32 %v1587, %v1846
  %v1869 = vadd.f32 %v1589, %v1848
  %v1870 = vadd.f32 %v1504, %v1763
  %v1871 = vadd.f32 %v1506, %v1765
  %v1872 = vadd.f32 %v1593, %v1852
  %v1873 = vadd.f32 %v1595, %v1854
  %v1874 = vadd.f32 %v1510, %v1769
  %v1875 = vadd.f32 %v1512, %v1771
  %v1876 = vadd.f32 %v1599, %v1858
  %v1877 = vadd.f32 %v1601, %v1860
  %1878 = vrot.lane.b32.xlu0 %v1069, 1
  %v1879 = vpop.permute.xlu0 %1878
  %1880 = vrot.lane.b32.xlu0 %v1073, 1
  %v1881 = vpop.permute.xlu0 %1880
  %1882 = vrot.lane.b32.xlu0 %v1077, 1
  %v1883 = vpop.permute.xlu0 %1882
  %1884 = vrot.lane.b32.xlu0 %v1081, 1
  %v1885 = vpop.permute.xlu0 %1884
  %1886 = vrot.lane.b32.xlu0 %v1070, 1
  %v1887 = vpop.permute.xlu0 %1886
  %1888 = vrot.lane.b32.xlu0 %v1074, 1
  %v1889 = vpop.permute.xlu0 %1888
  %1890 = vrot.lane.b32.xlu0 %v1078, 1
  %v1891 = vpop.permute.xlu0 %1890
  %1892 = vrot.lane.b32.xlu0 %v1082, 1
  %v1893 = vpop.permute.xlu0 %1892
  %1894 = vrot.lane.b32.xlu0 %v1071, 1
  %v1895 = vpop.permute.xlu0 %1894
  %1896 = vrot.lane.b32.xlu0 %v1075, 1
  %v1897 = vpop.permute.xlu0 %1896
  %1898 = vrot.lane.b32.xlu0 %v1079, 1
  %v1899 = vpop.permute.xlu0 %1898
  %1900 = vrot.lane.b32.xlu0 %v1083, 1
  %v1901 = vpop.permute.xlu0 %1900
  %1902 = vrot.lane.b32.xlu0 %v1072, 1
  %v1903 = vpop.permute.xlu0 %1902
  %1904 = vrot.lane.b32.xlu0 %v1076, 1
  %v1905 = vpop.permute.xlu0 %1904
  %1906 = vrot.lane.b32.xlu0 %v1080, 1
  %v1907 = vpop.permute.xlu0 %1906
  %1908 = vrot.lane.b32.xlu0 %v1084, 1
  %v1909 = vpop.permute.xlu0 %1908
  %v1910 = vsel %vm290, %v1895, %v1903
  %v1911 = vsel %vm290, %v1897, %v1905
  %v1912 = vsel %vm290, %v1899, %v1907
  %v1913 = vsel %vm290, %v1901, %v1909
  %v1914 = vsel %vm290, %v1887, %v1895
  %v1915 = vsel %vm290, %v1889, %v1897
  %v1916 = vsel %vm290, %v1891, %v1899
  %v1917 = vsel %vm290, %v1893, %v1901
  %v1918 = vsel %vm290, %v1879, %v1887
  %v1919 = vsel %vm290, %v1881, %v1889
  %v1920 = vsel %vm290, %v1883, %v1891
  %v1921 = vsel %vm290, %v1885, %v1893
  %v1922 = vsel %vm290, %v1903, %v1879
  %v1923 = vsel %vm290, %v1905, %v1881
  %v1924 = vsel %vm290, %v1907, %v1883
  %v1925 = vsel %vm290, %v1909, %v1885
  %s1926 = scalar_lea.vmem %s17, 96
  %v1927 = vld [vmem:[%s1926] sm:$0xff]
  %v1928 = vld [vmem:[%s1926 + $0x8] sm:$0xff]
  %v1929 = vld [vmem:[%s1926 + $0x10] sm:$0xff]
  %v1930 = vld [vmem:[%s1926 + $0x18] sm:$0xff]
  %v1931 = vmul.f32 %v1922, %v299
  %v1932 = vmul.f32 %v1918, %v303
  %v1933 = vmul.f32 %v1914, %v307
  %v1934 = vmul.f32 %v1910, %v311
  %v1935 = vmul.f32 %v1923, %v299
  %v1936 = vmul.f32 %v1919, %v303
  %v1937 = vmul.f32 %v1915, %v307
  %v1938 = vmul.f32 %v1911, %v311
  %v1939 = vmul.f32 %v1924, %v299
  %v1940 = vmul.f32 %v1920, %v303
  %v1941 = vmul.f32 %v1916, %v307
  %v1942 = vmul.f32 %v1912, %v311
  %v1943 = vmul.f32 %v1925, %v299
  %v1944 = vmul.f32 %v1921, %v303
  %v1945 = vmul.f32 %v1917, %v307
  %v1946 = vmul.f32 %v1913, %v311
  %v1948 = vsel %vm1222, %v1927, 0
  %v1951 = vsel %vm1222, %v1928, 0
  %v1954 = vsel %vm1222, %v1929, 0
  %v1957 = vsel %vm1222, %v1930, 0
  %1959 = vmatprep.subr.mxu0 %v1932
  %1960 = vmatpush1.msra.mxu0 %v1931
  %1961 = vmatprep.subr.mxu0 %v1936
  %1962 = vmatpush1.msra.mxu0 %v1935
  %1963 = vmatprep.subr.mxu0 %v1940
  %1964 = vmatpush1.msra.mxu0 %v1939
  %1965 = vmatprep.subr.mxu0 %v1944
  %1966 = vmatpush1.msra.mxu0 %v1943
  %1967 = vmatprep.subr.mxu0 0.0
  %1968 = vmatpush1.msra.mxu0 0.0
  %1969 = vmatprep.subr.mxu0 0.0
  %1970 = vmatpush1.msra.mxu0 0.0
  %1971 = vmatprep.subr.mxu0 0.0
  %1972 = vmatpush1.msra.mxu0 0.0
  %1973 = vmatprep.subr.mxu0 0.0
  %1974 = vmatpush1.msra.mxu0 0.0
  %1975 = vmatprep.subr.mxu0 0.0
  %1976 = vmatpush1.msra.mxu0 0.0
  %1977 = vmatprep.subr.mxu0 0.0
  %1978 = vmatpush1.msra.mxu0 0.0
  %1979 = vmatprep.subr.mxu0 0.0
  %1980 = vmatpush1.msra.mxu0 0.0
  %1981 = vmatprep.subr.mxu0 0.0
  %1982 = vmatpush1.msra.mxu0 0.0
  %1983 = vmatprep.subr.mxu0 0.0
  %1984 = vmatpush1.msra.mxu0 0.0
  %1985 = vmatprep.subr.mxu0 0.0
  %1986 = vmatpush1.msra.mxu0 0.0
  %1987 = vmatprep.subr.mxu0 0.0
  %1988 = vmatpush1.msra.mxu0 0.0
  %1989 = vmatprep.subr.mxu0 0.0
  %1990 = vmatpush1.msra.mxu0 0.0
  %1991 = vmatprep.subr.mxu0 0.0
  %1992 = vmatpush1.msra.mxu0 0.0
  %1993 = vmatprep.subr.mxu0 0.0
  %1994 = vmatpush1.msra.mxu0 0.0
  %1995 = vmatprep.subr.mxu0 0.0
  %1996 = vmatpush1.msra.mxu0 0.0
  %1997 = vmatprep.subr.mxu0 0.0
  %1998 = vmatpush1.msra.mxu0 0.0
  %1999 = vmatprep.subr.mxu0 0.0
  %2000 = vmatpush1.msra.mxu0 0.0
  %2001 = vmatprep.subr.mxu0 0.0
  %2002 = vmatpush1.msra.mxu0 0.0
  %2003 = vmatprep.subr.mxu0 0.0
  %2004 = vmatpush1.msra.mxu0 0.0
  %2005 = vmatprep.subr.mxu0 0.0
  %2006 = vmatpush1.msra.mxu0 0.0
  %2007 = vmatprep.subr.mxu0 0.0
  %2008 = vmatpush1.msra.mxu0 0.0
  %2009 = vmatprep.subr.mxu0 0.0
  %2010 = vmatpush1.msra.mxu0 0.0
  %2011 = vmatprep.subr.mxu0 0.0
  %2012 = vmatpush1.msra.mxu0 0.0
  %2013 = vmatprep.subr.mxu0 0.0
  %2014 = vmatpush1.msra.mxu0 0.0
  %2015 = vmatprep.subr.mxu0 0.0
  %2016 = vmatpush1.msra.mxu0 0.0
  %2017 = vmatprep.subr.mxu0 0.0
  %2018 = vmatpush1.msra.mxu0 0.0
  %2019 = vmatprep.subr.mxu0 0.0
  %2020 = vmatpush1.msra.mxu0 0.0
  %2021 = vmatprep.subr.mxu0 0.0
  %2022 = vmatpush1.msra.mxu0 0.0
  %2023 = vmatprep.mubr.f32.mxu0 0.0
  %2024 = vmatmul.mubr.f32.gmra.mrb[0].mxu0 %v1948
  %v2025 = vpop.f32.mrb[0].mxu0
  %v2026 = vadd.f32 0.0, %v2025
  %v2027 = vpop.f32.mrb[0].mxu0
  %v2028 = vadd.f32 0.0, %v2027
  %2029 = vmatprep.mubr.f32.mxu0 0.0
  %2030 = vmatmul.mubr.f32.gmra.mrb[0].mxu0 %v1951
  %v2031 = vpop.f32.mrb[0].mxu0
  %v2032 = vadd.f32 0.0, %v2031
  %v2033 = vpop.f32.mrb[0].mxu0
  %v2034 = vadd.f32 0.0, %v2033
  %2035 = vmatprep.mubr.f32.mxu0 0.0
  %2036 = vmatmul.mubr.f32.gmra.mrb[0].mxu0 %v1954
  %v2037 = vpop.f32.mrb[0].mxu0
  %v2038 = vadd.f32 0.0, %v2037
  %v2039 = vpop.f32.mrb[0].mxu0
  %v2040 = vadd.f32 0.0, %v2039
  %2041 = vmatprep.mubr.f32.mxu0 0.0
  %2042 = vmatmul.mubr.f32.gmra.mrb[0].mxu0 %v1957
  %v2043 = vpop.f32.mrb[0].mxu0
  %v2044 = vadd.f32 0.0, %v2043
  %v2045 = vpop.f32.mrb[0].mxu0
  %v2046 = vadd.f32 0.0, %v2045
  %2047 = vdwg.mxu0
  %2048 = vmatprep.subr.mxu0 %v1934
  %2049 = vmatpush1.msra.mxu0 %v1933
  %2050 = vmatprep.subr.mxu0 %v1938
  %2051 = vmatpush1.msra.mxu0 %v1937
  %2052 = vmatprep.subr.mxu0 %v1942
  %2053 = vmatpush1.msra.mxu0 %v1941
  %2054 = vmatprep.subr.mxu0 %v1946
  %2055 = vmatpush1.msra.mxu0 %v1945
  %2056 = vmatprep.subr.mxu0 0.0
  %2057 = vmatpush1.msra.mxu0 0.0
  %2058 = vmatprep.subr.mxu0 0.0
  %2059 = vmatpush1.msra.mxu0 0.0
  %2060 = vmatprep.subr.mxu0 0.0
  %2061 = vmatpush1.msra.mxu0 0.0
  %2062 = vmatprep.subr.mxu0 0.0
  %2063 = vmatpush1.msra.mxu0 0.0
  %2064 = vmatprep.subr.mxu0 0.0
  %2065 = vmatpush1.msra.mxu0 0.0
  %2066 = vmatprep.subr.mxu0 0.0
  %2067 = vmatpush1.msra.mxu0 0.0
  %2068 = vmatprep.subr.mxu0 0.0
  %2069 = vmatpush1.msra.mxu0 0.0
  %2070 = vmatprep.subr.mxu0 0.0
  %2071 = vmatpush1.msra.mxu0 0.0
  %2072 = vmatprep.subr.mxu0 0.0
  %2073 = vmatpush1.msra.mxu0 0.0
  %2074 = vmatprep.subr.mxu0 0.0
  %2075 = vmatpush1.msra.mxu0 0.0
  %2076 = vmatprep.subr.mxu0 0.0
  %2077 = vmatpush1.msra.mxu0 0.0
  %2078 = vmatprep.subr.mxu0 0.0
  %2079 = vmatpush1.msra.mxu0 0.0
  %2080 = vmatprep.subr.mxu0 0.0
  %2081 = vmatpush1.msra.mxu0 0.0
  %2082 = vmatprep.subr.mxu0 0.0
  %2083 = vmatpush1.msra.mxu0 0.0
  %2084 = vmatprep.subr.mxu0 0.0
  %2085 = vmatpush1.msra.mxu0 0.0
  %2086 = vmatprep.subr.mxu0 0.0
  %2087 = vmatpush1.msra.mxu0 0.0
  %2088 = vmatprep.subr.mxu0 0.0
  %2089 = vmatpush1.msra.mxu0 0.0
  %2090 = vmatprep.subr.mxu0 0.0
  %2091 = vmatpush1.msra.mxu0 0.0
  %2092 = vmatprep.subr.mxu0 0.0
  %2093 = vmatpush1.msra.mxu0 0.0
  %2094 = vmatprep.subr.mxu0 0.0
  %2095 = vmatpush1.msra.mxu0 0.0
  %2096 = vmatprep.subr.mxu0 0.0
  %2097 = vmatpush1.msra.mxu0 0.0
  %2098 = vmatprep.subr.mxu0 0.0
  %2099 = vmatpush1.msra.mxu0 0.0
  %2100 = vmatprep.subr.mxu0 0.0
  %2101 = vmatpush1.msra.mxu0 0.0
  %2102 = vmatprep.subr.mxu0 0.0
  %2103 = vmatpush1.msra.mxu0 0.0
  %2104 = vmatprep.subr.mxu0 0.0
  %2105 = vmatpush1.msra.mxu0 0.0
  %2106 = vmatprep.subr.mxu0 0.0
  %2107 = vmatpush1.msra.mxu0 0.0
  %2108 = vmatprep.subr.mxu0 0.0
  %2109 = vmatpush1.msra.mxu0 0.0
  %2110 = vmatprep.subr.mxu0 0.0
  %2111 = vmatpush1.msra.mxu0 0.0
  %2112 = vmatprep.mubr.f32.mxu0 0.0
  %2113 = vmatmul.mubr.f32.gmra.mrb[0].mxu0 %v1948
  %v2114 = vpop.f32.mrb[0].mxu0
  %v2115 = vadd.f32 0.0, %v2114
  %v2116 = vpop.f32.mrb[0].mxu0
  %v2117 = vadd.f32 0.0, %v2116
  %2118 = vmatprep.mubr.f32.mxu0 0.0
  %2119 = vmatmul.mubr.f32.gmra.mrb[0].mxu0 %v1951
  %v2120 = vpop.f32.mrb[0].mxu0
  %v2121 = vadd.f32 0.0, %v2120
  %v2122 = vpop.f32.mrb[0].mxu0
  %v2123 = vadd.f32 0.0, %v2122
  %2124 = vmatprep.mubr.f32.mxu0 0.0
  %2125 = vmatmul.mubr.f32.gmra.mrb[0].mxu0 %v1954
  %v2126 = vpop.f32.mrb[0].mxu0
  %v2127 = vadd.f32 0.0, %v2126
  %v2128 = vpop.f32.mrb[0].mxu0
  %v2129 = vadd.f32 0.0, %v2128
  %2130 = vmatprep.mubr.f32.mxu0 0.0
  %2131 = vmatmul.mubr.f32.gmra.mrb[0].mxu0 %v1957
  %v2132 = vpop.f32.mrb[0].mxu0
  %v2133 = vadd.f32 0.0, %v2132
  %v2134 = vpop.f32.mrb[0].mxu0
  %v2135 = vadd.f32 0.0, %v2134
  %2136 = vdwg.mxu0
  %v2137 = vadd.f32 %v1862, %v2026
  %v2138 = vadd.f32 %v1863, %v2028
  %v2139 = vadd.f32 %v1864, %v2115
  %v2140 = vadd.f32 %v1865, %v2117
  %v2141 = vadd.f32 %v1866, %v2032
  %v2142 = vadd.f32 %v1867, %v2034
  %v2143 = vadd.f32 %v1868, %v2121
  %v2144 = vadd.f32 %v1869, %v2123
  %v2145 = vadd.f32 %v1870, %v2038
  %v2146 = vadd.f32 %v1871, %v2040
  %v2147 = vadd.f32 %v1872, %v2127
  %v2148 = vadd.f32 %v1873, %v2129
  %v2149 = vadd.f32 %v1874, %v2044
  %v2150 = vadd.f32 %v1875, %v2046
  %v2151 = vadd.f32 %v1876, %v2133
  %v2152 = vadd.f32 %v1877, %v2135
  %s2153 = scalar_lea.vmem %s17, 128
  %v2154 = vld [vmem:[%s2153] sm:$0xff]
  %v2155 = vld [vmem:[%s2153 + $0x8] sm:$0xff]
  %v2156 = vld [vmem:[%s2153 + $0x10] sm:$0xff]
  %v2157 = vld [vmem:[%s2153 + $0x18] sm:$0xff]
  %v2159 = vlaneseq
  %v2160 = vshrl.u32 %v2159, 7
  %v2161 = vsub.s32 0, %v2160
  %v2162 = vrot.slane %v322, %v2161
  %v2163 = vlaneseq
  %v2164 = vshrl.u32 %v2163, 7
  %v2165 = vsub.s32 1, %v2164
  %v2166 = vrot.slane %v322, %v2165
  %v2167 = vlaneseq
  %v2168 = vshrl.u32 %v2167, 7
  %v2169 = vsub.s32 2, %v2168
  %v2170 = vrot.slane %v322, %v2169
  %v2171 = vlaneseq
  %v2172 = vshrl.u32 %v2171, 7
  %v2173 = vsub.s32 3, %v2172
  %v2174 = vrot.slane %v322, %v2173
  %v2179 = vmul.f32 %v1069, %v2162
  %v2180 = vmul.f32 %v1070, %v2166
  %v2181 = vmul.f32 %v1071, %v2170
  %v2182 = vmul.f32 %v1072, %v2174
  %v2183 = vmul.f32 %v1073, %v2162
  %v2184 = vmul.f32 %v1074, %v2166
  %v2185 = vmul.f32 %v1075, %v2170
  %v2186 = vmul.f32 %v1076, %v2174
  %v2187 = vmul.f32 %v1077, %v2162
  %v2188 = vmul.f32 %v1078, %v2166
  %v2189 = vmul.f32 %v1079, %v2170
  %v2190 = vmul.f32 %v1080, %v2174
  %v2191 = vmul.f32 %v1081, %v2162
  %v2192 = vmul.f32 %v1082, %v2166
  %v2193 = vmul.f32 %v1083, %v2170
  %v2194 = vmul.f32 %v1084, %v2174
  %v2196 = vsel %vm1222, %v2154, 0
  %v2199 = vsel %vm1222, %v2155, 0
  %v2202 = vsel %vm1222, %v2156, 0
  %v2205 = vsel %vm1222, %v2157, 0
  %2207 = vmatprep.subr.mxu0 %v2180
  %2208 = vmatpush1.msra.mxu0 %v2179
  %2209 = vmatprep.subr.mxu0 %v2184
  %2210 = vmatpush1.msra.mxu0 %v2183
  %2211 = vmatprep.subr.mxu0 %v2188
  %2212 = vmatpush1.msra.mxu0 %v2187
  %2213 = vmatprep.subr.mxu0 %v2192
  %2214 = vmatpush1.msra.mxu0 %v2191
  %2215 = vmatprep.subr.mxu0 0.0
  %2216 = vmatpush1.msra.mxu0 0.0
  %2217 = vmatprep.subr.mxu0 0.0
  %2218 = vmatpush1.msra.mxu0 0.0
  %2219 = vmatprep.subr.mxu0 0.0
  %2220 = vmatpush1.msra.mxu0 0.0
  %2221 = vmatprep.subr.mxu0 0.0
  %2222 = vmatpush1.msra.mxu0 0.0
  %2223 = vmatprep.subr.mxu0 0.0
  %2224 = vmatpush1.msra.mxu0 0.0
  %2225 = vmatprep.subr.mxu0 0.0
  %2226 = vmatpush1.msra.mxu0 0.0
  %2227 = vmatprep.subr.mxu0 0.0
  %2228 = vmatpush1.msra.mxu0 0.0
  %2229 = vmatprep.subr.mxu0 0.0
  %2230 = vmatpush1.msra.mxu0 0.0
  %2231 = vmatprep.subr.mxu0 0.0
  %2232 = vmatpush1.msra.mxu0 0.0
  %2233 = vmatprep.subr.mxu0 0.0
  %2234 = vmatpush1.msra.mxu0 0.0
  %2235 = vmatprep.subr.mxu0 0.0
  %2236 = vmatpush1.msra.mxu0 0.0
  %2237 = vmatprep.subr.mxu0 0.0
  %2238 = vmatpush1.msra.mxu0 0.0
  %2239 = vmatprep.subr.mxu0 0.0
  %2240 = vmatpush1.msra.mxu0 0.0
  %2241 = vmatprep.subr.mxu0 0.0
  %2242 = vmatpush1.msra.mxu0 0.0
  %2243 = vmatprep.subr.mxu0 0.0
  %2244 = vmatpush1.msra.mxu0 0.0
  %2245 = vmatprep.subr.mxu0 0.0
  %2246 = vmatpush1.msra.mxu0 0.0
  %2247 = vmatprep.subr.mxu0 0.0
  %2248 = vmatpush1.msra.mxu0 0.0
  %2249 = vmatprep.subr.mxu0 0.0
  %2250 = vmatpush1.msra.mxu0 0.0
  %2251 = vmatprep.subr.mxu0 0.0
  %2252 = vmatpush1.msra.mxu0 0.0
  %2253 = vmatprep.subr.mxu0 0.0
  %2254 = vmatpush1.msra.mxu0 0.0
  %2255 = vmatprep.subr.mxu0 0.0
  %2256 = vmatpush1.msra.mxu0 0.0
  %2257 = vmatprep.subr.mxu0 0.0
  %2258 = vmatpush1.msra.mxu0 0.0
  %2259 = vmatprep.subr.mxu0 0.0
  %2260 = vmatpush1.msra.mxu0 0.0
  %2261 = vmatprep.subr.mxu0 0.0
  %2262 = vmatpush1.msra.mxu0 0.0
  %2263 = vmatprep.subr.mxu0 0.0
  %2264 = vmatpush1.msra.mxu0 0.0
  %2265 = vmatprep.subr.mxu0 0.0
  %2266 = vmatpush1.msra.mxu0 0.0
  %2267 = vmatprep.subr.mxu0 0.0
  %2268 = vmatpush1.msra.mxu0 0.0
  %2269 = vmatprep.subr.mxu0 0.0
  %2270 = vmatpush1.msra.mxu0 0.0
  %2271 = vmatprep.mubr.f32.mxu0 0.0
  %2272 = vmatmul.mubr.f32.gmra.mrb[0].mxu0 %v2196
  %v2273 = vpop.f32.mrb[0].mxu0
  %v2274 = vadd.f32 0.0, %v2273
  %v2275 = vpop.f32.mrb[0].mxu0
  %v2276 = vadd.f32 0.0, %v2275
  %2277 = vmatprep.mubr.f32.mxu0 0.0
  %2278 = vmatmul.mubr.f32.gmra.mrb[0].mxu0 %v2199
  %v2279 = vpop.f32.mrb[0].mxu0
  %v2280 = vadd.f32 0.0, %v2279
  %v2281 = vpop.f32.mrb[0].mxu0
  %v2282 = vadd.f32 0.0, %v2281
  %2283 = vmatprep.mubr.f32.mxu0 0.0
  %2284 = vmatmul.mubr.f32.gmra.mrb[0].mxu0 %v2202
  %v2285 = vpop.f32.mrb[0].mxu0
  %v2286 = vadd.f32 0.0, %v2285
  %v2287 = vpop.f32.mrb[0].mxu0
  %v2288 = vadd.f32 0.0, %v2287
  %2289 = vmatprep.mubr.f32.mxu0 0.0
  %2290 = vmatmul.mubr.f32.gmra.mrb[0].mxu0 %v2205
  %v2291 = vpop.f32.mrb[0].mxu0
  %v2292 = vadd.f32 0.0, %v2291
  %v2293 = vpop.f32.mrb[0].mxu0
  %v2294 = vadd.f32 0.0, %v2293
  %2295 = vdwg.mxu0
  %2296 = vmatprep.subr.mxu0 %v2182
  %2297 = vmatpush1.msra.mxu0 %v2181
  %2298 = vmatprep.subr.mxu0 %v2186
  %2299 = vmatpush1.msra.mxu0 %v2185
  %2300 = vmatprep.subr.mxu0 %v2190
  %2301 = vmatpush1.msra.mxu0 %v2189
  %2302 = vmatprep.subr.mxu0 %v2194
  %2303 = vmatpush1.msra.mxu0 %v2193
  %2304 = vmatprep.subr.mxu0 0.0
  %2305 = vmatpush1.msra.mxu0 0.0
  %2306 = vmatprep.subr.mxu0 0.0
  %2307 = vmatpush1.msra.mxu0 0.0
  %2308 = vmatprep.subr.mxu0 0.0
  %2309 = vmatpush1.msra.mxu0 0.0
  %2310 = vmatprep.subr.mxu0 0.0
  %2311 = vmatpush1.msra.mxu0 0.0
  %2312 = vmatprep.subr.mxu0 0.0
  %2313 = vmatpush1.msra.mxu0 0.0
  %2314 = vmatprep.subr.mxu0 0.0
  %2315 = vmatpush1.msra.mxu0 0.0
  %2316 = vmatprep.subr.mxu0 0.0
  %2317 = vmatpush1.msra.mxu0 0.0
  %2318 = vmatprep.subr.mxu0 0.0
  %2319 = vmatpush1.msra.mxu0 0.0
  %2320 = vmatprep.subr.mxu0 0.0
  %2321 = vmatpush1.msra.mxu0 0.0
  %2322 = vmatprep.subr.mxu0 0.0
  %2323 = vmatpush1.msra.mxu0 0.0
  %2324 = vmatprep.subr.mxu0 0.0
  %2325 = vmatpush1.msra.mxu0 0.0
  %2326 = vmatprep.subr.mxu0 0.0
  %2327 = vmatpush1.msra.mxu0 0.0
  %2328 = vmatprep.subr.mxu0 0.0
  %2329 = vmatpush1.msra.mxu0 0.0
  %2330 = vmatprep.subr.mxu0 0.0
  %2331 = vmatpush1.msra.mxu0 0.0
  %2332 = vmatprep.subr.mxu0 0.0
  %2333 = vmatpush1.msra.mxu0 0.0
  %2334 = vmatprep.subr.mxu0 0.0
  %2335 = vmatpush1.msra.mxu0 0.0
  %2336 = vmatprep.subr.mxu0 0.0
  %2337 = vmatpush1.msra.mxu0 0.0
  %2338 = vmatprep.subr.mxu0 0.0
  %2339 = vmatpush1.msra.mxu0 0.0
  %2340 = vmatprep.subr.mxu0 0.0
  %2341 = vmatpush1.msra.mxu0 0.0
  %2342 = vmatprep.subr.mxu0 0.0
  %2343 = vmatpush1.msra.mxu0 0.0
  %2344 = vmatprep.subr.mxu0 0.0
  %2345 = vmatpush1.msra.mxu0 0.0
  %2346 = vmatprep.subr.mxu0 0.0
  %2347 = vmatpush1.msra.mxu0 0.0
  %2348 = vmatprep.subr.mxu0 0.0
  %2349 = vmatpush1.msra.mxu0 0.0
  %2350 = vmatprep.subr.mxu0 0.0
  %2351 = vmatpush1.msra.mxu0 0.0
  %2352 = vmatprep.subr.mxu0 0.0
  %2353 = vmatpush1.msra.mxu0 0.0
  %2354 = vmatprep.subr.mxu0 0.0
  %2355 = vmatpush1.msra.mxu0 0.0
  %2356 = vmatprep.subr.mxu0 0.0
  %2357 = vmatpush1.msra.mxu0 0.0
  %2358 = vmatprep.subr.mxu0 0.0
  %2359 = vmatpush1.msra.mxu0 0.0
  %2360 = vmatprep.mubr.f32.mxu0 0.0
  %2361 = vmatmul.mubr.f32.gmra.mrb[0].mxu0 %v2196
  %v2362 = vpop.f32.mrb[0].mxu0
  %v2363 = vadd.f32 0.0, %v2362
  %v2364 = vpop.f32.mrb[0].mxu0
  %v2365 = vadd.f32 0.0, %v2364
  %2366 = vmatprep.mubr.f32.mxu0 0.0
  %2367 = vmatmul.mubr.f32.gmra.mrb[0].mxu0 %v2199
  %v2368 = vpop.f32.mrb[0].mxu0
  %v2369 = vadd.f32 0.0, %v2368
  %v2370 = vpop.f32.mrb[0].mxu0
  %v2371 = vadd.f32 0.0, %v2370
  %2372 = vmatprep.mubr.f32.mxu0 0.0
  %2373 = vmatmul.mubr.f32.gmra.mrb[0].mxu0 %v2202
  %v2374 = vpop.f32.mrb[0].mxu0
  %v2375 = vadd.f32 0.0, %v2374
  %v2376 = vpop.f32.mrb[0].mxu0
  %v2377 = vadd.f32 0.0, %v2376
  %2378 = vmatprep.mubr.f32.mxu0 0.0
  %2379 = vmatmul.mubr.f32.gmra.mrb[0].mxu0 %v2205
  %v2380 = vpop.f32.mrb[0].mxu0
  %v2381 = vadd.f32 0.0, %v2380
  %v2382 = vpop.f32.mrb[0].mxu0
  %v2383 = vadd.f32 0.0, %v2382
  %2384 = vdwg.mxu0
  %v2385 = vadd.f32 %v2137, %v2274
  %v2386 = vadd.f32 %v2138, %v2276
  %v2387 = vadd.f32 %v2139, %v2363
  %v2388 = vadd.f32 %v2140, %v2365
  %v2389 = vadd.f32 %v2141, %v2280
  %v2390 = vadd.f32 %v2142, %v2282
  %v2391 = vadd.f32 %v2143, %v2369
  %v2392 = vadd.f32 %v2144, %v2371
  %v2393 = vadd.f32 %v2145, %v2286
  %v2394 = vadd.f32 %v2146, %v2288
  %v2395 = vadd.f32 %v2147, %v2375
  %v2396 = vadd.f32 %v2148, %v2377
  %v2397 = vadd.f32 %v2149, %v2292
  %v2398 = vadd.f32 %v2150, %v2294
  %v2399 = vadd.f32 %v2151, %v2381
  %v2400 = vadd.f32 %v2152, %v2383
  %2401 = vrot.lane.b32.xlu0 %v1069, 127
  %v2402 = vpop.permute.xlu0 %2401
  %2403 = vrot.lane.b32.xlu0 %v1073, 127
  %v2404 = vpop.permute.xlu0 %2403
  %2405 = vrot.lane.b32.xlu0 %v1077, 127
  %v2406 = vpop.permute.xlu0 %2405
  %2407 = vrot.lane.b32.xlu0 %v1081, 127
  %v2408 = vpop.permute.xlu0 %2407
  %2409 = vrot.lane.b32.xlu0 %v1070, 127
  %v2410 = vpop.permute.xlu0 %2409
  %2411 = vrot.lane.b32.xlu0 %v1074, 127
  %v2412 = vpop.permute.xlu0 %2411
  %2413 = vrot.lane.b32.xlu0 %v1078, 127
  %v2414 = vpop.permute.xlu0 %2413
  %2415 = vrot.lane.b32.xlu0 %v1082, 127
  %v2416 = vpop.permute.xlu0 %2415
  %2417 = vrot.lane.b32.xlu0 %v1071, 127
  %v2418 = vpop.permute.xlu0 %2417
  %2419 = vrot.lane.b32.xlu0 %v1075, 127
  %v2420 = vpop.permute.xlu0 %2419
  %2421 = vrot.lane.b32.xlu0 %v1079, 127
  %v2422 = vpop.permute.xlu0 %2421
  %2423 = vrot.lane.b32.xlu0 %v1083, 127
  %v2424 = vpop.permute.xlu0 %2423
  %2425 = vrot.lane.b32.xlu0 %v1072, 127
  %v2426 = vpop.permute.xlu0 %2425
  %2427 = vrot.lane.b32.xlu0 %v1076, 127
  %v2428 = vpop.permute.xlu0 %2427
  %2429 = vrot.lane.b32.xlu0 %v1080, 127
  %v2430 = vpop.permute.xlu0 %2429
  %2431 = vrot.lane.b32.xlu0 %v1084, 127
  %v2432 = vpop.permute.xlu0 %2431
  %v2433 = vsel %vm335, %v2418, %v2426
  %v2434 = vsel %vm335, %v2420, %v2428
  %v2435 = vsel %vm335, %v2422, %v2430
  %v2436 = vsel %vm335, %v2424, %v2432
  %v2437 = vsel %vm335, %v2410, %v2418
  %v2438 = vsel %vm335, %v2412, %v2420
  %v2439 = vsel %vm335, %v2414, %v2422
  %v2440 = vsel %vm335, %v2416, %v2424
  %v2441 = vsel %vm335, %v2402, %v2410
  %v2442 = vsel %vm335, %v2404, %v2412
  %v2443 = vsel %vm335, %v2406, %v2414
  %v2444 = vsel %vm335, %v2408, %v2416
  %v2445 = vsel %vm335, %v2426, %v2402
  %v2446 = vsel %vm335, %v2428, %v2404
  %v2447 = vsel %vm335, %v2430, %v2406
  %v2448 = vsel %vm335, %v2432, %v2408
  %s2449 = scalar_lea.vmem %s17, 160
  %v2450 = vld [vmem:[%s2449] sm:$0xff]
  %v2451 = vld [vmem:[%s2449 + $0x8] sm:$0xff]
  %v2452 = vld [vmem:[%s2449 + $0x10] sm:$0xff]
  %v2453 = vld [vmem:[%s2449 + $0x18] sm:$0xff]
  %v2454 = vmul.f32 %v2441, %v344
  %v2455 = vmul.f32 %v2437, %v348
  %v2456 = vmul.f32 %v2433, %v352
  %v2457 = vmul.f32 %v2445, %v356
  %v2458 = vmul.f32 %v2442, %v344
  %v2459 = vmul.f32 %v2438, %v348
  %v2460 = vmul.f32 %v2434, %v352
  %v2461 = vmul.f32 %v2446, %v356
  %v2462 = vmul.f32 %v2443, %v344
  %v2463 = vmul.f32 %v2439, %v348
  %v2464 = vmul.f32 %v2435, %v352
  %v2465 = vmul.f32 %v2447, %v356
  %v2466 = vmul.f32 %v2444, %v344
  %v2467 = vmul.f32 %v2440, %v348
  %v2468 = vmul.f32 %v2436, %v352
  %v2469 = vmul.f32 %v2448, %v356
  %v2471 = vsel %vm1222, %v2450, 0
  %v2474 = vsel %vm1222, %v2451, 0
  %v2477 = vsel %vm1222, %v2452, 0
  %v2480 = vsel %vm1222, %v2453, 0
  %2482 = vmatprep.subr.mxu0 %v2455
  %2483 = vmatpush1.msra.mxu0 %v2454
  %2484 = vmatprep.subr.mxu0 %v2459
  %2485 = vmatpush1.msra.mxu0 %v2458
  %2486 = vmatprep.subr.mxu0 %v2463
  %2487 = vmatpush1.msra.mxu0 %v2462
  %2488 = vmatprep.subr.mxu0 %v2467
  %2489 = vmatpush1.msra.mxu0 %v2466
  %2490 = vmatprep.subr.mxu0 0.0
  %2491 = vmatpush1.msra.mxu0 0.0
  %2492 = vmatprep.subr.mxu0 0.0
  %2493 = vmatpush1.msra.mxu0 0.0
  %2494 = vmatprep.subr.mxu0 0.0
  %2495 = vmatpush1.msra.mxu0 0.0
  %2496 = vmatprep.subr.mxu0 0.0
  %2497 = vmatpush1.msra.mxu0 0.0
  %2498 = vmatprep.subr.mxu0 0.0
  %2499 = vmatpush1.msra.mxu0 0.0
  %2500 = vmatprep.subr.mxu0 0.0
  %2501 = vmatpush1.msra.mxu0 0.0
  %2502 = vmatprep.subr.mxu0 0.0
  %2503 = vmatpush1.msra.mxu0 0.0
  %2504 = vmatprep.subr.mxu0 0.0
  %2505 = vmatpush1.msra.mxu0 0.0
  %2506 = vmatprep.subr.mxu0 0.0
  %2507 = vmatpush1.msra.mxu0 0.0
  %2508 = vmatprep.subr.mxu0 0.0
  %2509 = vmatpush1.msra.mxu0 0.0
  %2510 = vmatprep.subr.mxu0 0.0
  %2511 = vmatpush1.msra.mxu0 0.0
  %2512 = vmatprep.subr.mxu0 0.0
  %2513 = vmatpush1.msra.mxu0 0.0
  %2514 = vmatprep.subr.mxu0 0.0
  %2515 = vmatpush1.msra.mxu0 0.0
  %2516 = vmatprep.subr.mxu0 0.0
  %2517 = vmatpush1.msra.mxu0 0.0
  %2518 = vmatprep.subr.mxu0 0.0
  %2519 = vmatpush1.msra.mxu0 0.0
  %2520 = vmatprep.subr.mxu0 0.0
  %2521 = vmatpush1.msra.mxu0 0.0
  %2522 = vmatprep.subr.mxu0 0.0
  %2523 = vmatpush1.msra.mxu0 0.0
  %2524 = vmatprep.subr.mxu0 0.0
  %2525 = vmatpush1.msra.mxu0 0.0
  %2526 = vmatprep.subr.mxu0 0.0
  %2527 = vmatpush1.msra.mxu0 0.0
  %2528 = vmatprep.subr.mxu0 0.0
  %2529 = vmatpush1.msra.mxu0 0.0
  %2530 = vmatprep.subr.mxu0 0.0
  %2531 = vmatpush1.msra.mxu0 0.0
  %2532 = vmatprep.subr.mxu0 0.0
  %2533 = vmatpush1.msra.mxu0 0.0
  %2534 = vmatprep.subr.mxu0 0.0
  %2535 = vmatpush1.msra.mxu0 0.0
  %2536 = vmatprep.subr.mxu0 0.0
  %2537 = vmatpush1.msra.mxu0 0.0
  %2538 = vmatprep.subr.mxu0 0.0
  %2539 = vmatpush1.msra.mxu0 0.0
  %2540 = vmatprep.subr.mxu0 0.0
  %2541 = vmatpush1.msra.mxu0 0.0
  %2542 = vmatprep.subr.mxu0 0.0
  %2543 = vmatpush1.msra.mxu0 0.0
  %2544 = vmatprep.subr.mxu0 0.0
  %2545 = vmatpush1.msra.mxu0 0.0
  %2546 = vmatprep.mubr.f32.mxu0 0.0
  %2547 = vmatmul.mubr.f32.gmra.mrb[0].mxu0 %v2471
  %v2548 = vpop.f32.mrb[0].mxu0
  %v2549 = vadd.f32 0.0, %v2548
  %v2550 = vpop.f32.mrb[0].mxu0
  %v2551 = vadd.f32 0.0, %v2550
  %2552 = vmatprep.mubr.f32.mxu0 0.0
  %2553 = vmatmul.mubr.f32.gmra.mrb[0].mxu0 %v2474
  %v2554 = vpop.f32.mrb[0].mxu0
  %v2555 = vadd.f32 0.0, %v2554
  %v2556 = vpop.f32.mrb[0].mxu0
  %v2557 = vadd.f32 0.0, %v2556
  %2558 = vmatprep.mubr.f32.mxu0 0.0
  %2559 = vmatmul.mubr.f32.gmra.mrb[0].mxu0 %v2477
  %v2560 = vpop.f32.mrb[0].mxu0
  %v2561 = vadd.f32 0.0, %v2560
  %v2562 = vpop.f32.mrb[0].mxu0
  %v2563 = vadd.f32 0.0, %v2562
  %2564 = vmatprep.mubr.f32.mxu0 0.0
  %2565 = vmatmul.mubr.f32.gmra.mrb[0].mxu0 %v2480
  %v2566 = vpop.f32.mrb[0].mxu0
  %v2567 = vadd.f32 0.0, %v2566
  %v2568 = vpop.f32.mrb[0].mxu0
  %v2569 = vadd.f32 0.0, %v2568
  %2570 = vdwg.mxu0
  %2571 = vmatprep.subr.mxu0 %v2457
  %2572 = vmatpush1.msra.mxu0 %v2456
  %2573 = vmatprep.subr.mxu0 %v2461
  %2574 = vmatpush1.msra.mxu0 %v2460
  %2575 = vmatprep.subr.mxu0 %v2465
  %2576 = vmatpush1.msra.mxu0 %v2464
  %2577 = vmatprep.subr.mxu0 %v2469
  %2578 = vmatpush1.msra.mxu0 %v2468
  %2579 = vmatprep.subr.mxu0 0.0
  %2580 = vmatpush1.msra.mxu0 0.0
  %2581 = vmatprep.subr.mxu0 0.0
  %2582 = vmatpush1.msra.mxu0 0.0
  %2583 = vmatprep.subr.mxu0 0.0
  %2584 = vmatpush1.msra.mxu0 0.0
  %2585 = vmatprep.subr.mxu0 0.0
  %2586 = vmatpush1.msra.mxu0 0.0
  %2587 = vmatprep.subr.mxu0 0.0
  %2588 = vmatpush1.msra.mxu0 0.0
  %2589 = vmatprep.subr.mxu0 0.0
  %2590 = vmatpush1.msra.mxu0 0.0
  %2591 = vmatprep.subr.mxu0 0.0
  %2592 = vmatpush1.msra.mxu0 0.0
  %2593 = vmatprep.subr.mxu0 0.0
  %2594 = vmatpush1.msra.mxu0 0.0
  %2595 = vmatprep.subr.mxu0 0.0
  %2596 = vmatpush1.msra.mxu0 0.0
  %2597 = vmatprep.subr.mxu0 0.0
  %2598 = vmatpush1.msra.mxu0 0.0
  %2599 = vmatprep.subr.mxu0 0.0
  %2600 = vmatpush1.msra.mxu0 0.0
  %2601 = vmatprep.subr.mxu0 0.0
  %2602 = vmatpush1.msra.mxu0 0.0
  %2603 = vmatprep.subr.mxu0 0.0
  %2604 = vmatpush1.msra.mxu0 0.0
  %2605 = vmatprep.subr.mxu0 0.0
  %2606 = vmatpush1.msra.mxu0 0.0
  %2607 = vmatprep.subr.mxu0 0.0
  %2608 = vmatpush1.msra.mxu0 0.0
  %2609 = vmatprep.subr.mxu0 0.0
  %2610 = vmatpush1.msra.mxu0 0.0
  %2611 = vmatprep.subr.mxu0 0.0
  %2612 = vmatpush1.msra.mxu0 0.0
  %2613 = vmatprep.subr.mxu0 0.0
  %2614 = vmatpush1.msra.mxu0 0.0
  %2615 = vmatprep.subr.mxu0 0.0
  %2616 = vmatpush1.msra.mxu0 0.0
  %2617 = vmatprep.subr.mxu0 0.0
  %2618 = vmatpush1.msra.mxu0 0.0
  %2619 = vmatprep.subr.mxu0 0.0
  %2620 = vmatpush1.msra.mxu0 0.0
  %2621 = vmatprep.subr.mxu0 0.0
  %2622 = vmatpush1.msra.mxu0 0.0
  %2623 = vmatprep.subr.mxu0 0.0
  %2624 = vmatpush1.msra.mxu0 0.0
  %2625 = vmatprep.subr.mxu0 0.0
  %2626 = vmatpush1.msra.mxu0 0.0
  %2627 = vmatprep.subr.mxu0 0.0
  %2628 = vmatpush1.msra.mxu0 0.0
  %2629 = vmatprep.subr.mxu0 0.0
  %2630 = vmatpush1.msra.mxu0 0.0
  %2631 = vmatprep.subr.mxu0 0.0
  %2632 = vmatpush1.msra.mxu0 0.0
  %2633 = vmatprep.subr.mxu0 0.0
  %2634 = vmatpush1.msra.mxu0 0.0
  %2635 = vmatprep.mubr.f32.mxu0 0.0
  %2636 = vmatmul.mubr.f32.gmra.mrb[0].mxu0 %v2471
  %v2637 = vpop.f32.mrb[0].mxu0
  %v2638 = vadd.f32 0.0, %v2637
  %v2639 = vpop.f32.mrb[0].mxu0
  %v2640 = vadd.f32 0.0, %v2639
  %2641 = vmatprep.mubr.f32.mxu0 0.0
  %2642 = vmatmul.mubr.f32.gmra.mrb[0].mxu0 %v2474
  %v2643 = vpop.f32.mrb[0].mxu0
  %v2644 = vadd.f32 0.0, %v2643
  %v2645 = vpop.f32.mrb[0].mxu0
  %v2646 = vadd.f32 0.0, %v2645
  %2647 = vmatprep.mubr.f32.mxu0 0.0
  %2648 = vmatmul.mubr.f32.gmra.mrb[0].mxu0 %v2477
  %v2649 = vpop.f32.mrb[0].mxu0
  %v2650 = vadd.f32 0.0, %v2649
  %v2651 = vpop.f32.mrb[0].mxu0
  %v2652 = vadd.f32 0.0, %v2651
  %2653 = vmatprep.mubr.f32.mxu0 0.0
  %2654 = vmatmul.mubr.f32.gmra.mrb[0].mxu0 %v2480
  %v2655 = vpop.f32.mrb[0].mxu0
  %v2656 = vadd.f32 0.0, %v2655
  %v2657 = vpop.f32.mrb[0].mxu0
  %v2658 = vadd.f32 0.0, %v2657
  %2659 = vdwg.mxu0
  %v2660 = vadd.f32 %v2385, %v2549
  %v2661 = vadd.f32 %v2386, %v2551
  %v2662 = vadd.f32 %v2387, %v2638
  %v2663 = vadd.f32 %v2388, %v2640
  %v2664 = vadd.f32 %v2389, %v2555
  %v2665 = vadd.f32 %v2390, %v2557
  %v2666 = vadd.f32 %v2391, %v2644
  %v2667 = vadd.f32 %v2392, %v2646
  %v2668 = vadd.f32 %v2393, %v2561
  %v2669 = vadd.f32 %v2394, %v2563
  %v2670 = vadd.f32 %v2395, %v2650
  %v2671 = vadd.f32 %v2396, %v2652
  %v2672 = vadd.f32 %v2397, %v2567
  %v2673 = vadd.f32 %v2398, %v2569
  %v2674 = vadd.f32 %v2399, %v2656
  %v2675 = vadd.f32 %v2400, %v2658
  %2676 = vrot.lane.b32.xlu0 %v1069, 121
  %v2677 = vpop.permute.xlu0 %2676
  %2678 = vrot.lane.b32.xlu0 %v1073, 121
  %v2679 = vpop.permute.xlu0 %2678
  %2680 = vrot.lane.b32.xlu0 %v1077, 121
  %v2681 = vpop.permute.xlu0 %2680
  %2682 = vrot.lane.b32.xlu0 %v1081, 121
  %v2683 = vpop.permute.xlu0 %2682
  %2684 = vrot.lane.b32.xlu0 %v1070, 121
  %v2685 = vpop.permute.xlu0 %2684
  %2686 = vrot.lane.b32.xlu0 %v1074, 121
  %v2687 = vpop.permute.xlu0 %2686
  %2688 = vrot.lane.b32.xlu0 %v1078, 121
  %v2689 = vpop.permute.xlu0 %2688
  %2690 = vrot.lane.b32.xlu0 %v1082, 121
  %v2691 = vpop.permute.xlu0 %2690
  %2692 = vrot.lane.b32.xlu0 %v1071, 121
  %v2693 = vpop.permute.xlu0 %2692
  %2694 = vrot.lane.b32.xlu0 %v1075, 121
  %v2695 = vpop.permute.xlu0 %2694
  %2696 = vrot.lane.b32.xlu0 %v1079, 121
  %v2697 = vpop.permute.xlu0 %2696
  %2698 = vrot.lane.b32.xlu0 %v1083, 121
  %v2699 = vpop.permute.xlu0 %2698
  %2700 = vrot.lane.b32.xlu0 %v1072, 121
  %v2701 = vpop.permute.xlu0 %2700
  %2702 = vrot.lane.b32.xlu0 %v1076, 121
  %v2703 = vpop.permute.xlu0 %2702
  %2704 = vrot.lane.b32.xlu0 %v1080, 121
  %v2705 = vpop.permute.xlu0 %2704
  %2706 = vrot.lane.b32.xlu0 %v1084, 121
  %v2707 = vpop.permute.xlu0 %2706
  %v2708 = vsel %vm376, %v2693, %v2701
  %v2709 = vsel %vm376, %v2695, %v2703
  %v2710 = vsel %vm376, %v2697, %v2705
  %v2711 = vsel %vm376, %v2699, %v2707
  %v2712 = vsel %vm376, %v2685, %v2693
  %v2713 = vsel %vm376, %v2687, %v2695
  %v2714 = vsel %vm376, %v2689, %v2697
  %v2715 = vsel %vm376, %v2691, %v2699
  %v2716 = vsel %vm376, %v2677, %v2685
  %v2717 = vsel %vm376, %v2679, %v2687
  %v2718 = vsel %vm376, %v2681, %v2689
  %v2719 = vsel %vm376, %v2683, %v2691
  %v2720 = vsel %vm376, %v2701, %v2677
  %v2721 = vsel %vm376, %v2703, %v2679
  %v2722 = vsel %vm376, %v2705, %v2681
  %v2723 = vsel %vm376, %v2707, %v2683
  %s2724 = scalar_lea.vmem %s17, 192
  %v2725 = vld [vmem:[%s2724] sm:$0xff]
  %v2726 = vld [vmem:[%s2724 + $0x8] sm:$0xff]
  %v2727 = vld [vmem:[%s2724 + $0x10] sm:$0xff]
  %v2728 = vld [vmem:[%s2724 + $0x18] sm:$0xff]
  %v2729 = vmul.f32 %v2716, %v385
  %v2730 = vmul.f32 %v2712, %v389
  %v2731 = vmul.f32 %v2708, %v393
  %v2732 = vmul.f32 %v2720, %v397
  %v2733 = vmul.f32 %v2717, %v385
  %v2734 = vmul.f32 %v2713, %v389
  %v2735 = vmul.f32 %v2709, %v393
  %v2736 = vmul.f32 %v2721, %v397
  %v2737 = vmul.f32 %v2718, %v385
  %v2738 = vmul.f32 %v2714, %v389
  %v2739 = vmul.f32 %v2710, %v393
  %v2740 = vmul.f32 %v2722, %v397
  %v2741 = vmul.f32 %v2719, %v385
  %v2742 = vmul.f32 %v2715, %v389
  %v2743 = vmul.f32 %v2711, %v393
  %v2744 = vmul.f32 %v2723, %v397
  %v2746 = vsel %vm1222, %v2725, 0
  %v2749 = vsel %vm1222, %v2726, 0
  %v2752 = vsel %vm1222, %v2727, 0
  %v2755 = vsel %vm1222, %v2728, 0
  %2757 = vmatprep.subr.mxu0 %v2730
  %2758 = vmatpush1.msra.mxu0 %v2729
  %2759 = vmatprep.subr.mxu0 %v2734
  %2760 = vmatpush1.msra.mxu0 %v2733
  %2761 = vmatprep.subr.mxu0 %v2738
  %2762 = vmatpush1.msra.mxu0 %v2737
  %2763 = vmatprep.subr.mxu0 %v2742
  %2764 = vmatpush1.msra.mxu0 %v2741
  %2765 = vmatprep.subr.mxu0 0.0
  %2766 = vmatpush1.msra.mxu0 0.0
  %2767 = vmatprep.subr.mxu0 0.0
  %2768 = vmatpush1.msra.mxu0 0.0
  %2769 = vmatprep.subr.mxu0 0.0
  %2770 = vmatpush1.msra.mxu0 0.0
  %2771 = vmatprep.subr.mxu0 0.0
  %2772 = vmatpush1.msra.mxu0 0.0
  %2773 = vmatprep.subr.mxu0 0.0
  %2774 = vmatpush1.msra.mxu0 0.0
  %2775 = vmatprep.subr.mxu0 0.0
  %2776 = vmatpush1.msra.mxu0 0.0
  %2777 = vmatprep.subr.mxu0 0.0
  %2778 = vmatpush1.msra.mxu0 0.0
  %2779 = vmatprep.subr.mxu0 0.0
  %2780 = vmatpush1.msra.mxu0 0.0
  %2781 = vmatprep.subr.mxu0 0.0
  %2782 = vmatpush1.msra.mxu0 0.0
  %2783 = vmatprep.subr.mxu0 0.0
  %2784 = vmatpush1.msra.mxu0 0.0
  %2785 = vmatprep.subr.mxu0 0.0
  %2786 = vmatpush1.msra.mxu0 0.0
  %2787 = vmatprep.subr.mxu0 0.0
  %2788 = vmatpush1.msra.mxu0 0.0
  %2789 = vmatprep.subr.mxu0 0.0
  %2790 = vmatpush1.msra.mxu0 0.0
  %2791 = vmatprep.subr.mxu0 0.0
  %2792 = vmatpush1.msra.mxu0 0.0
  %2793 = vmatprep.subr.mxu0 0.0
  %2794 = vmatpush1.msra.mxu0 0.0
  %2795 = vmatprep.subr.mxu0 0.0
  %2796 = vmatpush1.msra.mxu0 0.0
  %2797 = vmatprep.subr.mxu0 0.0
  %2798 = vmatpush1.msra.mxu0 0.0
  %2799 = vmatprep.subr.mxu0 0.0
  %2800 = vmatpush1.msra.mxu0 0.0
  %2801 = vmatprep.subr.mxu0 0.0
  %2802 = vmatpush1.msra.mxu0 0.0
  %2803 = vmatprep.subr.mxu0 0.0
  %2804 = vmatpush1.msra.mxu0 0.0
  %2805 = vmatprep.subr.mxu0 0.0
  %2806 = vmatpush1.msra.mxu0 0.0
  %2807 = vmatprep.subr.mxu0 0.0
  %2808 = vmatpush1.msra.mxu0 0.0
  %2809 = vmatprep.subr.mxu0 0.0
  %2810 = vmatpush1.msra.mxu0 0.0
  %2811 = vmatprep.subr.mxu0 0.0
  %2812 = vmatpush1.msra.mxu0 0.0
  %2813 = vmatprep.subr.mxu0 0.0
  %2814 = vmatpush1.msra.mxu0 0.0
  %2815 = vmatprep.subr.mxu0 0.0
  %2816 = vmatpush1.msra.mxu0 0.0
  %2817 = vmatprep.subr.mxu0 0.0
  %2818 = vmatpush1.msra.mxu0 0.0
  %2819 = vmatprep.subr.mxu0 0.0
  %2820 = vmatpush1.msra.mxu0 0.0
  %2821 = vmatprep.mubr.f32.mxu0 0.0
  %2822 = vmatmul.mubr.f32.gmra.mrb[0].mxu0 %v2746
  %v2823 = vpop.f32.mrb[0].mxu0
  %v2824 = vadd.f32 0.0, %v2823
  %v2825 = vpop.f32.mrb[0].mxu0
  %v2826 = vadd.f32 0.0, %v2825
  %2827 = vmatprep.mubr.f32.mxu0 0.0
  %2828 = vmatmul.mubr.f32.gmra.mrb[0].mxu0 %v2749
  %v2829 = vpop.f32.mrb[0].mxu0
  %v2830 = vadd.f32 0.0, %v2829
  %v2831 = vpop.f32.mrb[0].mxu0
  %v2832 = vadd.f32 0.0, %v2831
  %2833 = vmatprep.mubr.f32.mxu0 0.0
  %2834 = vmatmul.mubr.f32.gmra.mrb[0].mxu0 %v2752
  %v2835 = vpop.f32.mrb[0].mxu0
  %v2836 = vadd.f32 0.0, %v2835
  %v2837 = vpop.f32.mrb[0].mxu0
  %v2838 = vadd.f32 0.0, %v2837
  %2839 = vmatprep.mubr.f32.mxu0 0.0
  %2840 = vmatmul.mubr.f32.gmra.mrb[0].mxu0 %v2755
  %v2841 = vpop.f32.mrb[0].mxu0
  %v2842 = vadd.f32 0.0, %v2841
  %v2843 = vpop.f32.mrb[0].mxu0
  %v2844 = vadd.f32 0.0, %v2843
  %2845 = vdwg.mxu0
  %2846 = vmatprep.subr.mxu0 %v2732
  %2847 = vmatpush1.msra.mxu0 %v2731
  %2848 = vmatprep.subr.mxu0 %v2736
  %2849 = vmatpush1.msra.mxu0 %v2735
  %2850 = vmatprep.subr.mxu0 %v2740
  %2851 = vmatpush1.msra.mxu0 %v2739
  %2852 = vmatprep.subr.mxu0 %v2744
  %2853 = vmatpush1.msra.mxu0 %v2743
  %2854 = vmatprep.subr.mxu0 0.0
  %2855 = vmatpush1.msra.mxu0 0.0
  %2856 = vmatprep.subr.mxu0 0.0
  %2857 = vmatpush1.msra.mxu0 0.0
  %2858 = vmatprep.subr.mxu0 0.0
  %2859 = vmatpush1.msra.mxu0 0.0
  %2860 = vmatprep.subr.mxu0 0.0
  %2861 = vmatpush1.msra.mxu0 0.0
  %2862 = vmatprep.subr.mxu0 0.0
  %2863 = vmatpush1.msra.mxu0 0.0
  %2864 = vmatprep.subr.mxu0 0.0
  %2865 = vmatpush1.msra.mxu0 0.0
  %2866 = vmatprep.subr.mxu0 0.0
  %2867 = vmatpush1.msra.mxu0 0.0
  %2868 = vmatprep.subr.mxu0 0.0
  %2869 = vmatpush1.msra.mxu0 0.0
  %2870 = vmatprep.subr.mxu0 0.0
  %2871 = vmatpush1.msra.mxu0 0.0
  %2872 = vmatprep.subr.mxu0 0.0
  %2873 = vmatpush1.msra.mxu0 0.0
  %2874 = vmatprep.subr.mxu0 0.0
  %2875 = vmatpush1.msra.mxu0 0.0
  %2876 = vmatprep.subr.mxu0 0.0
  %2877 = vmatpush1.msra.mxu0 0.0
  %2878 = vmatprep.subr.mxu0 0.0
  %2879 = vmatpush1.msra.mxu0 0.0
  %2880 = vmatprep.subr.mxu0 0.0
  %2881 = vmatpush1.msra.mxu0 0.0
  %2882 = vmatprep.subr.mxu0 0.0
  %2883 = vmatpush1.msra.mxu0 0.0
  %2884 = vmatprep.subr.mxu0 0.0
  %2885 = vmatpush1.msra.mxu0 0.0
  %2886 = vmatprep.subr.mxu0 0.0
  %2887 = vmatpush1.msra.mxu0 0.0
  %2888 = vmatprep.subr.mxu0 0.0
  %2889 = vmatpush1.msra.mxu0 0.0
  %2890 = vmatprep.subr.mxu0 0.0
  %2891 = vmatpush1.msra.mxu0 0.0
  %2892 = vmatprep.subr.mxu0 0.0
  %2893 = vmatpush1.msra.mxu0 0.0
  %2894 = vmatprep.subr.mxu0 0.0
  %2895 = vmatpush1.msra.mxu0 0.0
  %2896 = vmatprep.subr.mxu0 0.0
  %2897 = vmatpush1.msra.mxu0 0.0
  %2898 = vmatprep.subr.mxu0 0.0
  %2899 = vmatpush1.msra.mxu0 0.0
  %2900 = vmatprep.subr.mxu0 0.0
  %2901 = vmatpush1.msra.mxu0 0.0
  %2902 = vmatprep.subr.mxu0 0.0
  %2903 = vmatpush1.msra.mxu0 0.0
  %2904 = vmatprep.subr.mxu0 0.0
  %2905 = vmatpush1.msra.mxu0 0.0
  %2906 = vmatprep.subr.mxu0 0.0
  %2907 = vmatpush1.msra.mxu0 0.0
  %2908 = vmatprep.subr.mxu0 0.0
  %2909 = vmatpush1.msra.mxu0 0.0
  %2910 = vmatprep.mubr.f32.mxu0 0.0
  %2911 = vmatmul.mubr.f32.gmra.mrb[0].mxu0 %v2746
  %v2912 = vpop.f32.mrb[0].mxu0
  %v2913 = vadd.f32 0.0, %v2912
  %v2914 = vpop.f32.mrb[0].mxu0
  %v2915 = vadd.f32 0.0, %v2914
  %2916 = vmatprep.mubr.f32.mxu0 0.0
  %2917 = vmatmul.mubr.f32.gmra.mrb[0].mxu0 %v2749
  %v2918 = vpop.f32.mrb[0].mxu0
  %v2919 = vadd.f32 0.0, %v2918
  %v2920 = vpop.f32.mrb[0].mxu0
  %v2921 = vadd.f32 0.0, %v2920
  %2922 = vmatprep.mubr.f32.mxu0 0.0
  %2923 = vmatmul.mubr.f32.gmra.mrb[0].mxu0 %v2752
  %v2924 = vpop.f32.mrb[0].mxu0
  %v2925 = vadd.f32 0.0, %v2924
  %v2926 = vpop.f32.mrb[0].mxu0
  %v2927 = vadd.f32 0.0, %v2926
  %2928 = vmatprep.mubr.f32.mxu0 0.0
  %2929 = vmatmul.mubr.f32.gmra.mrb[0].mxu0 %v2755
  %v2930 = vpop.f32.mrb[0].mxu0
  %v2931 = vadd.f32 0.0, %v2930
  %v2932 = vpop.f32.mrb[0].mxu0
  %v2933 = vadd.f32 0.0, %v2932
  %2934 = vdwg.mxu0
  %v2935 = vadd.f32 %v2660, %v2824
  %v2936 = vadd.f32 %v2661, %v2826
  %v2937 = vadd.f32 %v2662, %v2913
  %v2938 = vadd.f32 %v2663, %v2915
  %v2939 = vadd.f32 %v2664, %v2830
  %v2940 = vadd.f32 %v2665, %v2832
  %v2941 = vadd.f32 %v2666, %v2919
  %v2942 = vadd.f32 %v2667, %v2921
  %v2943 = vadd.f32 %v2668, %v2836
  %v2944 = vadd.f32 %v2669, %v2838
  %v2945 = vadd.f32 %v2670, %v2925
  %v2946 = vadd.f32 %v2671, %v2927
  %v2947 = vadd.f32 %v2672, %v2842
  %v2948 = vadd.f32 %v2673, %v2844
  %v2949 = vadd.f32 %v2674, %v2931
  %v2950 = vadd.f32 %v2675, %v2933
  %2951 = vrot.lane.b32.xlu0 %v1069, 120
  %v2952 = vpop.permute.xlu0 %2951
  %2953 = vrot.lane.b32.xlu0 %v1073, 120
  %v2954 = vpop.permute.xlu0 %2953
  %2955 = vrot.lane.b32.xlu0 %v1077, 120
  %v2956 = vpop.permute.xlu0 %2955
  %2957 = vrot.lane.b32.xlu0 %v1081, 120
  %v2958 = vpop.permute.xlu0 %2957
  %2959 = vrot.lane.b32.xlu0 %v1070, 120
  %v2960 = vpop.permute.xlu0 %2959
  %2961 = vrot.lane.b32.xlu0 %v1074, 120
  %v2962 = vpop.permute.xlu0 %2961
  %2963 = vrot.lane.b32.xlu0 %v1078, 120
  %v2964 = vpop.permute.xlu0 %2963
  %2965 = vrot.lane.b32.xlu0 %v1082, 120
  %v2966 = vpop.permute.xlu0 %2965
  %2967 = vrot.lane.b32.xlu0 %v1071, 120
  %v2968 = vpop.permute.xlu0 %2967
  %2969 = vrot.lane.b32.xlu0 %v1075, 120
  %v2970 = vpop.permute.xlu0 %2969
  %2971 = vrot.lane.b32.xlu0 %v1079, 120
  %v2972 = vpop.permute.xlu0 %2971
  %2973 = vrot.lane.b32.xlu0 %v1083, 120
  %v2974 = vpop.permute.xlu0 %2973
  %2975 = vrot.lane.b32.xlu0 %v1072, 120
  %v2976 = vpop.permute.xlu0 %2975
  %2977 = vrot.lane.b32.xlu0 %v1076, 120
  %v2978 = vpop.permute.xlu0 %2977
  %2979 = vrot.lane.b32.xlu0 %v1080, 120
  %v2980 = vpop.permute.xlu0 %2979
  %2981 = vrot.lane.b32.xlu0 %v1084, 120
  %v2982 = vpop.permute.xlu0 %2981
  %v2983 = vsel %vm417, %v2968, %v2976
  %v2984 = vsel %vm417, %v2970, %v2978
  %v2985 = vsel %vm417, %v2972, %v2980
  %v2986 = vsel %vm417, %v2974, %v2982
  %v2987 = vsel %vm417, %v2960, %v2968
  %v2988 = vsel %vm417, %v2962, %v2970
  %v2989 = vsel %vm417, %v2964, %v2972
  %v2990 = vsel %vm417, %v2966, %v2974
  %v2991 = vsel %vm417, %v2952, %v2960
  %v2992 = vsel %vm417, %v2954, %v2962
  %v2993 = vsel %vm417, %v2956, %v2964
  %v2994 = vsel %vm417, %v2958, %v2966
  %v2995 = vsel %vm417, %v2976, %v2952
  %v2996 = vsel %vm417, %v2978, %v2954
  %v2997 = vsel %vm417, %v2980, %v2956
  %v2998 = vsel %vm417, %v2982, %v2958
  %s2999 = scalar_lea.vmem %s17, 224
  %v3000 = vld [vmem:[%s2999] sm:$0xff]
  %v3001 = vld [vmem:[%s2999 + $0x8] sm:$0xff]
  %v3002 = vld [vmem:[%s2999 + $0x10] sm:$0xff]
  %v3003 = vld [vmem:[%s2999 + $0x18] sm:$0xff]
  %v3004 = vmul.f32 %v2991, %v426
  %v3005 = vmul.f32 %v2987, %v430
  %v3006 = vmul.f32 %v2983, %v434
  %v3007 = vmul.f32 %v2995, %v438
  %v3008 = vmul.f32 %v2992, %v426
  %v3009 = vmul.f32 %v2988, %v430
  %v3010 = vmul.f32 %v2984, %v434
  %v3011 = vmul.f32 %v2996, %v438
  %v3012 = vmul.f32 %v2993, %v426
  %v3013 = vmul.f32 %v2989, %v430
  %v3014 = vmul.f32 %v2985, %v434
  %v3015 = vmul.f32 %v2997, %v438
  %v3016 = vmul.f32 %v2994, %v426
  %v3017 = vmul.f32 %v2990, %v430
  %v3018 = vmul.f32 %v2986, %v434
  %v3019 = vmul.f32 %v2998, %v438
  %v3021 = vsel %vm1222, %v3000, 0
  %v3024 = vsel %vm1222, %v3001, 0
  %v3027 = vsel %vm1222, %v3002, 0
  %v3030 = vsel %vm1222, %v3003, 0
  %3032 = vmatprep.subr.mxu0 %v3005
  %3033 = vmatpush1.msra.mxu0 %v3004
  %3034 = vmatprep.subr.mxu0 %v3009
  %3035 = vmatpush1.msra.mxu0 %v3008
  %3036 = vmatprep.subr.mxu0 %v3013
  %3037 = vmatpush1.msra.mxu0 %v3012
  %3038 = vmatprep.subr.mxu0 %v3017
  %3039 = vmatpush1.msra.mxu0 %v3016
  %3040 = vmatprep.subr.mxu0 0.0
  %3041 = vmatpush1.msra.mxu0 0.0
  %3042 = vmatprep.subr.mxu0 0.0
  %3043 = vmatpush1.msra.mxu0 0.0
  %3044 = vmatprep.subr.mxu0 0.0
  %3045 = vmatpush1.msra.mxu0 0.0
  %3046 = vmatprep.subr.mxu0 0.0
  %3047 = vmatpush1.msra.mxu0 0.0
  %3048 = vmatprep.subr.mxu0 0.0
  %3049 = vmatpush1.msra.mxu0 0.0
  %3050 = vmatprep.subr.mxu0 0.0
  %3051 = vmatpush1.msra.mxu0 0.0
  %3052 = vmatprep.subr.mxu0 0.0
  %3053 = vmatpush1.msra.mxu0 0.0
  %3054 = vmatprep.subr.mxu0 0.0
  %3055 = vmatpush1.msra.mxu0 0.0
  %3056 = vmatprep.subr.mxu0 0.0
  %3057 = vmatpush1.msra.mxu0 0.0
  %3058 = vmatprep.subr.mxu0 0.0
  %3059 = vmatpush1.msra.mxu0 0.0
  %3060 = vmatprep.subr.mxu0 0.0
  %3061 = vmatpush1.msra.mxu0 0.0
  %3062 = vmatprep.subr.mxu0 0.0
  %3063 = vmatpush1.msra.mxu0 0.0
  %3064 = vmatprep.subr.mxu0 0.0
  %3065 = vmatpush1.msra.mxu0 0.0
  %3066 = vmatprep.subr.mxu0 0.0
  %3067 = vmatpush1.msra.mxu0 0.0
  %3068 = vmatprep.subr.mxu0 0.0
  %3069 = vmatpush1.msra.mxu0 0.0
  %3070 = vmatprep.subr.mxu0 0.0
  %3071 = vmatpush1.msra.mxu0 0.0
  %3072 = vmatprep.subr.mxu0 0.0
  %3073 = vmatpush1.msra.mxu0 0.0
  %3074 = vmatprep.subr.mxu0 0.0
  %3075 = vmatpush1.msra.mxu0 0.0
  %3076 = vmatprep.subr.mxu0 0.0
  %3077 = vmatpush1.msra.mxu0 0.0
  %3078 = vmatprep.subr.mxu0 0.0
  %3079 = vmatpush1.msra.mxu0 0.0
  %3080 = vmatprep.subr.mxu0 0.0
  %3081 = vmatpush1.msra.mxu0 0.0
  %3082 = vmatprep.subr.mxu0 0.0
  %3083 = vmatpush1.msra.mxu0 0.0
  %3084 = vmatprep.subr.mxu0 0.0
  %3085 = vmatpush1.msra.mxu0 0.0
  %3086 = vmatprep.subr.mxu0 0.0
  %3087 = vmatpush1.msra.mxu0 0.0
  %3088 = vmatprep.subr.mxu0 0.0
  %3089 = vmatpush1.msra.mxu0 0.0
  %3090 = vmatprep.subr.mxu0 0.0
  %3091 = vmatpush1.msra.mxu0 0.0
  %3092 = vmatprep.subr.mxu0 0.0
  %3093 = vmatpush1.msra.mxu0 0.0
  %3094 = vmatprep.subr.mxu0 0.0
  %3095 = vmatpush1.msra.mxu0 0.0
  %3096 = vmatprep.mubr.f32.mxu0 0.0
  %3097 = vmatmul.mubr.f32.gmra.mrb[0].mxu0 %v3021
  %v3098 = vpop.f32.mrb[0].mxu0
  %v3099 = vadd.f32 0.0, %v3098
  %v3100 = vpop.f32.mrb[0].mxu0
  %v3101 = vadd.f32 0.0, %v3100
  %3102 = vmatprep.mubr.f32.mxu0 0.0
  %3103 = vmatmul.mubr.f32.gmra.mrb[0].mxu0 %v3024
  %v3104 = vpop.f32.mrb[0].mxu0
  %v3105 = vadd.f32 0.0, %v3104
  %v3106 = vpop.f32.mrb[0].mxu0
  %v3107 = vadd.f32 0.0, %v3106
  %3108 = vmatprep.mubr.f32.mxu0 0.0
  %3109 = vmatmul.mubr.f32.gmra.mrb[0].mxu0 %v3027
  %v3110 = vpop.f32.mrb[0].mxu0
  %v3111 = vadd.f32 0.0, %v3110
  %v3112 = vpop.f32.mrb[0].mxu0
  %v3113 = vadd.f32 0.0, %v3112
  %3114 = vmatprep.mubr.f32.mxu0 0.0
  %3115 = vmatmul.mubr.f32.gmra.mrb[0].mxu0 %v3030
  %v3116 = vpop.f32.mrb[0].mxu0
  %v3117 = vadd.f32 0.0, %v3116
  %v3118 = vpop.f32.mrb[0].mxu0
  %v3119 = vadd.f32 0.0, %v3118
  %3120 = vdwg.mxu0
  %3121 = vmatprep.subr.mxu0 %v3007
  %3122 = vmatpush1.msra.mxu0 %v3006
  %3123 = vmatprep.subr.mxu0 %v3011
  %3124 = vmatpush1.msra.mxu0 %v3010
  %3125 = vmatprep.subr.mxu0 %v3015
  %3126 = vmatpush1.msra.mxu0 %v3014
  %3127 = vmatprep.subr.mxu0 %v3019
  %3128 = vmatpush1.msra.mxu0 %v3018
  %3129 = vmatprep.subr.mxu0 0.0
  %3130 = vmatpush1.msra.mxu0 0.0
  %3131 = vmatprep.subr.mxu0 0.0
  %3132 = vmatpush1.msra.mxu0 0.0
  %3133 = vmatprep.subr.mxu0 0.0
  %3134 = vmatpush1.msra.mxu0 0.0
  %3135 = vmatprep.subr.mxu0 0.0
  %3136 = vmatpush1.msra.mxu0 0.0
  %3137 = vmatprep.subr.mxu0 0.0
  %3138 = vmatpush1.msra.mxu0 0.0
  %3139 = vmatprep.subr.mxu0 0.0
  %3140 = vmatpush1.msra.mxu0 0.0
  %3141 = vmatprep.subr.mxu0 0.0
  %3142 = vmatpush1.msra.mxu0 0.0
  %3143 = vmatprep.subr.mxu0 0.0
  %3144 = vmatpush1.msra.mxu0 0.0
  %3145 = vmatprep.subr.mxu0 0.0
  %3146 = vmatpush1.msra.mxu0 0.0
  %3147 = vmatprep.subr.mxu0 0.0
  %3148 = vmatpush1.msra.mxu0 0.0
  %3149 = vmatprep.subr.mxu0 0.0
  %3150 = vmatpush1.msra.mxu0 0.0
  %3151 = vmatprep.subr.mxu0 0.0
  %3152 = vmatpush1.msra.mxu0 0.0
  %3153 = vmatprep.subr.mxu0 0.0
  %3154 = vmatpush1.msra.mxu0 0.0
  %3155 = vmatprep.subr.mxu0 0.0
  %3156 = vmatpush1.msra.mxu0 0.0
  %3157 = vmatprep.subr.mxu0 0.0
  %3158 = vmatpush1.msra.mxu0 0.0
  %3159 = vmatprep.subr.mxu0 0.0
  %3160 = vmatpush1.msra.mxu0 0.0
  %3161 = vmatprep.subr.mxu0 0.0
  %3162 = vmatpush1.msra.mxu0 0.0
  %3163 = vmatprep.subr.mxu0 0.0
  %3164 = vmatpush1.msra.mxu0 0.0
  %3165 = vmatprep.subr.mxu0 0.0
  %3166 = vmatpush1.msra.mxu0 0.0
  %3167 = vmatprep.subr.mxu0 0.0
  %3168 = vmatpush1.msra.mxu0 0.0
  %3169 = vmatprep.subr.mxu0 0.0
  %3170 = vmatpush1.msra.mxu0 0.0
  %3171 = vmatprep.subr.mxu0 0.0
  %3172 = vmatpush1.msra.mxu0 0.0
  %3173 = vmatprep.subr.mxu0 0.0
  %3174 = vmatpush1.msra.mxu0 0.0
  %3175 = vmatprep.subr.mxu0 0.0
  %3176 = vmatpush1.msra.mxu0 0.0
  %3177 = vmatprep.subr.mxu0 0.0
  %3178 = vmatpush1.msra.mxu0 0.0
  %3179 = vmatprep.subr.mxu0 0.0
  %3180 = vmatpush1.msra.mxu0 0.0
  %3181 = vmatprep.subr.mxu0 0.0
  %3182 = vmatpush1.msra.mxu0 0.0
  %3183 = vmatprep.subr.mxu0 0.0
  %3184 = vmatpush1.msra.mxu0 0.0
  %3185 = vmatprep.mubr.f32.mxu0 0.0
  %3186 = vmatmul.mubr.f32.gmra.mrb[0].mxu0 %v3021
  %v3187 = vpop.f32.mrb[0].mxu0
  %v3188 = vadd.f32 0.0, %v3187
  %v3189 = vpop.f32.mrb[0].mxu0
  %v3190 = vadd.f32 0.0, %v3189
  %3191 = vmatprep.mubr.f32.mxu0 0.0
  %3192 = vmatmul.mubr.f32.gmra.mrb[0].mxu0 %v3024
  %v3193 = vpop.f32.mrb[0].mxu0
  %v3194 = vadd.f32 0.0, %v3193
  %v3195 = vpop.f32.mrb[0].mxu0
  %v3196 = vadd.f32 0.0, %v3195
  %3197 = vmatprep.mubr.f32.mxu0 0.0
  %3198 = vmatmul.mubr.f32.gmra.mrb[0].mxu0 %v3027
  %v3199 = vpop.f32.mrb[0].mxu0
  %v3200 = vadd.f32 0.0, %v3199
  %v3201 = vpop.f32.mrb[0].mxu0
  %v3202 = vadd.f32 0.0, %v3201
  %3203 = vmatprep.mubr.f32.mxu0 0.0
  %3204 = vmatmul.mubr.f32.gmra.mrb[0].mxu0 %v3030
  %v3205 = vpop.f32.mrb[0].mxu0
  %v3206 = vadd.f32 0.0, %v3205
  %v3207 = vpop.f32.mrb[0].mxu0
  %v3208 = vadd.f32 0.0, %v3207
  %3209 = vdwg.mxu0
  %v3210 = vadd.f32 %v2935, %v3099
  %v3211 = vadd.f32 %v2936, %v3101
  %v3212 = vadd.f32 %v2937, %v3188
  %v3213 = vadd.f32 %v2938, %v3190
  %v3214 = vadd.f32 %v2939, %v3105
  %v3215 = vadd.f32 %v2940, %v3107
  %v3216 = vadd.f32 %v2941, %v3194
  %v3217 = vadd.f32 %v2942, %v3196
  %v3218 = vadd.f32 %v2943, %v3111
  %v3219 = vadd.f32 %v2944, %v3113
  %v3220 = vadd.f32 %v2945, %v3200
  %v3221 = vadd.f32 %v2946, %v3202
  %v3222 = vadd.f32 %v2947, %v3117
  %v3223 = vadd.f32 %v2948, %v3119
  %v3224 = vadd.f32 %v2949, %v3206
  %v3225 = vadd.f32 %v2950, %v3208
  %3226 = vrot.lane.b32.xlu0 %v1069, 119
  %v3227 = vpop.permute.xlu0 %3226
  %3228 = vrot.lane.b32.xlu0 %v1073, 119
  %v3229 = vpop.permute.xlu0 %3228
  %3230 = vrot.lane.b32.xlu0 %v1077, 119
  %v3231 = vpop.permute.xlu0 %3230
  %3232 = vrot.lane.b32.xlu0 %v1081, 119
  %v3233 = vpop.permute.xlu0 %3232
  %3234 = vrot.lane.b32.xlu0 %v1070, 119
  %v3235 = vpop.permute.xlu0 %3234
  %3236 = vrot.lane.b32.xlu0 %v1074, 119
  %v3237 = vpop.permute.xlu0 %3236
  %3238 = vrot.lane.b32.xlu0 %v1078, 119
  %v3239 = vpop.permute.xlu0 %3238
  %3240 = vrot.lane.b32.xlu0 %v1082, 119
  %v3241 = vpop.permute.xlu0 %3240
  %3242 = vrot.lane.b32.xlu0 %v1071, 119
  %v3243 = vpop.permute.xlu0 %3242
  %3244 = vrot.lane.b32.xlu0 %v1075, 119
  %v3245 = vpop.permute.xlu0 %3244
  %3246 = vrot.lane.b32.xlu0 %v1079, 119
  %v3247 = vpop.permute.xlu0 %3246
  %3248 = vrot.lane.b32.xlu0 %v1083, 119
  %v3249 = vpop.permute.xlu0 %3248
  %3250 = vrot.lane.b32.xlu0 %v1072, 119
  %v3251 = vpop.permute.xlu0 %3250
  %3252 = vrot.lane.b32.xlu0 %v1076, 119
  %v3253 = vpop.permute.xlu0 %3252
  %3254 = vrot.lane.b32.xlu0 %v1080, 119
  %v3255 = vpop.permute.xlu0 %3254
  %3256 = vrot.lane.b32.xlu0 %v1084, 119
  %v3257 = vpop.permute.xlu0 %3256
  %v3258 = vsel %vm458, %v3243, %v3251
  %v3259 = vsel %vm458, %v3245, %v3253
  %v3260 = vsel %vm458, %v3247, %v3255
  %v3261 = vsel %vm458, %v3249, %v3257
  %v3262 = vsel %vm458, %v3235, %v3243
  %v3263 = vsel %vm458, %v3237, %v3245
  %v3264 = vsel %vm458, %v3239, %v3247
  %v3265 = vsel %vm458, %v3241, %v3249
  %v3266 = vsel %vm458, %v3227, %v3235
  %v3267 = vsel %vm458, %v3229, %v3237
  %v3268 = vsel %vm458, %v3231, %v3239
  %v3269 = vsel %vm458, %v3233, %v3241
  %v3270 = vsel %vm458, %v3251, %v3227
  %v3271 = vsel %vm458, %v3253, %v3229
  %v3272 = vsel %vm458, %v3255, %v3231
  %v3273 = vsel %vm458, %v3257, %v3233
  %s3274 = scalar_lea.vmem %s17, 256
  %v3275 = vld [vmem:[%s3274] sm:$0xff]
  %v3276 = vld [vmem:[%s3274 + $0x8] sm:$0xff]
  %v3277 = vld [vmem:[%s3274 + $0x10] sm:$0xff]
  %v3278 = vld [vmem:[%s3274 + $0x18] sm:$0xff]
  %v3279 = vmul.f32 %v3266, %v467
  %v3280 = vmul.f32 %v3262, %v471
  %v3281 = vmul.f32 %v3258, %v475
  %v3282 = vmul.f32 %v3270, %v479
  %v3283 = vmul.f32 %v3267, %v467
  %v3284 = vmul.f32 %v3263, %v471
  %v3285 = vmul.f32 %v3259, %v475
  %v3286 = vmul.f32 %v3271, %v479
  %v3287 = vmul.f32 %v3268, %v467
  %v3288 = vmul.f32 %v3264, %v471
  %v3289 = vmul.f32 %v3260, %v475
  %v3290 = vmul.f32 %v3272, %v479
  %v3291 = vmul.f32 %v3269, %v467
  %v3292 = vmul.f32 %v3265, %v471
  %v3293 = vmul.f32 %v3261, %v475
  %v3294 = vmul.f32 %v3273, %v479
  %v3296 = vsel %vm1222, %v3275, 0
  %v3299 = vsel %vm1222, %v3276, 0
  %v3302 = vsel %vm1222, %v3277, 0
  %v3305 = vsel %vm1222, %v3278, 0
  %3307 = vmatprep.subr.mxu0 %v3280
  %3308 = vmatpush1.msra.mxu0 %v3279
  %3309 = vmatprep.subr.mxu0 %v3284
  %3310 = vmatpush1.msra.mxu0 %v3283
  %3311 = vmatprep.subr.mxu0 %v3288
  %3312 = vmatpush1.msra.mxu0 %v3287
  %3313 = vmatprep.subr.mxu0 %v3292
  %3314 = vmatpush1.msra.mxu0 %v3291
  %3315 = vmatprep.subr.mxu0 0.0
  %3316 = vmatpush1.msra.mxu0 0.0
  %3317 = vmatprep.subr.mxu0 0.0
  %3318 = vmatpush1.msra.mxu0 0.0
  %3319 = vmatprep.subr.mxu0 0.0
  %3320 = vmatpush1.msra.mxu0 0.0
  %3321 = vmatprep.subr.mxu0 0.0
  %3322 = vmatpush1.msra.mxu0 0.0
  %3323 = vmatprep.subr.mxu0 0.0
  %3324 = vmatpush1.msra.mxu0 0.0
  %3325 = vmatprep.subr.mxu0 0.0
  %3326 = vmatpush1.msra.mxu0 0.0
  %3327 = vmatprep.subr.mxu0 0.0
  %3328 = vmatpush1.msra.mxu0 0.0
  %3329 = vmatprep.subr.mxu0 0.0
  %3330 = vmatpush1.msra.mxu0 0.0
  %3331 = vmatprep.subr.mxu0 0.0
  %3332 = vmatpush1.msra.mxu0 0.0
  %3333 = vmatprep.subr.mxu0 0.0
  %3334 = vmatpush1.msra.mxu0 0.0
  %3335 = vmatprep.subr.mxu0 0.0
  %3336 = vmatpush1.msra.mxu0 0.0
  %3337 = vmatprep.subr.mxu0 0.0
  %3338 = vmatpush1.msra.mxu0 0.0
  %3339 = vmatprep.subr.mxu0 0.0
  %3340 = vmatpush1.msra.mxu0 0.0
  %3341 = vmatprep.subr.mxu0 0.0
  %3342 = vmatpush1.msra.mxu0 0.0
  %3343 = vmatprep.subr.mxu0 0.0
  %3344 = vmatpush1.msra.mxu0 0.0
  %3345 = vmatprep.subr.mxu0 0.0
  %3346 = vmatpush1.msra.mxu0 0.0
  %3347 = vmatprep.subr.mxu0 0.0
  %3348 = vmatpush1.msra.mxu0 0.0
  %3349 = vmatprep.subr.mxu0 0.0
  %3350 = vmatpush1.msra.mxu0 0.0
  %3351 = vmatprep.subr.mxu0 0.0
  %3352 = vmatpush1.msra.mxu0 0.0
  %3353 = vmatprep.subr.mxu0 0.0
  %3354 = vmatpush1.msra.mxu0 0.0
  %3355 = vmatprep.subr.mxu0 0.0
  %3356 = vmatpush1.msra.mxu0 0.0
  %3357 = vmatprep.subr.mxu0 0.0
  %3358 = vmatpush1.msra.mxu0 0.0
  %3359 = vmatprep.subr.mxu0 0.0
  %3360 = vmatpush1.msra.mxu0 0.0
  %3361 = vmatprep.subr.mxu0 0.0
  %3362 = vmatpush1.msra.mxu0 0.0
  %3363 = vmatprep.subr.mxu0 0.0
  %3364 = vmatpush1.msra.mxu0 0.0
  %3365 = vmatprep.subr.mxu0 0.0
  %3366 = vmatpush1.msra.mxu0 0.0
  %3367 = vmatprep.subr.mxu0 0.0
  %3368 = vmatpush1.msra.mxu0 0.0
  %3369 = vmatprep.subr.mxu0 0.0
  %3370 = vmatpush1.msra.mxu0 0.0
  %3371 = vmatprep.mubr.f32.mxu0 0.0
  %3372 = vmatmul.mubr.f32.gmra.mrb[0].mxu0 %v3296
  %v3373 = vpop.f32.mrb[0].mxu0
  %v3374 = vadd.f32 0.0, %v3373
  %v3375 = vpop.f32.mrb[0].mxu0
  %v3376 = vadd.f32 0.0, %v3375
  %3377 = vmatprep.mubr.f32.mxu0 0.0
  %3378 = vmatmul.mubr.f32.gmra.mrb[0].mxu0 %v3299
  %v3379 = vpop.f32.mrb[0].mxu0
  %v3380 = vadd.f32 0.0, %v3379
  %v3381 = vpop.f32.mrb[0].mxu0
  %v3382 = vadd.f32 0.0, %v3381
  %3383 = vmatprep.mubr.f32.mxu0 0.0
  %3384 = vmatmul.mubr.f32.gmra.mrb[0].mxu0 %v3302
  %v3385 = vpop.f32.mrb[0].mxu0
  %v3386 = vadd.f32 0.0, %v3385
  %v3387 = vpop.f32.mrb[0].mxu0
  %v3388 = vadd.f32 0.0, %v3387
  %3389 = vmatprep.mubr.f32.mxu0 0.0
  %3390 = vmatmul.mubr.f32.gmra.mrb[0].mxu0 %v3305
  %v3391 = vpop.f32.mrb[0].mxu0
  %v3392 = vadd.f32 0.0, %v3391
  %v3393 = vpop.f32.mrb[0].mxu0
  %v3394 = vadd.f32 0.0, %v3393
  %3395 = vdwg.mxu0
  %3396 = vmatprep.subr.mxu0 %v3282
  %3397 = vmatpush1.msra.mxu0 %v3281
  %3398 = vmatprep.subr.mxu0 %v3286
  %3399 = vmatpush1.msra.mxu0 %v3285
  %3400 = vmatprep.subr.mxu0 %v3290
  %3401 = vmatpush1.msra.mxu0 %v3289
  %3402 = vmatprep.subr.mxu0 %v3294
  %3403 = vmatpush1.msra.mxu0 %v3293
  %3404 = vmatprep.subr.mxu0 0.0
  %3405 = vmatpush1.msra.mxu0 0.0
  %3406 = vmatprep.subr.mxu0 0.0
  %3407 = vmatpush1.msra.mxu0 0.0
  %3408 = vmatprep.subr.mxu0 0.0
  %3409 = vmatpush1.msra.mxu0 0.0
  %3410 = vmatprep.subr.mxu0 0.0
  %3411 = vmatpush1.msra.mxu0 0.0
  %3412 = vmatprep.subr.mxu0 0.0
  %3413 = vmatpush1.msra.mxu0 0.0
  %3414 = vmatprep.subr.mxu0 0.0
  %3415 = vmatpush1.msra.mxu0 0.0
  %3416 = vmatprep.subr.mxu0 0.0
  %3417 = vmatpush1.msra.mxu0 0.0
  %3418 = vmatprep.subr.mxu0 0.0
  %3419 = vmatpush1.msra.mxu0 0.0
  %3420 = vmatprep.subr.mxu0 0.0
  %3421 = vmatpush1.msra.mxu0 0.0
  %3422 = vmatprep.subr.mxu0 0.0
  %3423 = vmatpush1.msra.mxu0 0.0
  %3424 = vmatprep.subr.mxu0 0.0
  %3425 = vmatpush1.msra.mxu0 0.0
  %3426 = vmatprep.subr.mxu0 0.0
  %3427 = vmatpush1.msra.mxu0 0.0
  %3428 = vmatprep.subr.mxu0 0.0
  %3429 = vmatpush1.msra.mxu0 0.0
  %3430 = vmatprep.subr.mxu0 0.0
  %3431 = vmatpush1.msra.mxu0 0.0
  %3432 = vmatprep.subr.mxu0 0.0
  %3433 = vmatpush1.msra.mxu0 0.0
  %3434 = vmatprep.subr.mxu0 0.0
  %3435 = vmatpush1.msra.mxu0 0.0
  %3436 = vmatprep.subr.mxu0 0.0
  %3437 = vmatpush1.msra.mxu0 0.0
  %3438 = vmatprep.subr.mxu0 0.0
  %3439 = vmatpush1.msra.mxu0 0.0
  %3440 = vmatprep.subr.mxu0 0.0
  %3441 = vmatpush1.msra.mxu0 0.0
  %3442 = vmatprep.subr.mxu0 0.0
  %3443 = vmatpush1.msra.mxu0 0.0
  %3444 = vmatprep.subr.mxu0 0.0
  %3445 = vmatpush1.msra.mxu0 0.0
  %3446 = vmatprep.subr.mxu0 0.0
  %3447 = vmatpush1.msra.mxu0 0.0
  %3448 = vmatprep.subr.mxu0 0.0
  %3449 = vmatpush1.msra.mxu0 0.0
  %3450 = vmatprep.subr.mxu0 0.0
  %3451 = vmatpush1.msra.mxu0 0.0
  %3452 = vmatprep.subr.mxu0 0.0
  %3453 = vmatpush1.msra.mxu0 0.0
  %3454 = vmatprep.subr.mxu0 0.0
  %3455 = vmatpush1.msra.mxu0 0.0
  %3456 = vmatprep.subr.mxu0 0.0
  %3457 = vmatpush1.msra.mxu0 0.0
  %3458 = vmatprep.subr.mxu0 0.0
  %3459 = vmatpush1.msra.mxu0 0.0
  %3460 = vmatprep.mubr.f32.mxu0 0.0
  %3461 = vmatmul.mubr.f32.gmra.mrb[0].mxu0 %v3296
  %v3462 = vpop.f32.mrb[0].mxu0
  %v3463 = vadd.f32 0.0, %v3462
  %v3464 = vpop.f32.mrb[0].mxu0
  %v3465 = vadd.f32 0.0, %v3464
  %3466 = vmatprep.mubr.f32.mxu0 0.0
  %3467 = vmatmul.mubr.f32.gmra.mrb[0].mxu0 %v3299
  %v3468 = vpop.f32.mrb[0].mxu0
  %v3469 = vadd.f32 0.0, %v3468
  %v3470 = vpop.f32.mrb[0].mxu0
  %v3471 = vadd.f32 0.0, %v3470
  %3472 = vmatprep.mubr.f32.mxu0 0.0
  %3473 = vmatmul.mubr.f32.gmra.mrb[0].mxu0 %v3302
  %v3474 = vpop.f32.mrb[0].mxu0
  %v3475 = vadd.f32 0.0, %v3474
  %v3476 = vpop.f32.mrb[0].mxu0
  %v3477 = vadd.f32 0.0, %v3476
  %3478 = vmatprep.mubr.f32.mxu0 0.0
  %3479 = vmatmul.mubr.f32.gmra.mrb[0].mxu0 %v3305
  %v3480 = vpop.f32.mrb[0].mxu0
  %v3481 = vadd.f32 0.0, %v3480
  %v3482 = vpop.f32.mrb[0].mxu0
  %v3483 = vadd.f32 0.0, %v3482
  %3484 = vdwg.mxu0
  %v3485 = vadd.f32 %v3210, %v3374
  %v3486 = vadd.f32 %v3211, %v3376
  %v3487 = vadd.f32 %v3212, %v3463
  %v3488 = vadd.f32 %v3213, %v3465
  %v3489 = vadd.f32 %v3214, %v3380
  %v3490 = vadd.f32 %v3215, %v3382
  %v3491 = vadd.f32 %v3216, %v3469
  %v3492 = vadd.f32 %v3217, %v3471
  %v3493 = vadd.f32 %v3218, %v3386
  %v3494 = vadd.f32 %v3219, %v3388
  %v3495 = vadd.f32 %v3220, %v3475
  %v3496 = vadd.f32 %v3221, %v3477
  %v3497 = vadd.f32 %v3222, %v3392
  %v3498 = vadd.f32 %v3223, %v3394
  %v3499 = vadd.f32 %v3224, %v3481
  %v3500 = vadd.f32 %v3225, %v3483
  %v3501 = vld [vmem:[%s19] sm:$0xff]
  %v3502 = vld [vmem:[%s19 + $0x8] sm:$0xff]
  %v3503 = vld [vmem:[%s19 + $0x10] sm:$0xff]
  %v3504 = vld [vmem:[%s19 + $0x18] sm:$0xff]
  %3506 = vset.pattern.permute.xlu0 0
  %3507 = vperm.xlu0 %3506, %v3501
  %v3508 = vpop.permute.xlu0 %3507
  %3511 = vset.pattern.permute.xlu0 0
  %3512 = vperm.xlu0 %3511, %v3502
  %v3513 = vpop.permute.xlu0 %3512
  %3516 = vset.pattern.permute.xlu0 0
  %3517 = vperm.xlu0 %3516, %v3503
  %v3518 = vpop.permute.xlu0 %3517
  %3521 = vset.pattern.permute.xlu0 0
  %3522 = vperm.xlu0 %3521, %v3504
  %v3523 = vpop.permute.xlu0 %3522
  %v3525 = vadd.f32 %v3485, %v3508
  %v3526 = vadd.f32 %v3486, %v3508
  %v3527 = vadd.f32 %v3487, %v3508
  %v3528 = vadd.f32 %v3488, %v3508
  %v3529 = vadd.f32 %v3489, %v3513
  %v3530 = vadd.f32 %v3490, %v3513
  %v3531 = vadd.f32 %v3491, %v3513
  %v3532 = vadd.f32 %v3492, %v3513
  %v3533 = vadd.f32 %v3493, %v3518
  %v3534 = vadd.f32 %v3494, %v3518
  %v3535 = vadd.f32 %v3495, %v3518
  %v3536 = vadd.f32 %v3496, %v3518
  %v3537 = vadd.f32 %v3497, %v3523
  %v3538 = vadd.f32 %v3498, %v3523
  %v3539 = vadd.f32 %v3499, %v3523
  %v3540 = vadd.f32 %v3500, %v3523
  %v3541 = vmax.f32 %v3525, 0.0
  %v3542 = vmax.f32 %v3526, 0.0
  %v3543 = vmax.f32 %v3527, 0.0
  %v3544 = vmax.f32 %v3528, 0.0
  %v3545 = vmax.f32 %v3529, 0.0
  %v3546 = vmax.f32 %v3530, 0.0
  %v3547 = vmax.f32 %v3531, 0.0
  %v3548 = vmax.f32 %v3532, 0.0
  %v3549 = vmax.f32 %v3533, 0.0
  %v3550 = vmax.f32 %v3534, 0.0
  %v3551 = vmax.f32 %v3535, 0.0
  %v3552 = vmax.f32 %v3536, 0.0
  %v3553 = vmax.f32 %v3537, 0.0
  %v3554 = vmax.f32 %v3538, 0.0
  %v3555 = vmax.f32 %v3539, 0.0
  %v3556 = vmax.f32 %v3540, 0.0
  %v3557 = vld [vmem:[%s7] sm:$0xff]
  %v3558 = vld [vmem:[%s7 + $0x8] sm:$0xff]
  %v3559 = vld [vmem:[%s7 + $0x10] sm:$0xff]
  %v3560 = vld [vmem:[%s7 + $0x18] sm:$0xff]
  %3561 = vmatprep.subr.mxu0 %v3542
  %3562 = vmatpush1.xpose.msra.mxu0 %v3541
  %3563 = vmatprep.subr.mxu0 %v3546
  %3564 = vmatpush1.xpose.msra.mxu0 %v3545
  %3565 = vmatprep.subr.mxu0 %v3550
  %3566 = vmatpush1.xpose.msra.mxu0 %v3549
  %3567 = vmatprep.subr.mxu0 %v3554
  %3568 = vmatpush1.xpose.msra.mxu0 %v3553
  %3569 = vmatprep.subr.mxu0 0.0
  %3570 = vmatpush1.xpose.msra.mxu0 0.0
  %3571 = vmatprep.subr.mxu0 0.0
  %3572 = vmatpush1.xpose.msra.mxu0 0.0
  %3573 = vmatprep.subr.mxu0 0.0
  %3574 = vmatpush1.xpose.msra.mxu0 0.0
  %3575 = vmatprep.subr.mxu0 0.0
  %3576 = vmatpush1.xpose.msra.mxu0 0.0
  %3577 = vmatprep.subr.mxu0 0.0
  %3578 = vmatpush1.xpose.msra.mxu0 0.0
  %3579 = vmatprep.subr.mxu0 0.0
  %3580 = vmatpush1.xpose.msra.mxu0 0.0
  %3581 = vmatprep.subr.mxu0 0.0
  %3582 = vmatpush1.xpose.msra.mxu0 0.0
  %3583 = vmatprep.subr.mxu0 0.0
  %3584 = vmatpush1.xpose.msra.mxu0 0.0
  %3585 = vmatprep.subr.mxu0 0.0
  %3586 = vmatpush1.xpose.msra.mxu0 0.0
  %3587 = vmatprep.subr.mxu0 0.0
  %3588 = vmatpush1.xpose.msra.mxu0 0.0
  %3589 = vmatprep.subr.mxu0 0.0
  %3590 = vmatpush1.xpose.msra.mxu0 0.0
  %3591 = vmatprep.subr.mxu0 0.0
  %3592 = vmatpush1.xpose.msra.mxu0 0.0
  %3593 = vmatprep.subr.mxu0 0.0
  %3594 = vmatpush1.xpose.msra.mxu0 0.0
  %3595 = vmatprep.subr.mxu0 0.0
  %3596 = vmatpush1.xpose.msra.mxu0 0.0
  %3597 = vmatprep.subr.mxu0 0.0
  %3598 = vmatpush1.xpose.msra.mxu0 0.0
  %3599 = vmatprep.subr.mxu0 0.0
  %3600 = vmatpush1.xpose.msra.mxu0 0.0
  %3601 = vmatprep.subr.mxu0 0.0
  %3602 = vmatpush1.xpose.msra.mxu0 0.0
  %3603 = vmatprep.subr.mxu0 0.0
  %3604 = vmatpush1.xpose.msra.mxu0 0.0
  %3605 = vmatprep.subr.mxu0 0.0
  %3606 = vmatpush1.xpose.msra.mxu0 0.0
  %3607 = vmatprep.subr.mxu0 0.0
  %3608 = vmatpush1.xpose.msra.mxu0 0.0
  %3609 = vmatprep.subr.mxu0 0.0
  %3610 = vmatpush1.xpose.msra.mxu0 0.0
  %3611 = vmatprep.subr.mxu0 0.0
  %3612 = vmatpush1.xpose.msra.mxu0 0.0
  %3613 = vmatprep.subr.mxu0 0.0
  %3614 = vmatpush1.xpose.msra.mxu0 0.0
  %3615 = vmatprep.subr.mxu0 0.0
  %3616 = vmatpush1.xpose.msra.mxu0 0.0
  %3617 = vmatprep.subr.mxu0 0.0
  %3618 = vmatpush1.xpose.msra.mxu0 0.0
  %3619 = vmatprep.subr.mxu0 0.0
  %3620 = vmatpush1.xpose.msra.mxu0 0.0
  %3621 = vmatprep.subr.mxu0 0.0
  %3622 = vmatpush1.xpose.msra.mxu0 0.0
  %3623 = vmatprep.subr.mxu0 0.0
  %3624 = vmatpush1.xpose.msra.mxu0 0.0
  %3625 = vmatprep.mubr.f32.mxu0 %v3558
  %3626 = vmatmul.mubr.f32.gmra.mrb[0].mxu0 %v3557
  %v3627 = vpop.f32.mrb[0].mxu0
  %v3628 = vadd.f32 0.0, %v3627
  %v3629 = vpop.f32.mrb[0].mxu0
  %3630 = vdwg.mxu0
  %3631 = vmatprep.subr.mxu0 %v3544
  %3632 = vmatpush1.xpose.msra.mxu0 %v3543
  %3633 = vmatprep.subr.mxu0 %v3548
  %3634 = vmatpush1.xpose.msra.mxu0 %v3547
  %3635 = vmatprep.subr.mxu0 %v3552
  %3636 = vmatpush1.xpose.msra.mxu0 %v3551
  %3637 = vmatprep.subr.mxu0 %v3556
  %3638 = vmatpush1.xpose.msra.mxu0 %v3555
  %3639 = vmatprep.subr.mxu0 0.0
  %3640 = vmatpush1.xpose.msra.mxu0 0.0
  %3641 = vmatprep.subr.mxu0 0.0
  %3642 = vmatpush1.xpose.msra.mxu0 0.0
  %3643 = vmatprep.subr.mxu0 0.0
  %3644 = vmatpush1.xpose.msra.mxu0 0.0
  %3645 = vmatprep.subr.mxu0 0.0
  %3646 = vmatpush1.xpose.msra.mxu0 0.0
  %3647 = vmatprep.subr.mxu0 0.0
  %3648 = vmatpush1.xpose.msra.mxu0 0.0
  %3649 = vmatprep.subr.mxu0 0.0
  %3650 = vmatpush1.xpose.msra.mxu0 0.0
  %3651 = vmatprep.subr.mxu0 0.0
  %3652 = vmatpush1.xpose.msra.mxu0 0.0
  %3653 = vmatprep.subr.mxu0 0.0
  %3654 = vmatpush1.xpose.msra.mxu0 0.0
  %3655 = vmatprep.subr.mxu0 0.0
  %3656 = vmatpush1.xpose.msra.mxu0 0.0
  %3657 = vmatprep.subr.mxu0 0.0
  %3658 = vmatpush1.xpose.msra.mxu0 0.0
  %3659 = vmatprep.subr.mxu0 0.0
  %3660 = vmatpush1.xpose.msra.mxu0 0.0
  %3661 = vmatprep.subr.mxu0 0.0
  %3662 = vmatpush1.xpose.msra.mxu0 0.0
  %3663 = vmatprep.subr.mxu0 0.0
  %3664 = vmatpush1.xpose.msra.mxu0 0.0
  %3665 = vmatprep.subr.mxu0 0.0
  %3666 = vmatpush1.xpose.msra.mxu0 0.0
  %3667 = vmatprep.subr.mxu0 0.0
  %3668 = vmatpush1.xpose.msra.mxu0 0.0
  %3669 = vmatprep.subr.mxu0 0.0
  %3670 = vmatpush1.xpose.msra.mxu0 0.0
  %3671 = vmatprep.subr.mxu0 0.0
  %3672 = vmatpush1.xpose.msra.mxu0 0.0
  %3673 = vmatprep.subr.mxu0 0.0
  %3674 = vmatpush1.xpose.msra.mxu0 0.0
  %3675 = vmatprep.subr.mxu0 0.0
  %3676 = vmatpush1.xpose.msra.mxu0 0.0
  %3677 = vmatprep.subr.mxu0 0.0
  %3678 = vmatpush1.xpose.msra.mxu0 0.0
  %3679 = vmatprep.subr.mxu0 0.0
  %3680 = vmatpush1.xpose.msra.mxu0 0.0
  %3681 = vmatprep.subr.mxu0 0.0
  %3682 = vmatpush1.xpose.msra.mxu0 0.0
  %3683 = vmatprep.subr.mxu0 0.0
  %3684 = vmatpush1.xpose.msra.mxu0 0.0
  %3685 = vmatprep.subr.mxu0 0.0
  %3686 = vmatpush1.xpose.msra.mxu0 0.0
  %3687 = vmatprep.subr.mxu0 0.0
  %3688 = vmatpush1.xpose.msra.mxu0 0.0
  %3689 = vmatprep.subr.mxu0 0.0
  %3690 = vmatpush1.xpose.msra.mxu0 0.0
  %3691 = vmatprep.subr.mxu0 0.0
  %3692 = vmatpush1.xpose.msra.mxu0 0.0
  %3693 = vmatprep.subr.mxu0 0.0
  %3694 = vmatpush1.xpose.msra.mxu0 0.0
  %3695 = vmatprep.mubr.f32.mxu0 %v3560
  %3696 = vmatmul.mubr.f32.gmra.mrb[0].mxu0 %v3559
  %v3697 = vpop.f32.mrb[0].mxu0
  %v3698 = vadd.f32 %v3628, %v3697
  %v3699 = vpop.f32.mrb[0].mxu0
  %3700 = vdwg.mxu0
  %v3701 = vld [vmem:[%s21] sm:$0xff]
  %v3702 = vld [vmem:[%s21 + $0x8] sm:$0xff]
  %v3703 = vld [vmem:[%s21 + $0x10] sm:$0xff]
  %v3704 = vld [vmem:[%s21 + $0x18] sm:$0xff]
  %v3705 = vld [vmem:[%s11] sm:$0xff]
  %v3706 = vld [vmem:[%s23] sm:$0x3]
  %vm3707 = vcmask 15360
  %v3709 = vsel %vm3707, %v3705, 0
  %v3712 = vsel %vm755, %v3706, 0
  %3714 = vmatprep.subr.mxu0 0.0
  %3715 = vmatpush1.msra.mxu0 %v3712
  %3716 = vmatprep.subr.mxu0 0.0
  %3717 = vmatpush1.msra.mxu0 0.0
  %3718 = vmatprep.subr.mxu0 0.0
  %3719 = vmatpush1.msra.mxu0 0.0
  %3720 = vmatprep.subr.mxu0 0.0
  %3721 = vmatpush1.msra.mxu0 0.0
  %3722 = vmatprep.subr.mxu0 0.0
  %3723 = vmatpush1.msra.mxu0 0.0
  %3724 = vmatprep.subr.mxu0 0.0
  %3725 = vmatpush1.msra.mxu0 0.0
  %3726 = vmatprep.subr.mxu0 0.0
  %3727 = vmatpush1.msra.mxu0 0.0
  %3728 = vmatprep.subr.mxu0 0.0
  %3729 = vmatpush1.msra.mxu0 0.0
  %3730 = vmatprep.subr.mxu0 0.0
  %3731 = vmatpush1.msra.mxu0 0.0
  %3732 = vmatprep.subr.mxu0 0.0
  %3733 = vmatpush1.msra.mxu0 0.0
  %3734 = vmatprep.subr.mxu0 0.0
  %3735 = vmatpush1.msra.mxu0 0.0
  %3736 = vmatprep.subr.mxu0 0.0
  %3737 = vmatpush1.msra.mxu0 0.0
  %3738 = vmatprep.subr.mxu0 0.0
  %3739 = vmatpush1.msra.mxu0 0.0
  %3740 = vmatprep.subr.mxu0 0.0
  %3741 = vmatpush1.msra.mxu0 0.0
  %3742 = vmatprep.subr.mxu0 0.0
  %3743 = vmatpush1.msra.mxu0 0.0
  %3744 = vmatprep.subr.mxu0 0.0
  %3745 = vmatpush1.msra.mxu0 0.0
  %3746 = vmatprep.subr.mxu0 0.0
  %3747 = vmatpush1.msra.mxu0 0.0
  %3748 = vmatprep.subr.mxu0 0.0
  %3749 = vmatpush1.msra.mxu0 0.0
  %3750 = vmatprep.subr.mxu0 0.0
  %3751 = vmatpush1.msra.mxu0 0.0
  %3752 = vmatprep.subr.mxu0 0.0
  %3753 = vmatpush1.msra.mxu0 0.0
  %3754 = vmatprep.subr.mxu0 0.0
  %3755 = vmatpush1.msra.mxu0 0.0
  %3756 = vmatprep.subr.mxu0 0.0
  %3757 = vmatpush1.msra.mxu0 0.0
  %3758 = vmatprep.subr.mxu0 0.0
  %3759 = vmatpush1.msra.mxu0 0.0
  %3760 = vmatprep.subr.mxu0 0.0
  %3761 = vmatpush1.msra.mxu0 0.0
  %3762 = vmatprep.subr.mxu0 0.0
  %3763 = vmatpush1.msra.mxu0 0.0
  %3764 = vmatprep.subr.mxu0 0.0
  %3765 = vmatpush1.msra.mxu0 0.0
  %3766 = vmatprep.subr.mxu0 0.0
  %3767 = vmatpush1.msra.mxu0 0.0
  %3768 = vmatprep.subr.mxu0 0.0
  %3769 = vmatpush1.msra.mxu0 0.0
  %3770 = vmatprep.subr.mxu0 0.0
  %3771 = vmatpush1.msra.mxu0 0.0
  %3772 = vmatprep.subr.mxu0 0.0
  %3773 = vmatpush1.msra.mxu0 0.0
  %3774 = vmatprep.subr.mxu0 0.0
  %3775 = vmatpush1.msra.mxu0 0.0
  %3776 = vmatprep.subr.mxu0 0.0
  %3777 = vmatpush1.msra.mxu0 0.0
  %3778 = vmatprep.mubr.f32.mxu0 0.0
  %3779 = vmatmul.mubr.f32.gmra.mrb[0].mxu0 %v3709
  %v3780 = vpop.f32.mrb[0].mxu0
  %v3781 = vadd.f32 0.0, %v3780
  %v3782 = vpop.f32.mrb[0].mxu0
  %3783 = vdwg.mxu0
  %v3785 = vsel %vm1222, %v3698, 0
  %3787 = vmatprep.subr.mxu0 0.0
  %3788 = vmatpush1.msra.mxu0 %v3701
  %3789 = vmatprep.subr.mxu0 0.0
  %3790 = vmatpush1.msra.mxu0 %v3702
  %3791 = vmatprep.subr.mxu0 0.0
  %3792 = vmatpush1.msra.mxu0 %v3703
  %3793 = vmatprep.subr.mxu0 0.0
  %3794 = vmatpush1.msra.mxu0 %v3704
  %3795 = vmatprep.subr.mxu0 0.0
  %3796 = vmatpush1.msra.mxu0 0.0
  %3797 = vmatprep.subr.mxu0 0.0
  %3798 = vmatpush1.msra.mxu0 0.0
  %3799 = vmatprep.subr.mxu0 0.0
  %3800 = vmatpush1.msra.mxu0 0.0
  %3801 = vmatprep.subr.mxu0 0.0
  %3802 = vmatpush1.msra.mxu0 0.0
  %3803 = vmatprep.subr.mxu0 0.0
  %3804 = vmatpush1.msra.mxu0 0.0
  %3805 = vmatprep.subr.mxu0 0.0
  %3806 = vmatpush1.msra.mxu0 0.0
  %3807 = vmatprep.subr.mxu0 0.0
  %3808 = vmatpush1.msra.mxu0 0.0
  %3809 = vmatprep.subr.mxu0 0.0
  %3810 = vmatpush1.msra.mxu0 0.0
  %3811 = vmatprep.subr.mxu0 0.0
  %3812 = vmatpush1.msra.mxu0 0.0
  %3813 = vmatprep.subr.mxu0 0.0
  %3814 = vmatpush1.msra.mxu0 0.0
  %3815 = vmatprep.subr.mxu0 0.0
  %3816 = vmatpush1.msra.mxu0 0.0
  %3817 = vmatprep.subr.mxu0 0.0
  %3818 = vmatpush1.msra.mxu0 0.0
  %3819 = vmatprep.subr.mxu0 0.0
  %3820 = vmatpush1.msra.mxu0 0.0
  %3821 = vmatprep.subr.mxu0 0.0
  %3822 = vmatpush1.msra.mxu0 0.0
  %3823 = vmatprep.subr.mxu0 0.0
  %3824 = vmatpush1.msra.mxu0 0.0
  %3825 = vmatprep.subr.mxu0 0.0
  %3826 = vmatpush1.msra.mxu0 0.0
  %3827 = vmatprep.subr.mxu0 0.0
  %3828 = vmatpush1.msra.mxu0 0.0
  %3829 = vmatprep.subr.mxu0 0.0
  %3830 = vmatpush1.msra.mxu0 0.0
  %3831 = vmatprep.subr.mxu0 0.0
  %3832 = vmatpush1.msra.mxu0 0.0
  %3833 = vmatprep.subr.mxu0 0.0
  %3834 = vmatpush1.msra.mxu0 0.0
  %3835 = vmatprep.subr.mxu0 0.0
  %3836 = vmatpush1.msra.mxu0 0.0
  %3837 = vmatprep.subr.mxu0 0.0
  %3838 = vmatpush1.msra.mxu0 0.0
  %3839 = vmatprep.subr.mxu0 0.0
  %3840 = vmatpush1.msra.mxu0 0.0
  %3841 = vmatprep.subr.mxu0 0.0
  %3842 = vmatpush1.msra.mxu0 0.0
  %3843 = vmatprep.subr.mxu0 0.0
  %3844 = vmatpush1.msra.mxu0 0.0
  %3845 = vmatprep.subr.mxu0 0.0
  %3846 = vmatpush1.msra.mxu0 0.0
  %3847 = vmatprep.subr.mxu0 0.0
  %3848 = vmatpush1.msra.mxu0 0.0
  %3849 = vmatprep.subr.mxu0 0.0
  %3850 = vmatpush1.msra.mxu0 0.0
  %3851 = vmatprep.mubr.f32.mxu0 0.0
  %3852 = vmatmul.mubr.f32.gmra.mrb[0].mxu0 %v3785
  %v3853 = vpop.f32.mrb[0].mxu0
  %v3854 = vadd.f32 %v3781, %v3853
  %v3855 = vpop.f32.mrb[0].mxu0
  %3856 = vdwg.mxu0
  %v3857 = vld [vmem:[%s25] sm:$0x1]
  %v3859 = vlaneseq
  %v3860 = vshrl.u32 %v3859, 7
  %v3861 = vsub.s32 0, %v3860
  %v3862 = vrot.slane %v3857, %v3861
  %v3864 = vadd.f32 %v3854, %v3862
  %v3865 = vmax.f32 %v3864, 0.0
  %v3866 = vld [vmem:[%s27] sm:$0xff]
  %v3867 = vld [vmem:[%s27 + $0x8] sm:$0xff]
  %v3868 = vld [vmem:[%s27 + $0x10] sm:$0xff]
  %v3869 = vld [vmem:[%s27 + $0x18] sm:$0xff]
  %v3870 = vld [vmem:[%s29] sm:$0x1]
  %v3872 = vlaneseq
  %v3873 = vshrl.u32 %v3872, 7
  %v3874 = vsub.s32 0, %v3873
  %v3875 = vrot.slane %v3870, %v3874
  %v3878 = vsel %vm1222, %v3865, 0
  %3880 = vmatprep.subr.mxu0 0.0
  %3881 = vmatpush1.msra.mxu0 %v3866
  %3882 = vmatprep.subr.mxu0 0.0
  %3883 = vmatpush1.msra.mxu0 %v3867
  %3884 = vmatprep.subr.mxu0 0.0
  %3885 = vmatpush1.msra.mxu0 %v3868
  %3886 = vmatprep.subr.mxu0 0.0
  %3887 = vmatpush1.msra.mxu0 %v3869
  %3888 = vmatprep.subr.mxu0 0.0
  %3889 = vmatpush1.msra.mxu0 0.0
  %3890 = vmatprep.subr.mxu0 0.0
  %3891 = vmatpush1.msra.mxu0 0.0
  %3892 = vmatprep.subr.mxu0 0.0
  %3893 = vmatpush1.msra.mxu0 0.0
  %3894 = vmatprep.subr.mxu0 0.0
  %3895 = vmatpush1.msra.mxu0 0.0
  %3896 = vmatprep.subr.mxu0 0.0
  %3897 = vmatpush1.msra.mxu0 0.0
  %3898 = vmatprep.subr.mxu0 0.0
  %3899 = vmatpush1.msra.mxu0 0.0
  %3900 = vmatprep.subr.mxu0 0.0
  %3901 = vmatpush1.msra.mxu0 0.0
  %3902 = vmatprep.subr.mxu0 0.0
  %3903 = vmatpush1.msra.mxu0 0.0
  %3904 = vmatprep.subr.mxu0 0.0
  %3905 = vmatpush1.msra.mxu0 0.0
  %3906 = vmatprep.subr.mxu0 0.0
  %3907 = vmatpush1.msra.mxu0 0.0
  %3908 = vmatprep.subr.mxu0 0.0
  %3909 = vmatpush1.msra.mxu0 0.0
  %3910 = vmatprep.subr.mxu0 0.0
  %3911 = vmatpush1.msra.mxu0 0.0
  %3912 = vmatprep.subr.mxu0 0.0
  %3913 = vmatpush1.msra.mxu0 0.0
  %3914 = vmatprep.subr.mxu0 0.0
  %3915 = vmatpush1.msra.mxu0 0.0
  %3916 = vmatprep.subr.mxu0 0.0
  %3917 = vmatpush1.msra.mxu0 0.0
  %3918 = vmatprep.subr.mxu0 0.0
  %3919 = vmatpush1.msra.mxu0 0.0
  %3920 = vmatprep.subr.mxu0 0.0
  %3921 = vmatpush1.msra.mxu0 0.0
  %3922 = vmatprep.subr.mxu0 0.0
  %3923 = vmatpush1.msra.mxu0 0.0
  %3924 = vmatprep.subr.mxu0 0.0
  %3925 = vmatpush1.msra.mxu0 0.0
  %3926 = vmatprep.subr.mxu0 0.0
  %3927 = vmatpush1.msra.mxu0 0.0
  %3928 = vmatprep.subr.mxu0 0.0
  %3929 = vmatpush1.msra.mxu0 0.0
  %3930 = vmatprep.subr.mxu0 0.0
  %3931 = vmatpush1.msra.mxu0 0.0
  %3932 = vmatprep.subr.mxu0 0.0
  %3933 = vmatpush1.msra.mxu0 0.0
  %3934 = vmatprep.subr.mxu0 0.0
  %3935 = vmatpush1.msra.mxu0 0.0
  %3936 = vmatprep.subr.mxu0 0.0
  %3937 = vmatpush1.msra.mxu0 0.0
  %3938 = vmatprep.subr.mxu0 0.0
  %3939 = vmatpush1.msra.mxu0 0.0
  %3940 = vmatprep.subr.mxu0 0.0
  %3941 = vmatpush1.msra.mxu0 0.0
  %3942 = vmatprep.subr.mxu0 0.0
  %3943 = vmatpush1.msra.mxu0 0.0
  %3944 = vmatprep.mubr.f32.mxu0 0.0
  %3945 = vmatmul.mubr.f32.gmra.mrb[0].mxu0 %v3878
  %v3946 = vpop.f32.mrb[0].mxu0
  %v3947 = vadd.f32 %v3875, %v3946
  %v3948 = vpop.f32.mrb[0].mxu0
  %3949 = vdwg.mxu0
  %v3950 = vld [vmem:[%s9] sm:$0x3]
  %vm3951 = vcmask 64512
  %v3953 = vsel %vm3951, %v3950, 0
  %3955 = vmatprep.subr.mxu0 0.0
  %3956 = vmatpush1.msra.mxu0 %v3947
  %3957 = vmatprep.subr.mxu0 0.0
  %3958 = vmatpush1.msra.mxu0 0.0
  %3959 = vmatprep.subr.mxu0 0.0
  %3960 = vmatpush1.msra.mxu0 0.0
  %3961 = vmatprep.subr.mxu0 0.0
  %3962 = vmatpush1.msra.mxu0 0.0
  %3963 = vmatprep.subr.mxu0 0.0
  %3964 = vmatpush1.msra.mxu0 0.0
  %3965 = vmatprep.subr.mxu0 0.0
  %3966 = vmatpush1.msra.mxu0 0.0
  %3967 = vmatprep.subr.mxu0 0.0
  %3968 = vmatpush1.msra.mxu0 0.0
  %3969 = vmatprep.subr.mxu0 0.0
  %3970 = vmatpush1.msra.mxu0 0.0
  %3971 = vmatprep.subr.mxu0 0.0
  %3972 = vmatpush1.msra.mxu0 0.0
  %3973 = vmatprep.subr.mxu0 0.0
  %3974 = vmatpush1.msra.mxu0 0.0
  %3975 = vmatprep.subr.mxu0 0.0
  %3976 = vmatpush1.msra.mxu0 0.0
  %3977 = vmatprep.subr.mxu0 0.0
  %3978 = vmatpush1.msra.mxu0 0.0
  %3979 = vmatprep.subr.mxu0 0.0
  %3980 = vmatpush1.msra.mxu0 0.0
  %3981 = vmatprep.subr.mxu0 0.0
  %3982 = vmatpush1.msra.mxu0 0.0
  %3983 = vmatprep.subr.mxu0 0.0
  %3984 = vmatpush1.msra.mxu0 0.0
  %3985 = vmatprep.subr.mxu0 0.0
  %3986 = vmatpush1.msra.mxu0 0.0
  %3987 = vmatprep.subr.mxu0 0.0
  %3988 = vmatpush1.msra.mxu0 0.0
  %3989 = vmatprep.subr.mxu0 0.0
  %3990 = vmatpush1.msra.mxu0 0.0
  %3991 = vmatprep.subr.mxu0 0.0
  %3992 = vmatpush1.msra.mxu0 0.0
  %3993 = vmatprep.subr.mxu0 0.0
  %3994 = vmatpush1.msra.mxu0 0.0
  %3995 = vmatprep.subr.mxu0 0.0
  %3996 = vmatpush1.msra.mxu0 0.0
  %3997 = vmatprep.subr.mxu0 0.0
  %3998 = vmatpush1.msra.mxu0 0.0
  %3999 = vmatprep.subr.mxu0 0.0
  %4000 = vmatpush1.msra.mxu0 0.0
  %4001 = vmatprep.subr.mxu0 0.0
  %4002 = vmatpush1.msra.mxu0 0.0
  %4003 = vmatprep.subr.mxu0 0.0
  %4004 = vmatpush1.msra.mxu0 0.0
  %4005 = vmatprep.subr.mxu0 0.0
  %4006 = vmatpush1.msra.mxu0 0.0
  %4007 = vmatprep.subr.mxu0 0.0
  %4008 = vmatpush1.msra.mxu0 0.0
  %4009 = vmatprep.subr.mxu0 0.0
  %4010 = vmatpush1.msra.mxu0 0.0
  %4011 = vmatprep.subr.mxu0 0.0
  %4012 = vmatpush1.msra.mxu0 0.0
  %4013 = vmatprep.subr.mxu0 0.0
  %4014 = vmatpush1.msra.mxu0 0.0
  %4015 = vmatprep.subr.mxu0 0.0
  %4016 = vmatpush1.msra.mxu0 0.0
  %4017 = vmatprep.subr.mxu0 0.0
  %4018 = vmatpush1.msra.mxu0 0.0
  %4019 = vmatprep.mubr.f32.mxu0 0.0
  %4020 = vmatmul.mubr.f32.gmra.mrb[0].mxu0 %v3953
  %v4021 = vpop.f32.mrb[0].mxu0
  %v4022 = vadd.f32 0.0, %v4021
  %v4023 = vpop.f32.mrb[0].mxu0
  %4024 = vdwg.mxu0
  %v4025 = vld [vmem:[%s31] sm:$0xff]
  %v4026 = vld [vmem:[%s31 + $0x8] sm:$0xff]
  %v4027 = vld [vmem:[%s31 + $0x10] sm:$0xff]
  %v4028 = vld [vmem:[%s31 + $0x18] sm:$0xff]
  %v4029 = vld [vmem:[%s33] sm:$0x1]
  %v4031 = vlaneseq
  %v4032 = vshrl.u32 %v4031, 7
  %v4033 = vsub.s32 0, %v4032
  %v4034 = vrot.slane %v4029, %v4033
  %v4037 = vsel %vm1222, %v4022, 0
  %4039 = vmatprep.subr.mxu0 0.0
  %4040 = vmatpush1.msra.mxu0 %v4025
  %4041 = vmatprep.subr.mxu0 0.0
  %4042 = vmatpush1.msra.mxu0 %v4026
  %4043 = vmatprep.subr.mxu0 0.0
  %4044 = vmatpush1.msra.mxu0 %v4027
  %4045 = vmatprep.subr.mxu0 0.0
  %4046 = vmatpush1.msra.mxu0 %v4028
  %4047 = vmatprep.subr.mxu0 0.0
  %4048 = vmatpush1.msra.mxu0 0.0
  %4049 = vmatprep.subr.mxu0 0.0
  %4050 = vmatpush1.msra.mxu0 0.0
  %4051 = vmatprep.subr.mxu0 0.0
  %4052 = vmatpush1.msra.mxu0 0.0
  %4053 = vmatprep.subr.mxu0 0.0
  %4054 = vmatpush1.msra.mxu0 0.0
  %4055 = vmatprep.subr.mxu0 0.0
  %4056 = vmatpush1.msra.mxu0 0.0
  %4057 = vmatprep.subr.mxu0 0.0
  %4058 = vmatpush1.msra.mxu0 0.0
  %4059 = vmatprep.subr.mxu0 0.0
  %4060 = vmatpush1.msra.mxu0 0.0
  %4061 = vmatprep.subr.mxu0 0.0
  %4062 = vmatpush1.msra.mxu0 0.0
  %4063 = vmatprep.subr.mxu0 0.0
  %4064 = vmatpush1.msra.mxu0 0.0
  %4065 = vmatprep.subr.mxu0 0.0
  %4066 = vmatpush1.msra.mxu0 0.0
  %4067 = vmatprep.subr.mxu0 0.0
  %4068 = vmatpush1.msra.mxu0 0.0
  %4069 = vmatprep.subr.mxu0 0.0
  %4070 = vmatpush1.msra.mxu0 0.0
  %4071 = vmatprep.subr.mxu0 0.0
  %4072 = vmatpush1.msra.mxu0 0.0
  %4073 = vmatprep.subr.mxu0 0.0
  %4074 = vmatpush1.msra.mxu0 0.0
  %4075 = vmatprep.subr.mxu0 0.0
  %4076 = vmatpush1.msra.mxu0 0.0
  %4077 = vmatprep.subr.mxu0 0.0
  %4078 = vmatpush1.msra.mxu0 0.0
  %4079 = vmatprep.subr.mxu0 0.0
  %4080 = vmatpush1.msra.mxu0 0.0
  %4081 = vmatprep.subr.mxu0 0.0
  %4082 = vmatpush1.msra.mxu0 0.0
  %4083 = vmatprep.subr.mxu0 0.0
  %4084 = vmatpush1.msra.mxu0 0.0
  %4085 = vmatprep.subr.mxu0 0.0
  %4086 = vmatpush1.msra.mxu0 0.0
  %4087 = vmatprep.subr.mxu0 0.0
  %4088 = vmatpush1.msra.mxu0 0.0
  %4089 = vmatprep.subr.mxu0 0.0
  %4090 = vmatpush1.msra.mxu0 0.0
  %4091 = vmatprep.subr.mxu0 0.0
  %4092 = vmatpush1.msra.mxu0 0.0
  %4093 = vmatprep.subr.mxu0 0.0
  %4094 = vmatpush1.msra.mxu0 0.0
  %4095 = vmatprep.subr.mxu0 0.0
  %4096 = vmatpush1.msra.mxu0 0.0
  %4097 = vmatprep.subr.mxu0 0.0
  %4098 = vmatpush1.msra.mxu0 0.0
  %4099 = vmatprep.subr.mxu0 0.0
  %4100 = vmatpush1.msra.mxu0 0.0
  %4101 = vmatprep.subr.mxu0 0.0
  %4102 = vmatpush1.msra.mxu0 0.0
  %4103 = vmatprep.mubr.f32.mxu0 0.0
  %4104 = vmatmul.mubr.f32.gmra.mrb[0].mxu0 %v4037
  %v4105 = vpop.f32.mrb[0].mxu0
  %v4106 = vadd.f32 %v4034, %v4105
  %v4107 = vpop.f32.mrb[0].mxu0
  %4108 = vdwg.mxu0
  %v4109 = vmax.f32 %v4106, 0.0
  %v4110 = vld [vmem:[%s35] sm:$0xff]
  %v4111 = vld [vmem:[%s35 + $0x8] sm:$0xff]
  %v4112 = vld [vmem:[%s35 + $0x10] sm:$0xff]
  %v4113 = vld [vmem:[%s35 + $0x18] sm:$0xff]
  %v4114 = vld [vmem:[%s37] sm:$0x1]
  %v4116 = vlaneseq
  %v4117 = vshrl.u32 %v4116, 7
  %v4118 = vsub.s32 0, %v4117
  %v4119 = vrot.slane %v4114, %v4118
  %v4122 = vsel %vm1222, %v4109, 0
  %4124 = vmatprep.subr.mxu0 0.0
  %4125 = vmatpush1.msra.mxu0 %v4110
  %4126 = vmatprep.subr.mxu0 0.0
  %4127 = vmatpush1.msra.mxu0 %v4111
  %4128 = vmatprep.subr.mxu0 0.0
  %4129 = vmatpush1.msra.mxu0 %v4112
  %4130 = vmatprep.subr.mxu0 0.0
  %4131 = vmatpush1.msra.mxu0 %v4113
  %4132 = vmatprep.subr.mxu0 0.0
  %4133 = vmatpush1.msra.mxu0 0.0
  %4134 = vmatprep.subr.mxu0 0.0
  %4135 = vmatpush1.msra.mxu0 0.0
  %4136 = vmatprep.subr.mxu0 0.0
  %4137 = vmatpush1.msra.mxu0 0.0
  %4138 = vmatprep.subr.mxu0 0.0
  %4139 = vmatpush1.msra.mxu0 0.0
  %4140 = vmatprep.subr.mxu0 0.0
  %4141 = vmatpush1.msra.mxu0 0.0
  %4142 = vmatprep.subr.mxu0 0.0
  %4143 = vmatpush1.msra.mxu0 0.0
  %4144 = vmatprep.subr.mxu0 0.0
  %4145 = vmatpush1.msra.mxu0 0.0
  %4146 = vmatprep.subr.mxu0 0.0
  %4147 = vmatpush1.msra.mxu0 0.0
  %4148 = vmatprep.subr.mxu0 0.0
  %4149 = vmatpush1.msra.mxu0 0.0
  %4150 = vmatprep.subr.mxu0 0.0
  %4151 = vmatpush1.msra.mxu0 0.0
  %4152 = vmatprep.subr.mxu0 0.0
  %4153 = vmatpush1.msra.mxu0 0.0
  %4154 = vmatprep.subr.mxu0 0.0
  %4155 = vmatpush1.msra.mxu0 0.0
  %4156 = vmatprep.subr.mxu0 0.0
  %4157 = vmatpush1.msra.mxu0 0.0
  %4158 = vmatprep.subr.mxu0 0.0
  %4159 = vmatpush1.msra.mxu0 0.0
  %4160 = vmatprep.subr.mxu0 0.0
  %4161 = vmatpush1.msra.mxu0 0.0
  %4162 = vmatprep.subr.mxu0 0.0
  %4163 = vmatpush1.msra.mxu0 0.0
  %4164 = vmatprep.subr.mxu0 0.0
  %4165 = vmatpush1.msra.mxu0 0.0
  %4166 = vmatprep.subr.mxu0 0.0
  %4167 = vmatpush1.msra.mxu0 0.0
  %4168 = vmatprep.subr.mxu0 0.0
  %4169 = vmatpush1.msra.mxu0 0.0
  %4170 = vmatprep.subr.mxu0 0.0
  %4171 = vmatpush1.msra.mxu0 0.0
  %4172 = vmatprep.subr.mxu0 0.0
  %4173 = vmatpush1.msra.mxu0 0.0
  %4174 = vmatprep.subr.mxu0 0.0
  %4175 = vmatpush1.msra.mxu0 0.0
  %4176 = vmatprep.subr.mxu0 0.0
  %4177 = vmatpush1.msra.mxu0 0.0
  %4178 = vmatprep.subr.mxu0 0.0
  %4179 = vmatpush1.msra.mxu0 0.0
  %4180 = vmatprep.subr.mxu0 0.0
  %4181 = vmatpush1.msra.mxu0 0.0
  %4182 = vmatprep.subr.mxu0 0.0
  %4183 = vmatpush1.msra.mxu0 0.0
  %4184 = vmatprep.subr.mxu0 0.0
  %4185 = vmatpush1.msra.mxu0 0.0
  %4186 = vmatprep.subr.mxu0 0.0
  %4187 = vmatpush1.msra.mxu0 0.0
  %4188 = vmatprep.mubr.f32.mxu0 0.0
  %4189 = vmatmul.mubr.f32.gmra.mrb[0].mxu0 %v4122
  %v4190 = vpop.f32.mrb[0].mxu0
  %v4191 = vadd.f32 %v4119, %v4190
  %v4192 = vpop.f32.mrb[0].mxu0
  %4193 = vdwg.mxu0
  %v4194 = vsub.f32 0.0, %v4191
  %v4195 = vmul.f32 %v4194, 1.442695
  %v4196 = vpow.pop %v4195
  %v4197 = vadd.f32 %v4196, 1.0
  %v4198 = vrcp.pop %v4197
  %v4199 = vmul.f32 0.9, %v4198
  %v4200 = vadd.f32 %v4199, 0.1
  %vm4201 = vcmask 130048
  %v4202 = vsel %vm4201, %v4191, %v4200
  %vm4203 = vcmask 254976
  %4204 = vst.msk [vmem:[%s63] sm:$0x3] %vm4203, %v4202
  %v4205 = vld [vmem:[%s39] sm:$0x3]
  %4207 = vrot.lane.b32.xlu0 %v4205, 16
  %v4208 = vpop.permute.xlu0 %4207
  %v4210 = vmul.f32 %v4200, %v4208
  %4212 = vrot.lane.b32.xlu0 %v4210, 112
  %v4213 = vpop.permute.xlu0 %4212
  %v4215 = vadd.f32 %v4191, %v4213
  %v4216 = vld [vmem:[%s43] sm:$0xff]
  %v4217 = vld [vmem:[%s43 + $0x8] sm:$0xf]
  %v4218 = vld [vmem:[%s47] sm:$0xff]
  %v4219 = vld [vmem:[%s47 + $0x8] sm:$0xff]
  %v4221 = vsel %vm4201, %v4215, 0
  %4223 = vmatprep.subr.mxu0 0.0
  %4224 = vmatpush1.msra.mxu0 %v4218
  %4225 = vmatprep.subr.mxu0 0.0
  %4226 = vmatpush1.msra.mxu0 %v4219
  %4227 = vmatprep.subr.mxu0 0.0
  %4228 = vmatpush1.msra.mxu0 0.0
  %4229 = vmatprep.subr.mxu0 0.0
  %4230 = vmatpush1.msra.mxu0 0.0
  %4231 = vmatprep.subr.mxu0 0.0
  %4232 = vmatpush1.msra.mxu0 0.0
  %4233 = vmatprep.subr.mxu0 0.0
  %4234 = vmatpush1.msra.mxu0 0.0
  %4235 = vmatprep.subr.mxu0 0.0
  %4236 = vmatpush1.msra.mxu0 0.0
  %4237 = vmatprep.subr.mxu0 0.0
  %4238 = vmatpush1.msra.mxu0 0.0
  %4239 = vmatprep.subr.mxu0 0.0
  %4240 = vmatpush1.msra.mxu0 0.0
  %4241 = vmatprep.subr.mxu0 0.0
  %4242 = vmatpush1.msra.mxu0 0.0
  %4243 = vmatprep.subr.mxu0 0.0
  %4244 = vmatpush1.msra.mxu0 0.0
  %4245 = vmatprep.subr.mxu0 0.0
  %4246 = vmatpush1.msra.mxu0 0.0
  %4247 = vmatprep.subr.mxu0 0.0
  %4248 = vmatpush1.msra.mxu0 0.0
  %4249 = vmatprep.subr.mxu0 0.0
  %4250 = vmatpush1.msra.mxu0 0.0
  %4251 = vmatprep.subr.mxu0 0.0
  %4252 = vmatpush1.msra.mxu0 0.0
  %4253 = vmatprep.subr.mxu0 0.0
  %4254 = vmatpush1.msra.mxu0 0.0
  %4255 = vmatprep.subr.mxu0 0.0
  %4256 = vmatpush1.msra.mxu0 0.0
  %4257 = vmatprep.subr.mxu0 0.0
  %4258 = vmatpush1.msra.mxu0 0.0
  %4259 = vmatprep.subr.mxu0 0.0
  %4260 = vmatpush1.msra.mxu0 0.0
  %4261 = vmatprep.subr.mxu0 0.0
  %4262 = vmatpush1.msra.mxu0 0.0
  %4263 = vmatprep.subr.mxu0 0.0
  %4264 = vmatpush1.msra.mxu0 0.0
  %4265 = vmatprep.subr.mxu0 0.0
  %4266 = vmatpush1.msra.mxu0 0.0
  %4267 = vmatprep.subr.mxu0 0.0
  %4268 = vmatpush1.msra.mxu0 0.0
  %4269 = vmatprep.subr.mxu0 0.0
  %4270 = vmatpush1.msra.mxu0 0.0
  %4271 = vmatprep.subr.mxu0 0.0
  %4272 = vmatpush1.msra.mxu0 0.0
  %4273 = vmatprep.subr.mxu0 0.0
  %4274 = vmatpush1.msra.mxu0 0.0
  %4275 = vmatprep.subr.mxu0 0.0
  %4276 = vmatpush1.msra.mxu0 0.0
  %4277 = vmatprep.subr.mxu0 0.0
  %4278 = vmatpush1.msra.mxu0 0.0
  %4279 = vmatprep.subr.mxu0 0.0
  %4280 = vmatpush1.msra.mxu0 0.0
  %4281 = vmatprep.subr.mxu0 0.0
  %4282 = vmatpush1.msra.mxu0 0.0
  %4283 = vmatprep.subr.mxu0 0.0
  %4284 = vmatpush1.msra.mxu0 0.0
  %4285 = vmatprep.subr.mxu0 0.0
  %4286 = vmatpush1.msra.mxu0 0.0
  %4287 = vmatprep.mubr.f32.mxu0 0.0
  %4288 = vmatmul.mubr.f32.gmra.mrb[0].mxu0 %v4221
  %v4289 = vpop.f32.mrb[0].mxu0
  %v4290 = vadd.f32 0.0, %v4289
  %v4291 = vpop.f32.mrb[0].mxu0
  %4292 = vdwg.mxu0
  %v4294 = vsel %vm3707, %v4216, 0
  %v4297 = vsel %vm3707, %v4217, 0
  %v4300 = vsel %vm755, %v4290, 0
  %4302 = vmatprep.subr.mxu0 0.0
  %4303 = vmatpush1.msra.mxu0 %v4300
  %4304 = vmatprep.subr.mxu0 0.0
  %4305 = vmatpush1.msra.mxu0 0.0
  %4306 = vmatprep.subr.mxu0 0.0
  %4307 = vmatpush1.msra.mxu0 0.0
  %4308 = vmatprep.subr.mxu0 0.0
  %4309 = vmatpush1.msra.mxu0 0.0
  %4310 = vmatprep.subr.mxu0 0.0
  %4311 = vmatpush1.msra.mxu0 0.0
  %4312 = vmatprep.subr.mxu0 0.0
  %4313 = vmatpush1.msra.mxu0 0.0
  %4314 = vmatprep.subr.mxu0 0.0
  %4315 = vmatpush1.msra.mxu0 0.0
  %4316 = vmatprep.subr.mxu0 0.0
  %4317 = vmatpush1.msra.mxu0 0.0
  %4318 = vmatprep.subr.mxu0 0.0
  %4319 = vmatpush1.msra.mxu0 0.0
  %4320 = vmatprep.subr.mxu0 0.0
  %4321 = vmatpush1.msra.mxu0 0.0
  %4322 = vmatprep.subr.mxu0 0.0
  %4323 = vmatpush1.msra.mxu0 0.0
  %4324 = vmatprep.subr.mxu0 0.0
  %4325 = vmatpush1.msra.mxu0 0.0
  %4326 = vmatprep.subr.mxu0 0.0
  %4327 = vmatpush1.msra.mxu0 0.0
  %4328 = vmatprep.subr.mxu0 0.0
  %4329 = vmatpush1.msra.mxu0 0.0
  %4330 = vmatprep.subr.mxu0 0.0
  %4331 = vmatpush1.msra.mxu0 0.0
  %4332 = vmatprep.subr.mxu0 0.0
  %4333 = vmatpush1.msra.mxu0 0.0
  %4334 = vmatprep.subr.mxu0 0.0
  %4335 = vmatpush1.msra.mxu0 0.0
  %4336 = vmatprep.subr.mxu0 0.0
  %4337 = vmatpush1.msra.mxu0 0.0
  %4338 = vmatprep.subr.mxu0 0.0
  %4339 = vmatpush1.msra.mxu0 0.0
  %4340 = vmatprep.subr.mxu0 0.0
  %4341 = vmatpush1.msra.mxu0 0.0
  %4342 = vmatprep.subr.mxu0 0.0
  %4343 = vmatpush1.msra.mxu0 0.0
  %4344 = vmatprep.subr.mxu0 0.0
  %4345 = vmatpush1.msra.mxu0 0.0
  %4346 = vmatprep.subr.mxu0 0.0
  %4347 = vmatpush1.msra.mxu0 0.0
  %4348 = vmatprep.subr.mxu0 0.0
  %4349 = vmatpush1.msra.mxu0 0.0
  %4350 = vmatprep.subr.mxu0 0.0
  %4351 = vmatpush1.msra.mxu0 0.0
  %4352 = vmatprep.subr.mxu0 0.0
  %4353 = vmatpush1.msra.mxu0 0.0
  %4354 = vmatprep.subr.mxu0 0.0
  %4355 = vmatpush1.msra.mxu0 0.0
  %4356 = vmatprep.subr.mxu0 0.0
  %4357 = vmatpush1.msra.mxu0 0.0
  %4358 = vmatprep.subr.mxu0 0.0
  %4359 = vmatpush1.msra.mxu0 0.0
  %4360 = vmatprep.subr.mxu0 0.0
  %4361 = vmatpush1.msra.mxu0 0.0
  %4362 = vmatprep.subr.mxu0 0.0
  %4363 = vmatpush1.msra.mxu0 0.0
  %4364 = vmatprep.subr.mxu0 0.0
  %4365 = vmatpush1.msra.mxu0 0.0
  %4366 = vmatprep.mubr.f32.mxu0 0.0
  %4367 = vmatmul.mubr.f32.gmra.mrb[0].mxu0 %v4294
  %v4368 = vpop.f32.mrb[0].mxu0
  %v4369 = vadd.f32 0.0, %v4368
  %v4370 = vpop.f32.mrb[0].mxu0
  %4371 = vmatprep.mubr.f32.mxu0 0.0
  %4372 = vmatmul.mubr.f32.gmra.mrb[0].mxu0 %v4297
  %v4373 = vpop.f32.mrb[0].mxu0
  %v4374 = vadd.f32 0.0, %v4373
  %v4375 = vpop.f32.mrb[0].mxu0
  %4376 = vdwg.mxu0
  %v4377 = vld [vmem:[%s41] sm:$0xff]
  %v4378 = vld [vmem:[%s41 + $0x8] sm:$0xf]
  %v4379 = vld [vmem:[%s45] sm:$0x3]
  %v4381 = vsel %vm3707, %v4377, 0
  %v4384 = vsel %vm3707, %v4378, 0
  %v4387 = vsel %vm755, %v4379, 0
  %4389 = vmatprep.subr.mxu0 0.0
  %4390 = vmatpush1.msra.mxu0 %v4387
  %4391 = vmatprep.subr.mxu0 0.0
  %4392 = vmatpush1.msra.mxu0 0.0
  %4393 = vmatprep.subr.mxu0 0.0
  %4394 = vmatpush1.msra.mxu0 0.0
  %4395 = vmatprep.subr.mxu0 0.0
  %4396 = vmatpush1.msra.mxu0 0.0
  %4397 = vmatprep.subr.mxu0 0.0
  %4398 = vmatpush1.msra.mxu0 0.0
  %4399 = vmatprep.subr.mxu0 0.0
  %4400 = vmatpush1.msra.mxu0 0.0
  %4401 = vmatprep.subr.mxu0 0.0
  %4402 = vmatpush1.msra.mxu0 0.0
  %4403 = vmatprep.subr.mxu0 0.0
  %4404 = vmatpush1.msra.mxu0 0.0
  %4405 = vmatprep.subr.mxu0 0.0
  %4406 = vmatpush1.msra.mxu0 0.0
  %4407 = vmatprep.subr.mxu0 0.0
  %4408 = vmatpush1.msra.mxu0 0.0
  %4409 = vmatprep.subr.mxu0 0.0
  %4410 = vmatpush1.msra.mxu0 0.0
  %4411 = vmatprep.subr.mxu0 0.0
  %4412 = vmatpush1.msra.mxu0 0.0
  %4413 = vmatprep.subr.mxu0 0.0
  %4414 = vmatpush1.msra.mxu0 0.0
  %4415 = vmatprep.subr.mxu0 0.0
  %4416 = vmatpush1.msra.mxu0 0.0
  %4417 = vmatprep.subr.mxu0 0.0
  %4418 = vmatpush1.msra.mxu0 0.0
  %4419 = vmatprep.subr.mxu0 0.0
  %4420 = vmatpush1.msra.mxu0 0.0
  %4421 = vmatprep.subr.mxu0 0.0
  %4422 = vmatpush1.msra.mxu0 0.0
  %4423 = vmatprep.subr.mxu0 0.0
  %4424 = vmatpush1.msra.mxu0 0.0
  %4425 = vmatprep.subr.mxu0 0.0
  %4426 = vmatpush1.msra.mxu0 0.0
  %4427 = vmatprep.subr.mxu0 0.0
  %4428 = vmatpush1.msra.mxu0 0.0
  %4429 = vmatprep.subr.mxu0 0.0
  %4430 = vmatpush1.msra.mxu0 0.0
  %4431 = vmatprep.subr.mxu0 0.0
  %4432 = vmatpush1.msra.mxu0 0.0
  %4433 = vmatprep.subr.mxu0 0.0
  %4434 = vmatpush1.msra.mxu0 0.0
  %4435 = vmatprep.subr.mxu0 0.0
  %4436 = vmatpush1.msra.mxu0 0.0
  %4437 = vmatprep.subr.mxu0 0.0
  %4438 = vmatpush1.msra.mxu0 0.0
  %4439 = vmatprep.subr.mxu0 0.0
  %4440 = vmatpush1.msra.mxu0 0.0
  %4441 = vmatprep.subr.mxu0 0.0
  %4442 = vmatpush1.msra.mxu0 0.0
  %4443 = vmatprep.subr.mxu0 0.0
  %4444 = vmatpush1.msra.mxu0 0.0
  %4445 = vmatprep.subr.mxu0 0.0
  %4446 = vmatpush1.msra.mxu0 0.0
  %4447 = vmatprep.subr.mxu0 0.0
  %4448 = vmatpush1.msra.mxu0 0.0
  %4449 = vmatprep.subr.mxu0 0.0
  %4450 = vmatpush1.msra.mxu0 0.0
  %4451 = vmatprep.subr.mxu0 0.0
  %4452 = vmatpush1.msra.mxu0 0.0
  %4453 = vmatprep.mubr.f32.mxu0 0.0
  %4454 = vmatmul.mubr.f32.gmra.mrb[0].mxu0 %v4381
  %v4455 = vpop.f32.mrb[0].mxu0
  %v4456 = vadd.f32 %v4369, %v4455
  %v4457 = vpop.f32.mrb[0].mxu0
  %4458 = vmatprep.mubr.f32.mxu0 0.0
  %4459 = vmatmul.mubr.f32.gmra.mrb[0].mxu0 %v4384
  %v4460 = vpop.f32.mrb[0].mxu0
  %v4461 = vadd.f32 %v4374, %v4460
  %v4462 = vpop.f32.mrb[0].mxu0
  %4463 = vdwg.mxu0
  %v4464 = vld [vmem:[%s49] sm:$0x1]
  %v4466 = vlaneseq
  %v4467 = vshrl.u32 %v4466, 7
  %v4468 = vsub.s32 0, %v4467
  %v4469 = vrot.slane %v4464, %v4468
  %v4471 = vadd.f32 %v4456, %v4469
  %v4472 = vadd.f32 %v4461, %v4469
  %v4473 = vmax.f32 %v4471, 0.0
  %v4474 = vmax.f32 %v4472, 0.0
  %v4475 = vld [vmem:[%s51] sm:$0xff]
  %v4476 = vld [vmem:[%s51 + $0x8] sm:$0xff]
  %v4477 = vld [vmem:[%s51 + $0x10] sm:$0xff]
  %v4478 = vld [vmem:[%s51 + $0x18] sm:$0xff]
  %v4479 = vld [vmem:[%s53] sm:$0x1]
  %v4481 = vlaneseq
  %v4482 = vshrl.u32 %v4481, 7
  %v4483 = vsub.s32 0, %v4482
  %v4484 = vrot.slane %v4479, %v4483
  %v4487 = vsel %vm1222, %v4473, 0
  %v4490 = vsel %vm1222, %v4474, 0
  %4492 = vmatprep.subr.mxu0 0.0
  %4493 = vmatpush1.msra.mxu0 %v4475
  %4494 = vmatprep.subr.mxu0 0.0
  %4495 = vmatpush1.msra.mxu0 %v4476
  %4496 = vmatprep.subr.mxu0 0.0
  %4497 = vmatpush1.msra.mxu0 %v4477
  %4498 = vmatprep.subr.mxu0 0.0
  %4499 = vmatpush1.msra.mxu0 %v4478
  %4500 = vmatprep.subr.mxu0 0.0
  %4501 = vmatpush1.msra.mxu0 0.0
  %4502 = vmatprep.subr.mxu0 0.0
  %4503 = vmatpush1.msra.mxu0 0.0
  %4504 = vmatprep.subr.mxu0 0.0
  %4505 = vmatpush1.msra.mxu0 0.0
  %4506 = vmatprep.subr.mxu0 0.0
  %4507 = vmatpush1.msra.mxu0 0.0
  %4508 = vmatprep.subr.mxu0 0.0
  %4509 = vmatpush1.msra.mxu0 0.0
  %4510 = vmatprep.subr.mxu0 0.0
  %4511 = vmatpush1.msra.mxu0 0.0
  %4512 = vmatprep.subr.mxu0 0.0
  %4513 = vmatpush1.msra.mxu0 0.0
  %4514 = vmatprep.subr.mxu0 0.0
  %4515 = vmatpush1.msra.mxu0 0.0
  %4516 = vmatprep.subr.mxu0 0.0
  %4517 = vmatpush1.msra.mxu0 0.0
  %4518 = vmatprep.subr.mxu0 0.0
  %4519 = vmatpush1.msra.mxu0 0.0
  %4520 = vmatprep.subr.mxu0 0.0
  %4521 = vmatpush1.msra.mxu0 0.0
  %4522 = vmatprep.subr.mxu0 0.0
  %4523 = vmatpush1.msra.mxu0 0.0
  %4524 = vmatprep.subr.mxu0 0.0
  %4525 = vmatpush1.msra.mxu0 0.0
  %4526 = vmatprep.subr.mxu0 0.0
  %4527 = vmatpush1.msra.mxu0 0.0
  %4528 = vmatprep.subr.mxu0 0.0
  %4529 = vmatpush1.msra.mxu0 0.0
  %4530 = vmatprep.subr.mxu0 0.0
  %4531 = vmatpush1.msra.mxu0 0.0
  %4532 = vmatprep.subr.mxu0 0.0
  %4533 = vmatpush1.msra.mxu0 0.0
  %4534 = vmatprep.subr.mxu0 0.0
  %4535 = vmatpush1.msra.mxu0 0.0
  %4536 = vmatprep.subr.mxu0 0.0
  %4537 = vmatpush1.msra.mxu0 0.0
  %4538 = vmatprep.subr.mxu0 0.0
  %4539 = vmatpush1.msra.mxu0 0.0
  %4540 = vmatprep.subr.mxu0 0.0
  %4541 = vmatpush1.msra.mxu0 0.0
  %4542 = vmatprep.subr.mxu0 0.0
  %4543 = vmatpush1.msra.mxu0 0.0
  %4544 = vmatprep.subr.mxu0 0.0
  %4545 = vmatpush1.msra.mxu0 0.0
  %4546 = vmatprep.subr.mxu0 0.0
  %4547 = vmatpush1.msra.mxu0 0.0
  %4548 = vmatprep.subr.mxu0 0.0
  %4549 = vmatpush1.msra.mxu0 0.0
  %4550 = vmatprep.subr.mxu0 0.0
  %4551 = vmatpush1.msra.mxu0 0.0
  %4552 = vmatprep.subr.mxu0 0.0
  %4553 = vmatpush1.msra.mxu0 0.0
  %4554 = vmatprep.subr.mxu0 0.0
  %4555 = vmatpush1.msra.mxu0 0.0
  %4556 = vmatprep.mubr.f32.mxu0 0.0
  %4557 = vmatmul.mubr.f32.gmra.mrb[0].mxu0 %v4487
  %v4558 = vpop.f32.mrb[0].mxu0
  %v4559 = vadd.f32 %v4484, %v4558
  %v4560 = vpop.f32.mrb[0].mxu0
  %4561 = vmatprep.mubr.f32.mxu0 0.0
  %4562 = vmatmul.mubr.f32.gmra.mrb[0].mxu0 %v4490
  %v4563 = vpop.f32.mrb[0].mxu0
  %v4564 = vadd.f32 %v4484, %v4563
  %v4565 = vpop.f32.mrb[0].mxu0
  %4566 = vdwg.mxu0
  %v4567 = vmax.f32 %v4559, 0.0
  %v4568 = vmax.f32 %v4564, 0.0
  %v4569 = vld [vmem:[%s55] sm:$0xff]
  %v4570 = vld [vmem:[%s55 + $0x8] sm:$0xff]
  %v4571 = vld [vmem:[%s55 + $0x10] sm:$0xff]
  %v4572 = vld [vmem:[%s55 + $0x18] sm:$0xff]
  %v4573 = vld [vmem:[%s57] sm:$0x1]
  %v4575 = vlaneseq
  %v4576 = vshrl.u32 %v4575, 7
  %v4577 = vsub.s32 0, %v4576
  %v4578 = vrot.slane %v4573, %v4577
  %v4581 = vsel %vm1222, %v4567, 0
  %v4584 = vsel %vm1222, %v4568, 0
  %4586 = vmatprep.subr.mxu0 0.0
  %4587 = vmatpush1.msra.mxu0 %v4569
  %4588 = vmatprep.subr.mxu0 0.0
  %4589 = vmatpush1.msra.mxu0 %v4570
  %4590 = vmatprep.subr.mxu0 0.0
  %4591 = vmatpush1.msra.mxu0 %v4571
  %4592 = vmatprep.subr.mxu0 0.0
  %4593 = vmatpush1.msra.mxu0 %v4572
  %4594 = vmatprep.subr.mxu0 0.0
  %4595 = vmatpush1.msra.mxu0 0.0
  %4596 = vmatprep.subr.mxu0 0.0
  %4597 = vmatpush1.msra.mxu0 0.0
  %4598 = vmatprep.subr.mxu0 0.0
  %4599 = vmatpush1.msra.mxu0 0.0
  %4600 = vmatprep.subr.mxu0 0.0
  %4601 = vmatpush1.msra.mxu0 0.0
  %4602 = vmatprep.subr.mxu0 0.0
  %4603 = vmatpush1.msra.mxu0 0.0
  %4604 = vmatprep.subr.mxu0 0.0
  %4605 = vmatpush1.msra.mxu0 0.0
  %4606 = vmatprep.subr.mxu0 0.0
  %4607 = vmatpush1.msra.mxu0 0.0
  %4608 = vmatprep.subr.mxu0 0.0
  %4609 = vmatpush1.msra.mxu0 0.0
  %4610 = vmatprep.subr.mxu0 0.0
  %4611 = vmatpush1.msra.mxu0 0.0
  %4612 = vmatprep.subr.mxu0 0.0
  %4613 = vmatpush1.msra.mxu0 0.0
  %4614 = vmatprep.subr.mxu0 0.0
  %4615 = vmatpush1.msra.mxu0 0.0
  %4616 = vmatprep.subr.mxu0 0.0
  %4617 = vmatpush1.msra.mxu0 0.0
  %4618 = vmatprep.subr.mxu0 0.0
  %4619 = vmatpush1.msra.mxu0 0.0
  %4620 = vmatprep.subr.mxu0 0.0
  %4621 = vmatpush1.msra.mxu0 0.0
  %4622 = vmatprep.subr.mxu0 0.0
  %4623 = vmatpush1.msra.mxu0 0.0
  %4624 = vmatprep.subr.mxu0 0.0
  %4625 = vmatpush1.msra.mxu0 0.0
  %4626 = vmatprep.subr.mxu0 0.0
  %4627 = vmatpush1.msra.mxu0 0.0
  %4628 = vmatprep.subr.mxu0 0.0
  %4629 = vmatpush1.msra.mxu0 0.0
  %4630 = vmatprep.subr.mxu0 0.0
  %4631 = vmatpush1.msra.mxu0 0.0
  %4632 = vmatprep.subr.mxu0 0.0
  %4633 = vmatpush1.msra.mxu0 0.0
  %4634 = vmatprep.subr.mxu0 0.0
  %4635 = vmatpush1.msra.mxu0 0.0
  %4636 = vmatprep.subr.mxu0 0.0
  %4637 = vmatpush1.msra.mxu0 0.0
  %4638 = vmatprep.subr.mxu0 0.0
  %4639 = vmatpush1.msra.mxu0 0.0
  %4640 = vmatprep.subr.mxu0 0.0
  %4641 = vmatpush1.msra.mxu0 0.0
  %4642 = vmatprep.subr.mxu0 0.0
  %4643 = vmatpush1.msra.mxu0 0.0
  %4644 = vmatprep.subr.mxu0 0.0
  %4645 = vmatpush1.msra.mxu0 0.0
  %4646 = vmatprep.subr.mxu0 0.0
  %4647 = vmatpush1.msra.mxu0 0.0
  %4648 = vmatprep.subr.mxu0 0.0
  %4649 = vmatpush1.msra.mxu0 0.0
  %4650 = vmatprep.mubr.f32.mxu0 0.0
  %4651 = vmatmul.mubr.f32.gmra.mrb[0].mxu0 %v4581
  %v4652 = vpop.f32.mrb[0].mxu0
  %v4653 = vadd.f32 %v4578, %v4652
  %v4654 = vpop.f32.mrb[0].mxu0
  %4655 = vmatprep.mubr.f32.mxu0 0.0
  %4656 = vmatmul.mubr.f32.gmra.mrb[0].mxu0 %v4584
  %v4657 = vpop.f32.mrb[0].mxu0
  %v4658 = vadd.f32 %v4578, %v4657
  %v4659 = vpop.f32.mrb[0].mxu0
  %4660 = vdwg.mxu0
  %v4661 = vmax.f32 %v4653, 0.0
  %v4662 = vmax.f32 %v4658, 0.0
  %v4663 = vld [vmem:[%s59] sm:$0xff]
  %v4664 = vld [vmem:[%s59 + $0x8] sm:$0xff]
  %v4665 = vld [vmem:[%s59 + $0x10] sm:$0xff]
  %v4666 = vld [vmem:[%s59 + $0x18] sm:$0xff]
  %v4667 = vld [vmem:[%s61] sm:$0x1]
  %v4669 = vlaneseq
  %v4670 = vshrl.u32 %v4669, 7
  %v4671 = vsub.s32 0, %v4670
  %v4672 = vrot.slane %v4667, %v4671
  %v4675 = vsel %vm1222, %v4661, 0
  %v4678 = vsel %vm1222, %v4662, 0
  %4680 = vmatprep.subr.mxu0 0.0
  %4681 = vmatpush1.msra.mxu0 %v4663
  %4682 = vmatprep.subr.mxu0 0.0
  %4683 = vmatpush1.msra.mxu0 %v4664
  %4684 = vmatprep.subr.mxu0 0.0
  %4685 = vmatpush1.msra.mxu0 %v4665
  %4686 = vmatprep.subr.mxu0 0.0
  %4687 = vmatpush1.msra.mxu0 %v4666
  %4688 = vmatprep.subr.mxu0 0.0
  %4689 = vmatpush1.msra.mxu0 0.0
  %4690 = vmatprep.subr.mxu0 0.0
  %4691 = vmatpush1.msra.mxu0 0.0
  %4692 = vmatprep.subr.mxu0 0.0
  %4693 = vmatpush1.msra.mxu0 0.0
  %4694 = vmatprep.subr.mxu0 0.0
  %4695 = vmatpush1.msra.mxu0 0.0
  %4696 = vmatprep.subr.mxu0 0.0
  %4697 = vmatpush1.msra.mxu0 0.0
  %4698 = vmatprep.subr.mxu0 0.0
  %4699 = vmatpush1.msra.mxu0 0.0
  %4700 = vmatprep.subr.mxu0 0.0
  %4701 = vmatpush1.msra.mxu0 0.0
  %4702 = vmatprep.subr.mxu0 0.0
  %4703 = vmatpush1.msra.mxu0 0.0
  %4704 = vmatprep.subr.mxu0 0.0
  %4705 = vmatpush1.msra.mxu0 0.0
  %4706 = vmatprep.subr.mxu0 0.0
  %4707 = vmatpush1.msra.mxu0 0.0
  %4708 = vmatprep.subr.mxu0 0.0
  %4709 = vmatpush1.msra.mxu0 0.0
  %4710 = vmatprep.subr.mxu0 0.0
  %4711 = vmatpush1.msra.mxu0 0.0
  %4712 = vmatprep.subr.mxu0 0.0
  %4713 = vmatpush1.msra.mxu0 0.0
  %4714 = vmatprep.subr.mxu0 0.0
  %4715 = vmatpush1.msra.mxu0 0.0
  %4716 = vmatprep.subr.mxu0 0.0
  %4717 = vmatpush1.msra.mxu0 0.0
  %4718 = vmatprep.subr.mxu0 0.0
  %4719 = vmatpush1.msra.mxu0 0.0
  %4720 = vmatprep.subr.mxu0 0.0
  %4721 = vmatpush1.msra.mxu0 0.0
  %4722 = vmatprep.subr.mxu0 0.0
  %4723 = vmatpush1.msra.mxu0 0.0
  %4724 = vmatprep.subr.mxu0 0.0
  %4725 = vmatpush1.msra.mxu0 0.0
  %4726 = vmatprep.subr.mxu0 0.0
  %4727 = vmatpush1.msra.mxu0 0.0
  %4728 = vmatprep.subr.mxu0 0.0
  %4729 = vmatpush1.msra.mxu0 0.0
  %4730 = vmatprep.subr.mxu0 0.0
  %4731 = vmatpush1.msra.mxu0 0.0
  %4732 = vmatprep.subr.mxu0 0.0
  %4733 = vmatpush1.msra.mxu0 0.0
  %4734 = vmatprep.subr.mxu0 0.0
  %4735 = vmatpush1.msra.mxu0 0.0
  %4736 = vmatprep.subr.mxu0 0.0
  %4737 = vmatpush1.msra.mxu0 0.0
  %4738 = vmatprep.subr.mxu0 0.0
  %4739 = vmatpush1.msra.mxu0 0.0
  %4740 = vmatprep.subr.mxu0 0.0
  %4741 = vmatpush1.msra.mxu0 0.0
  %4742 = vmatprep.subr.mxu0 0.0
  %4743 = vmatpush1.msra.mxu0 0.0
  %4744 = vmatprep.mubr.f32.mxu0 0.0
  %4745 = vmatmul.mubr.f32.gmra.mrb[0].mxu0 %v4675
  %v4746 = vpop.f32.mrb[0].mxu0
  %v4747 = vadd.f32 %v4672, %v4746
  %v4748 = vpop.f32.mrb[0].mxu0
  %4749 = vmatprep.mubr.f32.mxu0 0.0
  %4750 = vmatmul.mubr.f32.gmra.mrb[0].mxu0 %v4678
  %v4751 = vpop.f32.mrb[0].mxu0
  %v4752 = vadd.f32 %v4672, %v4751
  %v4753 = vpop.f32.mrb[0].mxu0
  %4754 = vdwg.mxu0
  %v4755 = vmax.f32 %v4747, 0.0
  %v4756 = vmax.f32 %v4752, 0.0
  %v4757 = vand.u32 2147483647, %v4747
  %v4758 = vand.u32 2147483647, %v4752
  %v4759 = vsub.f32 0.0, %v4757
  %v4760 = vsub.f32 0.0, %v4758
  %v4761 = vmul.f32 %v4759, 1.442695
  %v4762 = vpow.pop %v4761
  %v4763 = vmul.f32 %v4760, 1.442695
  %v4764 = vpow.pop %v4763
  %v4765 = vadd.f32 %v4762, 1.0
  %v4766 = vadd.f32 %v4764, 1.0
  %v4767 = vlog2.pop %v4765
  %v4768 = vmul.f32 %v4767, 0.6931472
  %v4769 = vlog2.pop %v4766
  %v4770 = vmul.f32 %v4769, 0.6931472
  %v4771 = vadd.f32 %v4755, %v4768
  %v4772 = vadd.f32 %v4756, %v4770
  %vm4773 = vcmp.lt.s32.totalorder %v166, 64
  %v4774 = vmul.f32 %v4771, 0.9
  %v4775 = vmul.f32 %v4772, 0.9
  %v4776 = vadd.f32 %v4774, 0.1
  %v4777 = vadd.f32 %v4775, 0.1
  %v4778 = vsel %vm4773, %v4747, %v4776
  %v4779 = vsel %vm4773, %v4752, %v4777
  %4780 = vst [vmem:[%s65] sm:$0xff] %v4778
  %4781 = vst [vmem:[%s65 + $0x8] sm:$0xf] %v4779
  // Predicated region
  $region126: #{neural_process_conv_forward.1} parent=0 // pred_check
    _
  $region127: #{neural_process_conv_forward.1} parent=0 // pred_check_branch
    %4783 = sbr.rel (0) target = $region129
  $region128: #{neural_process_conv_forward.1} parent=0 // pred_region
    _
  $region129: #{neural_process_conv_forward.1} parent=0 // pred_fallthru
    _
  // Predicated region
  $region130: #{neural_process_conv_forward.1} parent=0 // pred_check
    _
  $region131: #{neural_process_conv_forward.1} parent=0 // pred_check_branch
    %4785 = sbr.rel (0) target = $region133
  $region132: #{neural_process_conv_forward.1} parent=0 // pred_region
    _
  $region133: #{neural_process_conv_forward.1} parent=0 // pred_fallthru
    _
  // Predicated region
  $region134: #{neural_process_conv_forward.1} parent=0 // pred_check
    _
  $region135: #{neural_process_conv_forward.1} parent=0 // pred_check_branch
    %4787 = sbr.rel (0) target = $region137
  $region136: #{neural_process_conv_forward.1} parent=0 // pred_region
    _
  $region137: #{neural_process_conv_forward.1} parent=0 // pred_fallthru
    _
  // Predicated region
  $region138: #{neural_process_conv_forward.1} parent=0 // pred_check
    _
  $region139: #{neural_process_conv_forward.1} parent=0 // pred_check_branch
    %4789 = sbr.rel (0) target = $region141
  $region140: #{neural_process_conv_forward.1} parent=0 // pred_region
    _
  $region141: #{neural_process_conv_forward.1} parent=0 // pred_fallthru
    _

</llo_original>
